<compile_context>
chip_gen: v7x
topology: tpu7x:2x2x1
jax: 0.10.0
libtpu: 0.0.40
codegen_flags: <defaults>
</compile_context>

<pallas_src>
import functools
import math

import jax
import jax.numpy as jnp
import numpy as np
from jax.experimental import pallas as pl
from jax.experimental.pallas import tpu as pltpu


# ------------------------- config (small, synthetic) -------------------------
VOCAB = 256
HIDDEN = 128                        # multiple of 128 -> lane-dense activations
N_HEADS = 4
HEAD_DIM = HIDDEN // N_HEADS        # 32
INTERMEDIATE = 256
N_LAYERS = 2
RMS_EPS = 1e-6
ROPE_THETA = 10000.0
PAD_TOKEN_ID = 0
BATCH = 2
SEQ = 128                           # lane-dense (S, S) score tiles


# ------------------------------ kernel helpers -------------------------------
def _rmsnorm(x, w, eps):
    # x: (S, H) f32, w: (1, H) f32
    var = jnp.mean(x * x, axis=-1, keepdims=True)
    return x * jax.lax.rsqrt(var + eps) * w


def _rotate_half(t, half):
    # t: (S, 2*half); rotate_half(t) = concat(-t[:, half:], t[:, :half])
    return jnp.concatenate([-t[:, half:], t[:, :half]], axis=-1)


# ----------------------- whole-stack Pallas kernel ----------------------------
def stack_kernel(x0_ref, cos_ref, sin_ref, mask_ref,
                 ln1_ref, ln2_ref, wqkv_ref, wo_ref, wgu_ref, wd_ref, wf_ref,
                 out_ref, acc_ref,
                 *, n_layers, n_heads, head_dim, hidden, inter, eps):
    l = pl.program_id(1)                       # layer axis (inner, "arbitrary")

    # Load this batch element's embedded tokens into the resident accumulator.
    @pl.when(l == 0)
    def _init():
        acc_ref[...] = x0_ref[...]

    x = acc_ref[...]                           # (S, H) f32, resident in VMEM
    scale = 1.0 / math.sqrt(head_dim)
    half = head_dim // 2

    # -------------------- attention sub-block (pre-norm) ---------------------
    h = _rmsnorm(x, ln1_ref[...], eps)                                 # (S, H)
    qkv = jnp.dot(h.astype(jnp.bfloat16), wqkv_ref[...],
                  preferred_element_type=jnp.float32)                  # (S, 3H)
    q = qkv[:, :hidden]
    k = qkv[:, hidden:2 * hidden]
    v = qkv[:, 2 * hidden:]

    cos = cos_ref[...]                         # (S, head_dim) f32
    sin = sin_ref[...]
    bias = mask_ref[...]                       # (S, S) additive causal mask

    heads_out = []
    for hh in range(n_heads):                  # static loop, n_heads = 4
        s0 = hh * head_dim
        qh = q[:, s0:s0 + head_dim]            # (S, head_dim) f32
        kh = k[:, s0:s0 + head_dim]
        vh = v[:, s0:s0 + head_dim]

        # RoPE per head: rotate_half via slice+concat (no MXU work).
        qh = qh * cos + _rotate_half(qh, half) * sin
        kh = kh * cos + _rotate_half(kh, half) * sin
        qh = (qh * scale).astype(jnp.bfloat16)     # fold 1/sqrt(d) into q
        kh = kh.astype(jnp.bfloat16)

        # scores: contract only over this head's dims (no redundant FLOPs)
        s = jax.lax.dot_general(qh, kh, (((1,), (1,)), ((), ())),
                                preferred_element_type=jnp.float32)    # (S, S)
        s = s + bias
        s = s - jnp.max(s, axis=-1, keepdims=True)
        p = jnp.exp(s)
        p = p * pl.reciprocal(jnp.sum(p, axis=-1, keepdims=True), approx=True)
        oh = jnp.dot(p.astype(jnp.bfloat16), vh.astype(jnp.bfloat16),
                     preferred_element_type=jnp.float32)          # (S, head_dim)
        heads_out.append(oh)

    attn = jnp.concatenate(heads_out, axis=-1)                         # (S, H)
    attn = jnp.dot(attn.astype(jnp.bfloat16), wo_ref[...],
                   preferred_element_type=jnp.float32)
    x = x + attn                               # residual (f32)

    # ------------------------ MLP sub-block (SwiGLU) --------------------------
    n2 = _rmsnorm(x, ln2_ref[...], eps)
    gu = jnp.dot(n2.astype(jnp.bfloat16), wgu_ref[...],
                 preferred_element_type=jnp.float32)                   # (S, 2I)
    g = gu[:, :inter]
    u = gu[:, inter:]
    act = g * jax.lax.logistic(g) * u          # silu(g) * u, f32
    mlp = jnp.dot(act.astype(jnp.bfloat16), wd_ref[...],
                  preferred_element_type=jnp.float32)
    x = x + mlp

    acc_ref[...] = x                           # carry to next layer

    # Final RMSNorm folded into the last layer's epilogue (lane-dense store).
    @pl.when(l == n_layers - 1)
    def _fin():
        out_ref[...] = _rmsnorm(x, wf_ref[...], eps)


def transformer_stack(x2d, cos, sin, mask, stacked, wf, *, batch, seq):
    """Single pallas_call over (batch, layers). x2d: (B*S, H) f32."""
    N, H = x2d.shape
    L = stacked["wqkv"].shape[0]
    I = INTERMEDIATE
    kern = functools.partial(
        stack_kernel, n_layers=L, n_heads=N_HEADS, head_dim=HEAD_DIM,
        hidden=H, inter=I, eps=RMS_EPS)

    def const(shape):
        return pl.BlockSpec(shape, lambda b, l: (0,) * len(shape))

    def per_layer(shape):
        # leading layer dim squeezed out via None -> kernel sees `shape` directly
        return pl.BlockSpec((None,) + shape, lambda b, l: (l,) + (0,) * len(shape))

    # TODO(synk): at real LLaMA sizes, per-layer whole-weight residency exceeds
    # v7x's 64 MiB VMEM; the projection/MLP matmuls need K/N-tiled weight
    # streaming (extra reduction grid axis + f32 VMEM accumulator), and the
    # dense (S,S) bias should become in-kernel / flash-style causal masking.
    return pl.pallas_call(
        kern,
        out_shape=jax.ShapeDtypeStruct((N, H), jnp.float32),
        grid_spec=pltpu.PrefetchScalarGridSpec(
            num_scalar_prefetch=0,
            grid=(batch, L),                       # (parallel, arbitrary)
            in_specs=[
                pl.BlockSpec((seq, H), lambda b, l: (b, 0)),   # embedded tokens
                const((seq, HEAD_DIM)),            # cos  (S, head_dim)
                const((seq, HEAD_DIM)),            # sin  (S, head_dim)
                const((seq, seq)),                 # additive causal mask
                per_layer((1, H)),                 # ln1   (L,1,H)
                per_layer((1, H)),                 # ln2   (L,1,H)
                per_layer((H, 3 * H)),             # wqkv  (L,H,3H)  bf16
                per_layer((H, H)),                 # wo    (L,H,H)   bf16
                per_layer((H, 2 * I)),             # wgu   (L,H,2I)  bf16
                per_layer((I, H)),                 # wd    (L,I,H)   bf16
                const((1, H)),                     # final norm weight
            ],
            out_specs=pl.BlockSpec((seq, H), lambda b, l: (b, 0)),
            scratch_shapes=[pltpu.VMEM((seq, H), jnp.float32)],
        ),
        compiler_params=pltpu.CompilerParams(
            dimension_semantics=("parallel", "arbitrary"),
            vmem_limit_bytes=32 * 1024 * 1024),
    )(x2d, cos, sin, mask, stacked["ln1"], stacked["ln2"], stacked["wqkv"],
      stacked["wo"], stacked["wgu"], stacked["wd"], wf)


# --------------------------- constant precomputation ---------------------------
def rotary_cos_sin(seq_len, dim, base):
    inv_freq = 1.0 / (base ** (np.arange(0, dim, 2, dtype=np.float32) / dim))
    pos = np.arange(seq_len, dtype=np.float32)
    freqs = pos[:, None] * inv_freq[None, :]                 # (S, dim/2)
    emb = np.concatenate([freqs, freqs], axis=-1)            # (S, dim)
    return jnp.asarray(np.cos(emb)), jnp.asarray(np.sin(emb))


def build_causal_bias(seq_len):
    row = np.arange(seq_len)[:, None]
    col = np.arange(seq_len)[None, :]
    return jnp.asarray(np.where(col <= row, 0.0, -1e30).astype(np.float32))


def stack_layer_params(layers):
    st = lambda name: jnp.stack([lp[name] for lp in layers], axis=0)
    wqkv = jnp.concatenate([st("wq"), st("wk"), st("wv")], axis=-1)   # (L,H,3H)
    wgu = jnp.concatenate([st("wg"), st("wu")], axis=-1)              # (L,H,2I)
    return {
        "ln1": st("ln1"),                        # (L,1,H) f32
        "ln2": st("ln2"),
        "wqkv": wqkv.astype(jnp.bfloat16),       # MXU inputs in bf16
        "wo": st("wo").astype(jnp.bfloat16),
        "wgu": wgu.astype(jnp.bfloat16),
        "wd": st("wd").astype(jnp.bfloat16),
    }


# ------------------------------- param init -----------------------------------
def init_params(key):
    ks = jax.random.split(key, 2 + N_LAYERS)
    scale = 0.02
    params = {}
    emb = scale * jax.random.normal(ks[0], (VOCAB, HIDDEN), jnp.float32)
    emb = emb.at[PAD_TOKEN_ID].set(0.0)            # padding_idx behaviour
    params["embed"] = emb
    params["final_norm"] = jnp.ones((1, HIDDEN), jnp.float32)
    layers = []
    for li in range(N_LAYERS):
        kk = jax.random.split(ks[2 + li], 7)
        layers.append({
            "ln1": jnp.ones((1, HIDDEN), jnp.float32),
            "ln2": jnp.ones((1, HIDDEN), jnp.float32),
            "wq": scale * jax.random.normal(kk[0], (HIDDEN, HIDDEN), jnp.float32),
            "wk": scale * jax.random.normal(kk[1], (HIDDEN, HIDDEN), jnp.float32),
            "wv": scale * jax.random.normal(kk[2], (HIDDEN, HIDDEN), jnp.float32),
            "wo": scale * jax.random.normal(kk[3], (HIDDEN, HIDDEN), jnp.float32),
            "wg": scale * jax.random.normal(kk[4], (HIDDEN, INTERMEDIATE), jnp.float32),
            "wu": scale * jax.random.normal(kk[5], (HIDDEN, INTERMEDIATE), jnp.float32),
            "wd": scale * jax.random.normal(kk[6], (INTERMEDIATE, HIDDEN), jnp.float32),
        })
    params["layers"] = layers
    return params


# --------------------------------- forward ------------------------------------
@jax.jit
def transformer_forward(input_ids, params):
    B, S = input_ids.shape
    # Embedding lookup (gather) stays in plain JAX glue; flattened to 2-D.
    x2d = jnp.take(params["embed"], input_ids.reshape(-1), axis=0)    # (B*S, H)

    cos, sin = rotary_cos_sin(S, HEAD_DIM, ROPE_THETA)                # (S, hd)
    mask = build_causal_bias(S)                                       # (S, S)
    stacked = stack_layer_params(params["layers"])

    y2d = transformer_stack(x2d, cos, sin, mask, stacked,
                            params["final_norm"], batch=B, seq=S)
    return y2d.reshape(B, S, HIDDEN)
    # TODO(synk): KV-cache / non-None attention_mask (padding) paths of the
    # torch module (past_key_values, cache_position) are not exercised here.


# ------------------------- pure-JAX reference (same numerics) ------------------
def reference_forward(input_ids, params):
    B, S = input_ids.shape
    H, nH, hd, I = HIDDEN, N_HEADS, HEAD_DIM, INTERMEDIATE
    x = jnp.take(params["embed"], input_ids.reshape(-1), axis=0).reshape(B, S, H)
    cos, sin = rotary_cos_sin(S, hd, ROPE_THETA)
    cosb, sinb = cos[None, :, None, :], sin[None, :, None, :]
    bias = build_causal_bias(S)[None, None]
    scale = 1.0 / math.sqrt(hd)

    def rms(t, w):
        return t * jax.lax.rsqrt(jnp.mean(t * t, axis=-1, keepdims=True) + RMS_EPS) * w

    def rope(t):
        rh = jnp.concatenate([-t[..., hd // 2:], t[..., :hd // 2]], axis=-1)
        return t * cosb + rh * sinb

    for lp in params["layers"]:
        hN = rms(x, lp["ln1"][0])
        wqkv = jnp.concatenate([lp["wq"], lp["wk"], lp["wv"]], axis=-1).astype(jnp.bfloat16)
        qkv = jnp.dot(hN.astype(jnp.bfloat16), wqkv, preferred_element_type=jnp.float32)
        q = qkv[..., :H].reshape(B, S, nH, hd)
        k = qkv[..., H:2 * H].reshape(B, S, nH, hd)
        v = qkv[..., 2 * H:].reshape(B, S, nH, hd)
        q = rope(q) * scale
        k = rope(k)
        s = jnp.einsum('bqhd,bkhd->bhqk', q.astype(jnp.bfloat16), k.astype(jnp.bfloat16),
                       preferred_element_type=jnp.float32) + bias
        s = s - jnp.max(s, axis=-1, keepdims=True)
        p = jnp.exp(s)
        p = p / jnp.sum(p, axis=-1, keepdims=True)
        o = jnp.einsum('bhqk,bkhd->bqhd', p.astype(jnp.bfloat16), v.astype(jnp.bfloat16),
                       preferred_element_type=jnp.float32).reshape(B, S, H)
        o = jnp.dot(o.astype(jnp.bfloat16), lp["wo"].astype(jnp.bfloat16),
                    preferred_element_type=jnp.float32)
        x = x + o
        n2 = rms(x, lp["ln2"][0])
        wgu = jnp.concatenate([lp["wg"], lp["wu"]], axis=-1).astype(jnp.bfloat16)
        gu = jnp.dot(n2.astype(jnp.bfloat16), wgu, preferred_element_type=jnp.float32)
        g, u = gu[..., :I], gu[..., I:]
        act = g * jax.lax.logistic(g) * u
        x = x + jnp.dot(act.astype(jnp.bfloat16), lp["wd"].astype(jnp.bfloat16),
                        preferred_element_type=jnp.float32)
    return rms(x, params["final_norm"][0])


if __name__ == "__main__":
    key = jax.random.PRNGKey(0)
    pkey, ikey = jax.random.split(key)
    params = init_params(pkey)
    input_ids = jax.random.randint(ikey, (BATCH, SEQ), 0, VOCAB, dtype=jnp.int32)

    out = transformer_forward(input_ids, params)
    jax.block_until_ready(out)
    assert out.shape == (BATCH, SEQ, HIDDEN) and out.dtype == jnp.float32
    assert bool(jnp.all(jnp.isfinite(out)))

    ref = reference_forward(input_ids, params)
    np.testing.assert_allclose(np.asarray(out), np.asarray(ref), rtol=5e-2, atol=5e-2)
    print("KERNEL_OK")
</pallas_src>

<mosaic_0001>
module attributes {stable_mosaic.version = 11 : i64} {
  func.func @stack_kernel(%arg0: i32, %arg1: i32, %arg2: memref<128x128xf32, #tpu.memory_space<vmem>>, %arg3: memref<128x32xf32, #tpu.memory_space<vmem>>, %arg4: memref<128x32xf32, #tpu.memory_space<vmem>>, %arg5: memref<128x128xf32, #tpu.memory_space<vmem>>, %arg6: memref<1x1x128xf32, #tpu.memory_space<vmem>>, %arg7: memref<1x1x128xf32, #tpu.memory_space<vmem>>, %arg8: memref<1x128x384xbf16, #tpu.memory_space<vmem>>, %arg9: memref<1x128x128xbf16, #tpu.memory_space<vmem>>, %arg10: memref<1x128x512xbf16, #tpu.memory_space<vmem>>, %arg11: memref<1x256x128xbf16, #tpu.memory_space<vmem>>, %arg12: memref<1x128xf32, #tpu.memory_space<vmem>>, %arg13: memref<128x128xf32, #tpu.memory_space<vmem>>, %arg14: memref<128x128xf32, #tpu.memory_space<vmem>>) attributes {dimension_semantics = [#tpu.dimension_semantics<parallel>, #tpu.dimension_semantics<arbitrary>], iteration_bounds = array<i64: 2, 2>, scalar_prefetch = 0 : i64, scratch_operands = 1 : i64, tpu.core_type = #tpu.core_type<tc>, window_params = [{transform_indices = @transform_0, window_bounds = array<i64: 128, 128>}, {pipeline_mode = #tpu.pipeline_mode<synchronous>, transform_indices = @transform_1, window_bounds = array<i64: 128, 32>}, {pipeline_mode = #tpu.pipeline_mode<synchronous>, transform_indices = @transform_2, window_bounds = array<i64: 128, 32>}, {pipeline_mode = #tpu.pipeline_mode<synchronous>, transform_indices = @transform_3, window_bounds = array<i64: 128, 128>}, {transform_indices = @transform_4, window_bounds = array<i64: 1, 1, 128>}, {transform_indices = @transform_5, window_bounds = array<i64: 1, 1, 128>}, {transform_indices = @transform_6, window_bounds = array<i64: 1, 128, 384>}, {transform_indices = @transform_7, window_bounds = array<i64: 1, 128, 128>}, {transform_indices = @transform_8, window_bounds = array<i64: 1, 128, 512>}, {transform_indices = @transform_9, window_bounds = array<i64: 1, 256, 128>}, {pipeline_mode = #tpu.pipeline_mode<synchronous>, transform_indices = @transform_10, window_bounds = array<i64: 1, 128>}, {transform_indices = @transform_11, window_bounds = array<i64: 128, 128>}]} {
    %c0_i32 = arith.constant 0 : i32
    %0 = arith.cmpi eq, %arg1, %c0_i32 : i32
    %1 = arith.extui %0 : i1 to i32
    %c0_i32_0 = arith.constant 0 : i32
    %2 = arith.cmpi ne, %1, %c0_i32_0 : i32
    scf.if %2 {
      %c0_67 = arith.constant 0 : index
      %c0_68 = arith.constant 0 : index
      %222 = vector.load %arg2[%c0_67, %c0_68] : memref<128x128xf32, #tpu.memory_space<vmem>>, vector<128x128xf32>
      %c0_69 = arith.constant 0 : index
      %c0_70 = arith.constant 0 : index
      %223 = vector.load %arg14[%c0_69, %c0_70] : memref<128x128xf32, #tpu.memory_space<vmem>>, vector<128x128xf32>
      tpu.vector_store %arg14[%c0_69, %c0_70], %222 {strides = array<i32>} : memref<128x128xf32, #tpu.memory_space<vmem>>, vector<128x128xf32>,
    } else {
    }
    %c0 = arith.constant 0 : index
    %c0_1 = arith.constant 0 : index
    %3 = vector.load %arg14[%c0, %c0_1] : memref<128x128xf32, #tpu.memory_space<vmem>>, vector<128x128xf32>
    %c0_2 = arith.constant 0 : index
    %c0_3 = arith.constant 0 : index
    %c0_4 = arith.constant 0 : index
    %4 = vector.load %arg6[%c0_2, %c0_3, %c0_4] : memref<1x1x128xf32, #tpu.memory_space<vmem>>, vector<1x1x128xf32>
    %5 = vector.shape_cast %4 : vector<1x1x128xf32> to vector<1x128xf32>
    %6 = arith.mulf %3, %3 : vector<128x128xf32>
    %cst = arith.constant dense<0.000000e+00> : vector<128xf32>
    %7 = vector.multi_reduction <add>, %6, %cst [1] : vector<128x128xf32> to vector<128xf32>
    %8 = vector.shape_cast %7 : vector<128xf32> to vector<128x1xf32>
    %cst_5 = arith.constant 1.280000e+02 : f32
    %9 = vector.broadcast %cst_5 : f32 to vector<128x1xf32>
    %10 = arith.divf %8, %9 : vector<128x1xf32>
    %cst_6 = arith.constant 9.99999997E-7 : f32
    %11 = vector.broadcast %cst_6 : f32 to vector<128x1xf32>
    %12 = arith.addf %10, %11 : vector<128x1xf32>
    %13 = math.rsqrt %12 : vector<128x1xf32>
    %14 = vector.broadcast %13 : vector<128x1xf32> to vector<128x128xf32>
    %15 = arith.mulf %3, %14 : vector<128x128xf32>
    %16 = vector.broadcast %5 : vector<1x128xf32> to vector<128x128xf32>
    %17 = arith.mulf %15, %16 : vector<128x128xf32>
    %18 = arith.truncf %17 : vector<128x128xf32> to vector<128x128xbf16>
    %c0_7 = arith.constant 0 : index
    %c0_8 = arith.constant 0 : index
    %c0_9 = arith.constant 0 : index
    %19 = vector.load %arg8[%c0_7, %c0_8, %c0_9] : memref<1x128x384xbf16, #tpu.memory_space<vmem>>, vector<1x128x384xbf16>
    %20 = vector.shape_cast %19 : vector<1x128x384xbf16> to vector<128x384xbf16>
    %cst_10 = arith.constant dense<0.000000e+00> : vector<128x384xf32>
    %21 = tpu.matmul %18, %20, %cst_10 {dimension_numbers = #tpu.dot_dimension_numbers<[1], [0], [0], [1], [0, 0, 1, 1], [], []>} : vector<128x128xbf16>, vector<128x384xbf16>, vector<128x384xf32> -> vector<128x384xf32>
    %22 = vector.extract_strided_slice %21 {offsets = [0, 0], sizes = [128, 128], strides = [1, 1]} : vector<128x384xf32> to vector<128x128xf32>
    %23 = vector.extract_strided_slice %21 {offsets = [0, 128], sizes = [128, 128], strides = [1, 1]} : vector<128x384xf32> to vector<128x128xf32>
    %24 = vector.extract_strided_slice %21 {offsets = [0, 256], sizes = [128, 128], strides = [1, 1]} : vector<128x384xf32> to vector<128x128xf32>
    %c0_11 = arith.constant 0 : index
    %c0_12 = arith.constant 0 : index
    %25 = vector.load %arg3[%c0_11, %c0_12] : memref<128x32xf32, #tpu.memory_space<vmem>>, vector<128x32xf32>
    %c0_13 = arith.constant 0 : index
    %c0_14 = arith.constant 0 : index
    %26 = vector.load %arg4[%c0_13, %c0_14] : memref<128x32xf32, #tpu.memory_space<vmem>>, vector<128x32xf32>
    %c0_15 = arith.constant 0 : index
    %c0_16 = arith.constant 0 : index
    %27 = vector.load %arg5[%c0_15, %c0_16] : memref<128x128xf32, #tpu.memory_space<vmem>>, vector<128x128xf32>
    %28 = vector.extract_strided_slice %22 {offsets = [0, 0], sizes = [128, 32], strides = [1, 1]} : vector<128x128xf32> to vector<128x32xf32>
    %29 = vector.extract_strided_slice %23 {offsets = [0, 0], sizes = [128, 32], strides = [1, 1]} : vector<128x128xf32> to vector<128x32xf32>
    %30 = vector.extract_strided_slice %24 {offsets = [0, 0], sizes = [128, 32], strides = [1, 1]} : vector<128x128xf32> to vector<128x32xf32>
    %31 = arith.mulf %28, %25 : vector<128x32xf32>
    %32 = vector.extract_strided_slice %28 {offsets = [0, 16], sizes = [128, 16], strides = [1, 1]} : vector<128x32xf32> to vector<128x16xf32>
    %cst_17 = arith.constant 0.000000e+00 : f32
    %33 = vector.broadcast %cst_17 : f32 to vector<128x16xf32>
    %34 = arith.subf %33, %32 : vector<128x16xf32>
    %35 = vector.extract_strided_slice %28 {offsets = [0, 0], sizes = [128, 16], strides = [1, 1]} : vector<128x32xf32> to vector<128x16xf32>
    %36 = tpu.concatenate %34, %35 in 1 : vector<128x16xf32>, vector<128x16xf32> -> vector<128x32xf32>
    %37 = arith.mulf %36, %26 : vector<128x32xf32>
    %38 = arith.addf %31, %37 : vector<128x32xf32>
    %39 = arith.mulf %29, %25 : vector<128x32xf32>
    %40 = vector.extract_strided_slice %29 {offsets = [0, 16], sizes = [128, 16], strides = [1, 1]} : vector<128x32xf32> to vector<128x16xf32>
    %cst_18 = arith.constant 0.000000e+00 : f32
    %41 = vector.broadcast %cst_18 : f32 to vector<128x16xf32>
    %42 = arith.subf %41, %40 : vector<128x16xf32>
    %43 = vector.extract_strided_slice %29 {offsets = [0, 0], sizes = [128, 16], strides = [1, 1]} : vector<128x32xf32> to vector<128x16xf32>
    %44 = tpu.concatenate %42, %43 in 1 : vector<128x16xf32>, vector<128x16xf32> -> vector<128x32xf32>
    %45 = arith.mulf %44, %26 : vector<128x32xf32>
    %46 = arith.addf %39, %45 : vector<128x32xf32>
    %cst_19 = arith.constant 0.176776692 : f32
    %47 = vector.broadcast %cst_19 : f32 to vector<128x32xf32>
    %48 = arith.mulf %38, %47 : vector<128x32xf32>
    %49 = arith.truncf %48 : vector<128x32xf32> to vector<128x32xbf16>
    %50 = arith.truncf %46 : vector<128x32xf32> to vector<128x32xbf16>
    %cst_20 = arith.constant dense<0.000000e+00> : vector<128x128xf32>
    %51 = tpu.matmul %49, %50, %cst_20 {dimension_numbers = #tpu.dot_dimension_numbers<[1], [1], [0], [0], [0, 0, 1, 0], [], []>} : vector<128x32xbf16>, vector<128x32xbf16>, vector<128x128xf32> -> vector<128x128xf32>
    %52 = arith.addf %51, %27 : vector<128x128xf32>
    %cst_21 = arith.constant dense<0xFF800000> : vector<128xf32>
    %53 = vector.multi_reduction <maximumf>, %52, %cst_21 [1] : vector<128x128xf32> to vector<128xf32>
    %54 = vector.shape_cast %53 : vector<128xf32> to vector<128x1xf32>
    %55 = vector.broadcast %54 : vector<128x1xf32> to vector<128x128xf32>
    %56 = arith.subf %52, %55 : vector<128x128xf32>
    %57 = math.exp %56 : vector<128x128xf32>
    %cst_22 = arith.constant dense<0.000000e+00> : vector<128xf32>
    %58 = vector.multi_reduction <add>, %57, %cst_22 [1] : vector<128x128xf32> to vector<128xf32>
    %59 = vector.shape_cast %58 : vector<128xf32> to vector<128x1xf32>
    %60 = tpu.reciprocal %59 {approx = true} : vector<128x1xf32> -> vector<128x1xf32>
    %61 = vector.broadcast %60 : vector<128x1xf32> to vector<128x128xf32>
    %62 = arith.mulf %57, %61 : vector<128x128xf32>
    %63 = arith.truncf %62 : vector<128x128xf32> to vector<128x128xbf16>
    %64 = arith.truncf %30 : vector<128x32xf32> to vector<128x32xbf16>
    %cst_23 = arith.constant dense<0.000000e+00> : vector<128x32xf32>
    %65 = tpu.matmul %63, %64, %cst_23 {dimension_numbers = #tpu.dot_dimension_numbers<[1], [0], [0], [1], [0, 0, 1, 1], [], []>} : vector<128x128xbf16>, vector<128x32xbf16>, vector<128x32xf32> -> vector<128x32xf32>
    %66 = vector.extract_strided_slice %22 {offsets = [0, 32], sizes = [128, 32], strides = [1, 1]} : vector<128x128xf32> to vector<128x32xf32>
    %67 = vector.extract_strided_slice %23 {offsets = [0, 32], sizes = [128, 32], strides = [1, 1]} : vector<128x128xf32> to vector<128x32xf32>
    %68 = vector.extract_strided_slice %24 {offsets = [0, 32], sizes = [128, 32], strides = [1, 1]} : vector<128x128xf32> to vector<128x32xf32>
    %69 = arith.mulf %66, %25 : vector<128x32xf32>
    %70 = vector.extract_strided_slice %66 {offsets = [0, 16], sizes = [128, 16], strides = [1, 1]} : vector<128x32xf32> to vector<128x16xf32>
    %cst_24 = arith.constant 0.000000e+00 : f32
    %71 = vector.broadcast %cst_24 : f32 to vector<128x16xf32>
    %72 = arith.subf %71, %70 : vector<128x16xf32>
    %73 = vector.extract_strided_slice %66 {offsets = [0, 0], sizes = [128, 16], strides = [1, 1]} : vector<128x32xf32> to vector<128x16xf32>
    %74 = tpu.concatenate %72, %73 in 1 : vector<128x16xf32>, vector<128x16xf32> -> vector<128x32xf32>
    %75 = arith.mulf %74, %26 : vector<128x32xf32>
    %76 = arith.addf %69, %75 : vector<128x32xf32>
    %77 = arith.mulf %67, %25 : vector<128x32xf32>
    %78 = vector.extract_strided_slice %67 {offsets = [0, 16], sizes = [128, 16], strides = [1, 1]} : vector<128x32xf32> to vector<128x16xf32>
    %cst_25 = arith.constant 0.000000e+00 : f32
    %79 = vector.broadcast %cst_25 : f32 to vector<128x16xf32>
    %80 = arith.subf %79, %78 : vector<128x16xf32>
    %81 = vector.extract_strided_slice %67 {offsets = [0, 0], sizes = [128, 16], strides = [1, 1]} : vector<128x32xf32> to vector<128x16xf32>
    %82 = tpu.concatenate %80, %81 in 1 : vector<128x16xf32>, vector<128x16xf32> -> vector<128x32xf32>
    %83 = arith.mulf %82, %26 : vector<128x32xf32>
    %84 = arith.addf %77, %83 : vector<128x32xf32>
    %cst_26 = arith.constant 0.176776692 : f32
    %85 = vector.broadcast %cst_26 : f32 to vector<128x32xf32>
    %86 = arith.mulf %76, %85 : vector<128x32xf32>
    %87 = arith.truncf %86 : vector<128x32xf32> to vector<128x32xbf16>
    %88 = arith.truncf %84 : vector<128x32xf32> to vector<128x32xbf16>
    %cst_27 = arith.constant dense<0.000000e+00> : vector<128x128xf32>
    %89 = tpu.matmul %87, %88, %cst_27 {dimension_numbers = #tpu.dot_dimension_numbers<[1], [1], [0], [0], [0, 0, 1, 0], [], []>} : vector<128x32xbf16>, vector<128x32xbf16>, vector<128x128xf32> -> vector<128x128xf32>
    %90 = arith.addf %89, %27 : vector<128x128xf32>
    %cst_28 = arith.constant dense<0xFF800000> : vector<128xf32>
    %91 = vector.multi_reduction <maximumf>, %90, %cst_28 [1] : vector<128x128xf32> to vector<128xf32>
    %92 = vector.shape_cast %91 : vector<128xf32> to vector<128x1xf32>
    %93 = vector.broadcast %92 : vector<128x1xf32> to vector<128x128xf32>
    %94 = arith.subf %90, %93 : vector<128x128xf32>
    %95 = math.exp %94 : vector<128x128xf32>
    %cst_29 = arith.constant dense<0.000000e+00> : vector<128xf32>
    %96 = vector.multi_reduction <add>, %95, %cst_29 [1] : vector<128x128xf32> to vector<128xf32>
    %97 = vector.shape_cast %96 : vector<128xf32> to vector<128x1xf32>
    %98 = tpu.reciprocal %97 {approx = true} : vector<128x1xf32> -> vector<128x1xf32>
    %99 = vector.broadcast %98 : vector<128x1xf32> to vector<128x128xf32>
    %100 = arith.mulf %95, %99 : vector<128x128xf32>
    %101 = arith.truncf %100 : vector<128x128xf32> to vector<128x128xbf16>
    %102 = arith.truncf %68 : vector<128x32xf32> to vector<128x32xbf16>
    %cst_30 = arith.constant dense<0.000000e+00> : vector<128x32xf32>
    %103 = tpu.matmul %101, %102, %cst_30 {dimension_numbers = #tpu.dot_dimension_numbers<[1], [0], [0], [1], [0, 0, 1, 1], [], []>} : vector<128x128xbf16>, vector<128x32xbf16>, vector<128x32xf32> -> vector<128x32xf32>
    %104 = vector.extract_strided_slice %22 {offsets = [0, 64], sizes = [128, 32], strides = [1, 1]} : vector<128x128xf32> to vector<128x32xf32>
    %105 = vector.extract_strided_slice %23 {offsets = [0, 64], sizes = [128, 32], strides = [1, 1]} : vector<128x128xf32> to vector<128x32xf32>
    %106 = vector.extract_strided_slice %24 {offsets = [0, 64], sizes = [128, 32], strides = [1, 1]} : vector<128x128xf32> to vector<128x32xf32>
    %107 = arith.mulf %104, %25 : vector<128x32xf32>
    %108 = vector.extract_strided_slice %104 {offsets = [0, 16], sizes = [128, 16], strides = [1, 1]} : vector<128x32xf32> to vector<128x16xf32>
    %cst_31 = arith.constant 0.000000e+00 : f32
    %109 = vector.broadcast %cst_31 : f32 to vector<128x16xf32>
    %110 = arith.subf %109, %108 : vector<128x16xf32>
    %111 = vector.extract_strided_slice %104 {offsets = [0, 0], sizes = [128, 16], strides = [1, 1]} : vector<128x32xf32> to vector<128x16xf32>
    %112 = tpu.concatenate %110, %111 in 1 : vector<128x16xf32>, vector<128x16xf32> -> vector<128x32xf32>
    %113 = arith.mulf %112, %26 : vector<128x32xf32>
    %114 = arith.addf %107, %113 : vector<128x32xf32>
    %115 = arith.mulf %105, %25 : vector<128x32xf32>
    %116 = vector.extract_strided_slice %105 {offsets = [0, 16], sizes = [128, 16], strides = [1, 1]} : vector<128x32xf32> to vector<128x16xf32>
    %cst_32 = arith.constant 0.000000e+00 : f32
    %117 = vector.broadcast %cst_32 : f32 to vector<128x16xf32>
    %118 = arith.subf %117, %116 : vector<128x16xf32>
    %119 = vector.extract_strided_slice %105 {offsets = [0, 0], sizes = [128, 16], strides = [1, 1]} : vector<128x32xf32> to vector<128x16xf32>
    %120 = tpu.concatenate %118, %119 in 1 : vector<128x16xf32>, vector<128x16xf32> -> vector<128x32xf32>
    %121 = arith.mulf %120, %26 : vector<128x32xf32>
    %122 = arith.addf %115, %121 : vector<128x32xf32>
    %cst_33 = arith.constant 0.176776692 : f32
    %123 = vector.broadcast %cst_33 : f32 to vector<128x32xf32>
    %124 = arith.mulf %114, %123 : vector<128x32xf32>
    %125 = arith.truncf %124 : vector<128x32xf32> to vector<128x32xbf16>
    %126 = arith.truncf %122 : vector<128x32xf32> to vector<128x32xbf16>
    %cst_34 = arith.constant dense<0.000000e+00> : vector<128x128xf32>
    %127 = tpu.matmul %125, %126, %cst_34 {dimension_numbers = #tpu.dot_dimension_numbers<[1], [1], [0], [0], [0, 0, 1, 0], [], []>} : vector<128x32xbf16>, vector<128x32xbf16>, vector<128x128xf32> -> vector<128x128xf32>
    %128 = arith.addf %127, %27 : vector<128x128xf32>
    %cst_35 = arith.constant dense<0xFF800000> : vector<128xf32>
    %129 = vector.multi_reduction <maximumf>, %128, %cst_35 [1] : vector<128x128xf32> to vector<128xf32>
    %130 = vector.shape_cast %129 : vector<128xf32> to vector<128x1xf32>
    %131 = vector.broadcast %130 : vector<128x1xf32> to vector<128x128xf32>
    %132 = arith.subf %128, %131 : vector<128x128xf32>
    %133 = math.exp %132 : vector<128x128xf32>
    %cst_36 = arith.constant dense<0.000000e+00> : vector<128xf32>
    %134 = vector.multi_reduction <add>, %133, %cst_36 [1] : vector<128x128xf32> to vector<128xf32>
    %135 = vector.shape_cast %134 : vector<128xf32> to vector<128x1xf32>
    %136 = tpu.reciprocal %135 {approx = true} : vector<128x1xf32> -> vector<128x1xf32>
    %137 = vector.broadcast %136 : vector<128x1xf32> to vector<128x128xf32>
    %138 = arith.mulf %133, %137 : vector<128x128xf32>
    %139 = arith.truncf %138 : vector<128x128xf32> to vector<128x128xbf16>
    %140 = arith.truncf %106 : vector<128x32xf32> to vector<128x32xbf16>
    %cst_37 = arith.constant dense<0.000000e+00> : vector<128x32xf32>
    %141 = tpu.matmul %139, %140, %cst_37 {dimension_numbers = #tpu.dot_dimension_numbers<[1], [0], [0], [1], [0, 0, 1, 1], [], []>} : vector<128x128xbf16>, vector<128x32xbf16>, vector<128x32xf32> -> vector<128x32xf32>
    %142 = vector.extract_strided_slice %22 {offsets = [0, 96], sizes = [128, 32], strides = [1, 1]} : vector<128x128xf32> to vector<128x32xf32>
    %143 = vector.extract_strided_slice %23 {offsets = [0, 96], sizes = [128, 32], strides = [1, 1]} : vector<128x128xf32> to vector<128x32xf32>
    %144 = vector.extract_strided_slice %24 {offsets = [0, 96], sizes = [128, 32], strides = [1, 1]} : vector<128x128xf32> to vector<128x32xf32>
    %145 = arith.mulf %142, %25 : vector<128x32xf32>
    %146 = vector.extract_strided_slice %142 {offsets = [0, 16], sizes = [128, 16], strides = [1, 1]} : vector<128x32xf32> to vector<128x16xf32>
    %cst_38 = arith.constant 0.000000e+00 : f32
    %147 = vector.broadcast %cst_38 : f32 to vector<128x16xf32>
    %148 = arith.subf %147, %146 : vector<128x16xf32>
    %149 = vector.extract_strided_slice %142 {offsets = [0, 0], sizes = [128, 16], strides = [1, 1]} : vector<128x32xf32> to vector<128x16xf32>
    %150 = tpu.concatenate %148, %149 in 1 : vector<128x16xf32>, vector<128x16xf32> -> vector<128x32xf32>
    %151 = arith.mulf %150, %26 : vector<128x32xf32>
    %152 = arith.addf %145, %151 : vector<128x32xf32>
    %153 = arith.mulf %143, %25 : vector<128x32xf32>
    %154 = vector.extract_strided_slice %143 {offsets = [0, 16], sizes = [128, 16], strides = [1, 1]} : vector<128x32xf32> to vector<128x16xf32>
    %cst_39 = arith.constant 0.000000e+00 : f32
    %155 = vector.broadcast %cst_39 : f32 to vector<128x16xf32>
    %156 = arith.subf %155, %154 : vector<128x16xf32>
    %157 = vector.extract_strided_slice %143 {offsets = [0, 0], sizes = [128, 16], strides = [1, 1]} : vector<128x32xf32> to vector<128x16xf32>
    %158 = tpu.concatenate %156, %157 in 1 : vector<128x16xf32>, vector<128x16xf32> -> vector<128x32xf32>
    %159 = arith.mulf %158, %26 : vector<128x32xf32>
    %160 = arith.addf %153, %159 : vector<128x32xf32>
    %cst_40 = arith.constant 0.176776692 : f32
    %161 = vector.broadcast %cst_40 : f32 to vector<128x32xf32>
    %162 = arith.mulf %152, %161 : vector<128x32xf32>
    %163 = arith.truncf %162 : vector<128x32xf32> to vector<128x32xbf16>
    %164 = arith.truncf %160 : vector<128x32xf32> to vector<128x32xbf16>
    %cst_41 = arith.constant dense<0.000000e+00> : vector<128x128xf32>
    %165 = tpu.matmul %163, %164, %cst_41 {dimension_numbers = #tpu.dot_dimension_numbers<[1], [1], [0], [0], [0, 0, 1, 0], [], []>} : vector<128x32xbf16>, vector<128x32xbf16>, vector<128x128xf32> -> vector<128x128xf32>
    %166 = arith.addf %165, %27 : vector<128x128xf32>
    %cst_42 = arith.constant dense<0xFF800000> : vector<128xf32>
    %167 = vector.multi_reduction <maximumf>, %166, %cst_42 [1] : vector<128x128xf32> to vector<128xf32>
    %168 = vector.shape_cast %167 : vector<128xf32> to vector<128x1xf32>
    %169 = vector.broadcast %168 : vector<128x1xf32> to vector<128x128xf32>
    %170 = arith.subf %166, %169 : vector<128x128xf32>
    %171 = math.exp %170 : vector<128x128xf32>
    %cst_43 = arith.constant dense<0.000000e+00> : vector<128xf32>
    %172 = vector.multi_reduction <add>, %171, %cst_43 [1] : vector<128x128xf32> to vector<128xf32>
    %173 = vector.shape_cast %172 : vector<128xf32> to vector<128x1xf32>
    %174 = tpu.reciprocal %173 {approx = true} : vector<128x1xf32> -> vector<128x1xf32>
    %175 = vector.broadcast %174 : vector<128x1xf32> to vector<128x128xf32>
    %176 = arith.mulf %171, %175 : vector<128x128xf32>
    %177 = arith.truncf %176 : vector<128x128xf32> to vector<128x128xbf16>
    %178 = arith.truncf %144 : vector<128x32xf32> to vector<128x32xbf16>
    %cst_44 = arith.constant dense<0.000000e+00> : vector<128x32xf32>
    %179 = tpu.matmul %177, %178, %cst_44 {dimension_numbers = #tpu.dot_dimension_numbers<[1], [0], [0], [1], [0, 0, 1, 1], [], []>} : vector<128x128xbf16>, vector<128x32xbf16>, vector<128x32xf32> -> vector<128x32xf32>
    %180 = tpu.concatenate %65, %103, %141, %179 in 1 : vector<128x32xf32>, vector<128x32xf32>, vector<128x32xf32>, vector<128x32xf32> -> vector<128x128xf32>
    %181 = arith.truncf %180 : vector<128x128xf32> to vector<128x128xbf16>
    %c0_45 = arith.constant 0 : index
    %c0_46 = arith.constant 0 : index
    %c0_47 = arith.constant 0 : index
    %182 = vector.load %arg9[%c0_45, %c0_46, %c0_47] : memref<1x128x128xbf16, #tpu.memory_space<vmem>>, vector<1x128x128xbf16>
    %183 = vector.shape_cast %182 : vector<1x128x128xbf16> to vector<128x128xbf16>
    %cst_48 = arith.constant dense<0.000000e+00> : vector<128x128xf32>
    %184 = tpu.matmul %181, %183, %cst_48 {dimension_numbers = #tpu.dot_dimension_numbers<[1], [0], [0], [1], [0, 0, 1, 1], [], []>} : vector<128x128xbf16>, vector<128x128xbf16>, vector<128x128xf32> -> vector<128x128xf32>
    %185 = arith.addf %3, %184 : vector<128x128xf32>
    %c0_49 = arith.constant 0 : index
    %c0_50 = arith.constant 0 : index
    %c0_51 = arith.constant 0 : index
    %186 = vector.load %arg7[%c0_49, %c0_50, %c0_51] : memref<1x1x128xf32, #tpu.memory_space<vmem>>, vector<1x1x128xf32>
    %187 = vector.shape_cast %186 : vector<1x1x128xf32> to vector<1x128xf32>
    %188 = arith.mulf %185, %185 : vector<128x128xf32>
    %cst_52 = arith.constant dense<0.000000e+00> : vector<128xf32>
    %189 = vector.multi_reduction <add>, %188, %cst_52 [1] : vector<128x128xf32> to vector<128xf32>
    %190 = vector.shape_cast %189 : vector<128xf32> to vector<128x1xf32>
    %cst_53 = arith.constant 1.280000e+02 : f32
    %191 = vector.broadcast %cst_53 : f32 to vector<128x1xf32>
    %192 = arith.divf %190, %191 : vector<128x1xf32>
    %cst_54 = arith.constant 9.99999997E-7 : f32
    %193 = vector.broadcast %cst_54 : f32 to vector<128x1xf32>
    %194 = arith.addf %192, %193 : vector<128x1xf32>
    %195 = math.rsqrt %194 : vector<128x1xf32>
    %196 = vector.broadcast %195 : vector<128x1xf32> to vector<128x128xf32>
    %197 = arith.mulf %185, %196 : vector<128x128xf32>
    %198 = vector.broadcast %187 : vector<1x128xf32> to vector<128x128xf32>
    %199 = arith.mulf %197, %198 : vector<128x128xf32>
    %200 = arith.truncf %199 : vector<128x128xf32> to vector<128x128xbf16>
    %c0_55 = arith.constant 0 : index
    %c0_56 = arith.constant 0 : index
    %c0_57 = arith.constant 0 : index
    %201 = vector.load %arg10[%c0_55, %c0_56, %c0_57] : memref<1x128x512xbf16, #tpu.memory_space<vmem>>, vector<1x128x512xbf16>
    %202 = vector.shape_cast %201 : vector<1x128x512xbf16> to vector<128x512xbf16>
    %cst_58 = arith.constant dense<0.000000e+00> : vector<128x512xf32>
    %203 = tpu.matmul %200, %202, %cst_58 {dimension_numbers = #tpu.dot_dimension_numbers<[1], [0], [0], [1], [0, 0, 1, 1], [], []>} : vector<128x128xbf16>, vector<128x512xbf16>, vector<128x512xf32> -> vector<128x512xf32>
    %204 = vector.extract_strided_slice %203 {offsets = [0, 0], sizes = [128, 256], strides = [1, 1]} : vector<128x512xf32> to vector<128x256xf32>
    %205 = vector.extract_strided_slice %203 {offsets = [0, 256], sizes = [128, 256], strides = [1, 1]} : vector<128x512xf32> to vector<128x256xf32>
    %206 = arith.negf %204 : vector<128x256xf32>
    %207 = math.exp %206 : vector<128x256xf32>
    %cst_59 = arith.constant 1.000000e+00 : f32
    %208 = vector.broadcast %cst_59 : f32 to vector<128x256xf32>
    %209 = arith.addf %208, %207 : vector<128x256xf32>
    %210 = arith.divf %208, %209 : vector<128x256xf32>
    %211 = arith.mulf %204, %210 : vector<128x256xf32>
    %212 = arith.mulf %211, %205 : vector<128x256xf32>
    %213 = arith.truncf %212 : vector<128x256xf32> to vector<128x256xbf16>
    %c0_60 = arith.constant 0 : index
    %c0_61 = arith.constant 0 : index
    %c0_62 = arith.constant 0 : index
    %214 = vector.load %arg11[%c0_60, %c0_61, %c0_62] : memref<1x256x128xbf16, #tpu.memory_space<vmem>>, vector<1x256x128xbf16>
    %215 = vector.shape_cast %214 : vector<1x256x128xbf16> to vector<256x128xbf16>
    %cst_63 = arith.constant dense<0.000000e+00> : vector<128x128xf32>
    %216 = tpu.matmul %213, %215, %cst_63 {dimension_numbers = #tpu.dot_dimension_numbers<[1], [0], [0], [1], [0, 0, 1, 1], [], []>} : vector<128x256xbf16>, vector<256x128xbf16>, vector<128x128xf32> -> vector<128x128xf32>
    %217 = arith.addf %185, %216 : vector<128x128xf32>
    %c0_64 = arith.constant 0 : index
    %c0_65 = arith.constant 0 : index
    %218 = vector.load %arg14[%c0_64, %c0_65] : memref<128x128xf32, #tpu.memory_space<vmem>>, vector<128x128xf32>
    tpu.vector_store %arg14[%c0_64, %c0_65], %217 {strides = array<i32>} : memref<128x128xf32, #tpu.memory_space<vmem>>, vector<128x128xf32>,
    %c1_i32 = arith.constant 1 : i32
    %219 = arith.cmpi eq, %arg1, %c1_i32 : i32
    %220 = arith.extui %219 : i1 to i32
    %c0_i32_66 = arith.constant 0 : i32
    %221 = arith.cmpi ne, %220, %c0_i32_66 : i32
    scf.if %221 {
      %c0_67 = arith.constant 0 : index
      %c0_68 = arith.constant 0 : index
      %222 = vector.load %arg12[%c0_67, %c0_68] : memref<1x128xf32, #tpu.memory_space<vmem>>, vector<1x128xf32>
      %223 = arith.mulf %217, %217 : vector<128x128xf32>
      %cst_69 = arith.constant dense<0.000000e+00> : vector<128xf32>
      %224 = vector.multi_reduction <add>, %223, %cst_69 [1] : vector<128x128xf32> to vector<128xf32>
      %225 = vector.shape_cast %224 : vector<128xf32> to vector<128x1xf32>
      %cst_70 = arith.constant 1.280000e+02 : f32
      %226 = vector.broadcast %cst_70 : f32 to vector<128x1xf32>
      %227 = arith.divf %225, %226 : vector<128x1xf32>
      %cst_71 = arith.constant 9.99999997E-7 : f32
      %228 = vector.broadcast %cst_71 : f32 to vector<128x1xf32>
      %229 = arith.addf %227, %228 : vector<128x1xf32>
      %230 = math.rsqrt %229 : vector<128x1xf32>
      %231 = vector.broadcast %230 : vector<128x1xf32> to vector<128x128xf32>
      %232 = arith.mulf %217, %231 : vector<128x128xf32>
      %233 = vector.broadcast %222 : vector<1x128xf32> to vector<128x128xf32>
      %234 = arith.mulf %232, %233 : vector<128x128xf32>
      %c0_72 = arith.constant 0 : index
      %c0_73 = arith.constant 0 : index
      %235 = vector.load %arg13[%c0_72, %c0_73] : memref<128x128xf32, #tpu.memory_space<vmem>>, vector<128x128xf32>
      tpu.vector_store %arg13[%c0_72, %c0_73], %234 {strides = array<i32>} : memref<128x128xf32, #tpu.memory_space<vmem>>, vector<128x128xf32>,
    } else {
    }
    return
  }
  func.func @transform_0(%arg0: i32, %arg1: i32) -> (i32, i32) {
    %c0_i32 = arith.constant 0 : i32
    %c0_i32_0 = arith.constant 0 : i32
    return %arg0, %c0_i32 : i32, i32
  }
  func.func @transform_1(%arg0: i32, %arg1: i32) -> (i32, i32) {
    %c0_i32 = arith.constant 0 : i32
    %c0_i32_0 = arith.constant 0 : i32
    %c0_i32_1 = arith.constant 0 : i32
    return %c0_i32, %c0_i32_0 : i32, i32
  }
  func.func @transform_2(%arg0: i32, %arg1: i32) -> (i32, i32) {
    %c0_i32 = arith.constant 0 : i32
    %c0_i32_0 = arith.constant 0 : i32
    %c0_i32_1 = arith.constant 0 : i32
    return %c0_i32, %c0_i32_0 : i32, i32
  }
  func.func @transform_3(%arg0: i32, %arg1: i32) -> (i32, i32) {
    %c0_i32 = arith.constant 0 : i32
    %c0_i32_0 = arith.constant 0 : i32
    %c0_i32_1 = arith.constant 0 : i32
    return %c0_i32, %c0_i32_0 : i32, i32
  }
  func.func @transform_4(%arg0: i32, %arg1: i32) -> (i32, i32, i32) {
    %c0_i32 = arith.constant 0 : i32
    %c0_i32_0 = arith.constant 0 : i32
    %c0_i32_1 = arith.constant 0 : i32
    return %arg1, %c0_i32, %c0_i32_0 : i32, i32, i32
  }
  func.func @transform_5(%arg0: i32, %arg1: i32) -> (i32, i32, i32) {
    %c0_i32 = arith.constant 0 : i32
    %c0_i32_0 = arith.constant 0 : i32
    %c0_i32_1 = arith.constant 0 : i32
    return %arg1, %c0_i32, %c0_i32_0 : i32, i32, i32
  }
  func.func @transform_6(%arg0: i32, %arg1: i32) -> (i32, i32, i32) {
    %c0_i32 = arith.constant 0 : i32
    %c0_i32_0 = arith.constant 0 : i32
    %c0_i32_1 = arith.constant 0 : i32
    return %arg1, %c0_i32, %c0_i32_0 : i32, i32, i32
  }
  func.func @transform_7(%arg0: i32, %arg1: i32) -> (i32, i32, i32) {
    %c0_i32 = arith.constant 0 : i32
    %c0_i32_0 = arith.constant 0 : i32
    %c0_i32_1 = arith.constant 0 : i32
    return %arg1, %c0_i32, %c0_i32_0 : i32, i32, i32
  }
  func.func @transform_8(%arg0: i32, %arg1: i32) -> (i32, i32, i32) {
    %c0_i32 = arith.constant 0 : i32
    %c0_i32_0 = arith.constant 0 : i32
    %c0_i32_1 = arith.constant 0 : i32
    return %arg1, %c0_i32, %c0_i32_0 : i32, i32, i32
  }
  func.func @transform_9(%arg0: i32, %arg1: i32) -> (i32, i32, i32) {
    %c0_i32 = arith.constant 0 : i32
    %c0_i32_0 = arith.constant 0 : i32
    %c0_i32_1 = arith.constant 0 : i32
    return %arg1, %c0_i32, %c0_i32_0 : i32, i32, i32
  }
  func.func @transform_10(%arg0: i32, %arg1: i32) -> (i32, i32) {
    %c0_i32 = arith.constant 0 : i32
    %c0_i32_0 = arith.constant 0 : i32
    %c0_i32_1 = arith.constant 0 : i32
    return %c0_i32, %c0_i32_0 : i32, i32
  }
  func.func @transform_11(%arg0: i32, %arg1: i32) -> (i32, i32) {
    %c0_i32 = arith.constant 0 : i32
    %c0_i32_0 = arith.constant 0 : i32
    return %arg0, %c0_i32 : i32, i32
  }
}

</mosaic_0001>

<llo_original>
// kernel: transformer_forward.1
$region0: #{transformer_forward.1}
  #allocation0 [shape = 'u32[]', space=smem, size = 0x4, offset = 0x4, fixed_abs, tag = 'smem constant byte address 0x4 - core index']
  #allocation1 [shape = 'u32[144,128]{1,0:T(1,128)}', space=vmem, size = 0x12000, scoped, tag = 'internal scratch']
  #allocation2 [shape = 'f32[128,128]{1,0:T(8,128)}', space=vmem, size = 0x10000, scoped, tag = 'scratch operand']
  %s0 = inlined_call_operand.vmem [shape: f32[256,128], index: 0, kind: input, shape index: {}]
  %s1 = inlined_call_operand.vmem [shape: f32[128,32], index: 1, kind: input, shape index: {}]
  %s2 = inlined_call_operand.vmem [shape: f32[128,32], index: 2, kind: input, shape index: {}]
  %s3 = inlined_call_operand.vmem [shape: f32[128,128], index: 3, kind: input, shape index: {}]
  %s4 = inlined_call_operand.vmem [shape: f32[2,1,128], index: 4, kind: input, shape index: {}]
  %s5 = inlined_call_operand.vmem [shape: f32[2,1,128], index: 5, kind: input, shape index: {}]
  %s6 = inlined_call_operand.vmem [shape: bf16[2,128,384], index: 6, kind: input, shape index: {}]
  %s7 = inlined_call_operand.vmem [shape: bf16[2,128,128], index: 7, kind: input, shape index: {}]
  %s8 = inlined_call_operand.vmem [shape: bf16[2,128,512], index: 8, kind: input, shape index: {}]
  %s9 = inlined_call_operand.vmem [shape: bf16[2,256,128], index: 9, kind: input, shape index: {}]
  %s10 = inlined_call_operand.vmem [shape: f32[1,128], index: 10, kind: input, shape index: {}]
  %s11 = inlined_call_operand.hbm [shape: f32[256,128], index: 11, kind: output, shape index: {}]
  %s12 = sld [smem:[#allocation0]]
  $region85: #{transformer_forward.1} parent=0
    _
  %s14 = ssub.s32 1, %s12
  %s15 = scalar_select 0, %s14, %s12
  $region1: #{transformer_forward.1} parent=0
    #allocation3 [shape = 'u8[131072]{0}', space=vmem, size = 0x20000, scoped, tag = 'output window, operand 0']
    #allocation4 [shape = 's32[2]{0}', space=sflag, size = 0x8, scoped, tag = 'scoped memory for transformer_forward.1']
    %16 = vsyncpa [#allocation4], 0
    %s17 = scalar_lea.sflag [#allocation4], 1
    %18 = vsyncpa %s17, 0
    loop: start=0, step=1, limit=6
    $region2: #{transformer_forward.1} parent=1 // loop_pre_header
      _
    $region3: #{transformer_forward.1} parent=1 // loop_header
      %s20 = sphi 0, %s24
      %p21 = scmp.ge.s32.totalorder %s20, 6
      %s27 = sphi 0, %s39
      %s28 = sphi 0, %s35
      %s29 = sphi 0, %s27
      %s30 = sphi 0, %s28
      %s31 = sphi 0, %s29
      %s32 = sphi 0, %s30
      %s42 = sphi 0, %s44
      %s45 = sphi 0, %s42
      %s46 = sphi 0, %s45
      %s62 = sphi 0, %s46
      %s66 = sphi 0, %s66
      %s68 = sphi 0, %s66
      %s69 = sphi 0, %s68
      %s83 = sphi 0, %s69
      %s87 = sphi 0, %s87
      %s89 = sphi 0, %s87
      %s90 = sphi 0, %s89
      %s104 = sphi 0, %s90
      %s108 = sphi 0, %s108
      %s110 = sphi 0, %s108
      %s111 = sphi 0, %s110
      %s125 = sphi 0, %s111
      %s131 = sphi 0, %s133
      %s134 = sphi 0, %s131
      %s135 = sphi 0, %s134
      %s151 = sphi 0, %s135
      %s157 = sphi 0, %s159
      %s160 = sphi 0, %s157
      %s161 = sphi 0, %s160
      %s177 = sphi 0, %s161
      %s183 = sphi 0, %s185
      %s186 = sphi 0, %s183
      %s187 = sphi 0, %s186
      %s203 = sphi 0, %s187
      %s209 = sphi 0, %s211
      %s212 = sphi 0, %s209
      %s213 = sphi 0, %s212
      %s229 = sphi 0, %s213
      %s235 = sphi 0, %s237
      %s238 = sphi 0, %s235
      %s239 = sphi 0, %s238
      %s255 = sphi 0, %s239
      %s261 = sphi 0, %s263
      %s264 = sphi 0, %s261
      %s265 = sphi 0, %s264
      %s281 = sphi 0, %s265
      %s285 = sphi 0, %s285
      %s287 = sphi 0, %s285
      %s288 = sphi 0, %s287
      %s302 = sphi 0, %s288
      %s308 = sphi 0, %s310
      %s311 = sphi 0, %s308
      %s312 = sphi 0, %s311
      %s328 = sphi 0, %s312
    $region4: #{transformer_forward.1} parent=1 // loop_header_branch
      %23 = sbr.rel (%p21) target = $region8
    $region5: #{transformer_forward.1} parent=1 // loop_body
      %s25 = ssub.s32 %s20, 1
      %s26 = ssub.s32 %s20, 2
      %s33 = sadd.s32 1, %s28
      %p34 = scmp.ge.s32.totalorder %s33, 2
      %s35 = scalar_select %p34, 0, %s33
      %s36 = sadd.s32 1, %s27
      %s37 = scalar_select %p34, %s36, %s27
      %p38 = scmp.ge.s32.totalorder %s37, 2
      %s39 = scalar_select %p38, 0, %s37
      %s40 = ssub.s32 %s27, %s39
      %p41 = scmp.eq.s32.totalorder %s40, 0
      %s43 = sadd.s32 %s42, 1
      %s44 = scalar_select %p41, %s42, %s43
      %p47 = pneg %p41
      %p48 = scmp.eq.s32.totalorder %s20, 3
      %p49 = por %p47, %p48
      %p50 = scmp.ne.s32.totalorder %s42, %s45
      %p51 = scmp.eq.s32.totalorder %s20, 0
      %p52 = por %p50, %p51
      %p53 = scmp.ne.s32.totalorder %s42, %s45
      %p54 = scmp.eq.s32.totalorder %s25, 3
      %p55 = por %p53, %p54
      %p56 = scmp.ne.s32.totalorder %s45, %s46
      %p57 = scmp.eq.s32.totalorder %s25, 0
      %p58 = por %p56, %p57
      %p59 = scmp.ne.s32.totalorder %s45, %s46
      %p60 = scmp.eq.s32.totalorder %s26, 3
      %p61 = por %p59, %p60
      %p63 = scmp.ne.s32.totalorder %s46, %s62
      %p64 = scmp.eq.s32.totalorder %s26, 0
      %p65 = por %p63, %p64
      %s67 = sadd.s32 %s66, 1
      %p70 = scmp.eq.s32.totalorder %s20, 3
      %p71 = scmp.ne.s32.totalorder %s66, %s68
      %p72 = scmp.eq.s32.totalorder %s20, 0
      %p73 = por %p71, %p72
      %p74 = scmp.ne.s32.totalorder %s66, %s68
      %p75 = scmp.eq.s32.totalorder %s25, 3
      %p76 = por %p74, %p75
      %p77 = scmp.ne.s32.totalorder %s68, %s69
      %p78 = scmp.eq.s32.totalorder %s25, 0
      %p79 = por %p77, %p78
      %p80 = scmp.ne.s32.totalorder %s68, %s69
      %p81 = scmp.eq.s32.totalorder %s26, 3
      %p82 = por %p80, %p81
      %p84 = scmp.ne.s32.totalorder %s69, %s83
      %p85 = scmp.eq.s32.totalorder %s26, 0
      %p86 = por %p84, %p85
      %s88 = sadd.s32 %s87, 1
      %p91 = scmp.eq.s32.totalorder %s20, 3
      %p92 = scmp.ne.s32.totalorder %s87, %s89
      %p93 = scmp.eq.s32.totalorder %s20, 0
      %p94 = por %p92, %p93
      %p95 = scmp.ne.s32.totalorder %s87, %s89
      %p96 = scmp.eq.s32.totalorder %s25, 3
      %p97 = por %p95, %p96
      %p98 = scmp.ne.s32.totalorder %s89, %s90
      %p99 = scmp.eq.s32.totalorder %s25, 0
      %p100 = por %p98, %p99
      %p101 = scmp.ne.s32.totalorder %s89, %s90
      %p102 = scmp.eq.s32.totalorder %s26, 3
      %p103 = por %p101, %p102
      %p105 = scmp.ne.s32.totalorder %s90, %s104
      %p106 = scmp.eq.s32.totalorder %s26, 0
      %p107 = por %p105, %p106
      %s109 = sadd.s32 %s108, 1
      %p112 = scmp.eq.s32.totalorder %s20, 3
      %p113 = scmp.ne.s32.totalorder %s108, %s110
      %p114 = scmp.eq.s32.totalorder %s20, 0
      %p115 = por %p113, %p114
      %p116 = scmp.ne.s32.totalorder %s108, %s110
      %p117 = scmp.eq.s32.totalorder %s25, 3
      %p118 = por %p116, %p117
      %p119 = scmp.ne.s32.totalorder %s110, %s111
      %p120 = scmp.eq.s32.totalorder %s25, 0
      %p121 = por %p119, %p120
      %p122 = scmp.ne.s32.totalorder %s110, %s111
      %p123 = scmp.eq.s32.totalorder %s26, 3
      %p124 = por %p122, %p123
      %p126 = scmp.ne.s32.totalorder %s111, %s125
      %p127 = scmp.eq.s32.totalorder %s26, 0
      %p128 = por %p126, %p127
      %s129 = ssub.s32 %s28, %s35
      %p130 = scmp.eq.s32.totalorder %s129, 0
      %s132 = sadd.s32 %s131, 1
      %s133 = scalar_select %p130, %s131, %s132
      %p136 = pneg %p130
      %p137 = scmp.eq.s32.totalorder %s20, 3
      %p138 = por %p136, %p137
      %p139 = scmp.ne.s32.totalorder %s131, %s134
      %p140 = scmp.eq.s32.totalorder %s20, 0
      %p141 = por %p139, %p140
      %p142 = scmp.ne.s32.totalorder %s131, %s134
      %p143 = scmp.eq.s32.totalorder %s25, 3
      %p144 = por %p142, %p143
      %p145 = scmp.ne.s32.totalorder %s134, %s135
      %p146 = scmp.eq.s32.totalorder %s25, 0
      %p147 = por %p145, %p146
      %p148 = scmp.ne.s32.totalorder %s134, %s135
      %p149 = scmp.eq.s32.totalorder %s26, 3
      %p150 = por %p148, %p149
      %p152 = scmp.ne.s32.totalorder %s135, %s151
      %p153 = scmp.eq.s32.totalorder %s26, 0
      %p154 = por %p152, %p153
      %s155 = ssub.s32 %s28, %s35
      %p156 = scmp.eq.s32.totalorder %s155, 0
      %s158 = sadd.s32 %s157, 1
      %s159 = scalar_select %p156, %s157, %s158
      %p162 = pneg %p156
      %p163 = scmp.eq.s32.totalorder %s20, 3
      %p164 = por %p162, %p163
      %p165 = scmp.ne.s32.totalorder %s157, %s160
      %p166 = scmp.eq.s32.totalorder %s20, 0
      %p167 = por %p165, %p166
      %p168 = scmp.ne.s32.totalorder %s157, %s160
      %p169 = scmp.eq.s32.totalorder %s25, 3
      %p170 = por %p168, %p169
      %p171 = scmp.ne.s32.totalorder %s160, %s161
      %p172 = scmp.eq.s32.totalorder %s25, 0
      %p173 = por %p171, %p172
      %p174 = scmp.ne.s32.totalorder %s160, %s161
      %p175 = scmp.eq.s32.totalorder %s26, 3
      %p176 = por %p174, %p175
      %p178 = scmp.ne.s32.totalorder %s161, %s177
      %p179 = scmp.eq.s32.totalorder %s26, 0
      %p180 = por %p178, %p179
      %s181 = ssub.s32 %s28, %s35
      %p182 = scmp.eq.s32.totalorder %s181, 0
      %s184 = sadd.s32 %s183, 1
      %s185 = scalar_select %p182, %s183, %s184
      %p188 = pneg %p182
      %p189 = scmp.eq.s32.totalorder %s20, 3
      %p190 = por %p188, %p189
      %p191 = scmp.ne.s32.totalorder %s183, %s186
      %p192 = scmp.eq.s32.totalorder %s20, 0
      %p193 = por %p191, %p192
      %p194 = scmp.ne.s32.totalorder %s183, %s186
      %p195 = scmp.eq.s32.totalorder %s25, 3
      %p196 = por %p194, %p195
      %p197 = scmp.ne.s32.totalorder %s186, %s187
      %p198 = scmp.eq.s32.totalorder %s25, 0
      %p199 = por %p197, %p198
      %p200 = scmp.ne.s32.totalorder %s186, %s187
      %p201 = scmp.eq.s32.totalorder %s26, 3
      %p202 = por %p200, %p201
      %p204 = scmp.ne.s32.totalorder %s187, %s203
      %p205 = scmp.eq.s32.totalorder %s26, 0
      %p206 = por %p204, %p205
      %s207 = ssub.s32 %s28, %s35
      %p208 = scmp.eq.s32.totalorder %s207, 0
      %s210 = sadd.s32 %s209, 1
      %s211 = scalar_select %p208, %s209, %s210
      %p214 = pneg %p208
      %p215 = scmp.eq.s32.totalorder %s20, 3
      %p216 = por %p214, %p215
      %p217 = scmp.ne.s32.totalorder %s209, %s212
      %p218 = scmp.eq.s32.totalorder %s20, 0
      %p219 = por %p217, %p218
      %p220 = scmp.ne.s32.totalorder %s209, %s212
      %p221 = scmp.eq.s32.totalorder %s25, 3
      %p222 = por %p220, %p221
      %p223 = scmp.ne.s32.totalorder %s212, %s213
      %p224 = scmp.eq.s32.totalorder %s25, 0
      %p225 = por %p223, %p224
      %p226 = scmp.ne.s32.totalorder %s212, %s213
      %p227 = scmp.eq.s32.totalorder %s26, 3
      %p228 = por %p226, %p227
      %p230 = scmp.ne.s32.totalorder %s213, %s229
      %p231 = scmp.eq.s32.totalorder %s26, 0
      %p232 = por %p230, %p231
      %s233 = ssub.s32 %s28, %s35
      %p234 = scmp.eq.s32.totalorder %s233, 0
      %s236 = sadd.s32 %s235, 1
      %s237 = scalar_select %p234, %s235, %s236
      %p240 = pneg %p234
      %p241 = scmp.eq.s32.totalorder %s20, 3
      %p242 = por %p240, %p241
      %p243 = scmp.ne.s32.totalorder %s235, %s238
      %p244 = scmp.eq.s32.totalorder %s20, 0
      %p245 = por %p243, %p244
      %p246 = scmp.ne.s32.totalorder %s235, %s238
      %p247 = scmp.eq.s32.totalorder %s25, 3
      %p248 = por %p246, %p247
      %p249 = scmp.ne.s32.totalorder %s238, %s239
      %p250 = scmp.eq.s32.totalorder %s25, 0
      %p251 = por %p249, %p250
      %p252 = scmp.ne.s32.totalorder %s238, %s239
      %p253 = scmp.eq.s32.totalorder %s26, 3
      %p254 = por %p252, %p253
      %p256 = scmp.ne.s32.totalorder %s239, %s255
      %p257 = scmp.eq.s32.totalorder %s26, 0
      %p258 = por %p256, %p257
      %s259 = ssub.s32 %s28, %s35
      %p260 = scmp.eq.s32.totalorder %s259, 0
      %s262 = sadd.s32 %s261, 1
      %s263 = scalar_select %p260, %s261, %s262
      %p266 = pneg %p260
      %p267 = scmp.eq.s32.totalorder %s20, 3
      %p268 = por %p266, %p267
      %p269 = scmp.ne.s32.totalorder %s261, %s264
      %p270 = scmp.eq.s32.totalorder %s20, 0
      %p271 = por %p269, %p270
      %p272 = scmp.ne.s32.totalorder %s261, %s264
      %p273 = scmp.eq.s32.totalorder %s25, 3
      %p274 = por %p272, %p273
      %p275 = scmp.ne.s32.totalorder %s264, %s265
      %p276 = scmp.eq.s32.totalorder %s25, 0
      %p277 = por %p275, %p276
      %p278 = scmp.ne.s32.totalorder %s264, %s265
      %p279 = scmp.eq.s32.totalorder %s26, 3
      %p280 = por %p278, %p279
      %p282 = scmp.ne.s32.totalorder %s265, %s281
      %p283 = scmp.eq.s32.totalorder %s26, 0
      %p284 = por %p282, %p283
      %s286 = sadd.s32 %s285, 1
      %p289 = scmp.eq.s32.totalorder %s20, 3
      %p290 = scmp.ne.s32.totalorder %s285, %s287
      %p291 = scmp.eq.s32.totalorder %s20, 0
      %p292 = por %p290, %p291
      %p293 = scmp.ne.s32.totalorder %s285, %s287
      %p294 = scmp.eq.s32.totalorder %s25, 3
      %p295 = por %p293, %p294
      %p296 = scmp.ne.s32.totalorder %s287, %s288
      %p297 = scmp.eq.s32.totalorder %s25, 0
      %p298 = por %p296, %p297
      %p299 = scmp.ne.s32.totalorder %s287, %s288
      %p300 = scmp.eq.s32.totalorder %s26, 3
      %p301 = por %p299, %p300
      %p303 = scmp.ne.s32.totalorder %s288, %s302
      %p304 = scmp.eq.s32.totalorder %s26, 0
      %p305 = por %p303, %p304
      %s306 = ssub.s32 %s27, %s39
      %p307 = scmp.eq.s32.totalorder %s306, 0
      %s309 = sadd.s32 %s308, 1
      %s310 = scalar_select %p307, %s308, %s309
      %p313 = pneg %p307
      %p314 = scmp.eq.s32.totalorder %s20, 3
      %p315 = por %p313, %p314
      %p316 = scmp.ne.s32.totalorder %s308, %s311
      %p317 = scmp.eq.s32.totalorder %s20, 0
      %p318 = por %p316, %p317
      %p319 = scmp.ne.s32.totalorder %s308, %s311
      %p320 = scmp.eq.s32.totalorder %s25, 3
      %p321 = por %p319, %p320
      %p322 = scmp.ne.s32.totalorder %s311, %s312
      %p323 = scmp.eq.s32.totalorder %s25, 0
      %p324 = por %p322, %p323
      %p325 = scmp.ne.s32.totalorder %s311, %s312
      %p326 = scmp.eq.s32.totalorder %s26, 3
      %p327 = por %p325, %p326
      %p329 = scmp.ne.s32.totalorder %s312, %s328
      %p330 = scmp.eq.s32.totalorder %s26, 0
      %p331 = por %p329, %p330
      %p332 = scmp.le.s32.totalorder 1, %s20
      %p333 = scmp.lt.s32.totalorder %s20, 5
      %p334 = pnand %p332, %p333
      %p335 = pneg %p334
      // Predicated region
      $region9: #{transformer_forward.1} parent=5 // pred_check
        _
      $region10: #{transformer_forward.1} parent=5 // pred_check_branch
        %337 = sbr.rel (%p334) target = $region12
      $region11: #{transformer_forward.1} parent=5 // pred_region
        %s338 = ssub.s32 %s20, 1
        // Predicated region
        $region13: #{transformer_forward.1} parent=11 // pred_check
          %p339 = pneg %p79
        $region14: #{transformer_forward.1} parent=11 // pred_check_branch
          %341 = sbr.rel (%p339) target = $region16
        $region15: #{transformer_forward.1} parent=11 // pred_region
          _
        $region16: #{transformer_forward.1} parent=11 // pred_fallthru
          _
        // Predicated region
        $region17: #{transformer_forward.1} parent=11 // pred_check
          %p342 = pneg %p100
        $region18: #{transformer_forward.1} parent=11 // pred_check_branch
          %344 = sbr.rel (%p342) target = $region20
        $region19: #{transformer_forward.1} parent=11 // pred_region
          _
        $region20: #{transformer_forward.1} parent=11 // pred_fallthru
          _
        // Predicated region
        $region21: #{transformer_forward.1} parent=11 // pred_check
          %p345 = pneg %p121
        $region22: #{transformer_forward.1} parent=11 // pred_check_branch
          %347 = sbr.rel (%p345) target = $region24
        $region23: #{transformer_forward.1} parent=11 // pred_region
          _
        $region24: #{transformer_forward.1} parent=11 // pred_fallthru
          _
        // Predicated region
        $region25: #{transformer_forward.1} parent=11 // pred_check
          %p348 = pneg %p298
        $region26: #{transformer_forward.1} parent=11 // pred_check_branch
          %350 = sbr.rel (%p348) target = $region28
        $region27: #{transformer_forward.1} parent=11 // pred_region
          _
        $region28: #{transformer_forward.1} parent=11 // pred_fallthru
          _
      $region12: #{transformer_forward.1} parent=5 // pred_fallthru
        _
      %p351 = scmp.lt.s32.totalorder %s20, 4
      // Predicated region
      $region29: #{transformer_forward.1} parent=5 // pred_check
        %p352 = pneg %p351
      $region30: #{transformer_forward.1} parent=5 // pred_check_branch
        %354 = sbr.rel (%p352) target = $region32
      $region31: #{transformer_forward.1} parent=5 // pred_region
        // Predicated region
        $region33: #{transformer_forward.1} parent=31 // pred_check
          %p355 = pneg %p52
        $region34: #{transformer_forward.1} parent=31 // pred_check_branch
          %357 = sbr.rel (%p355) target = $region36
        $region35: #{transformer_forward.1} parent=31 // pred_region
          %s358 = smul.u32 16, %s27
          %p359 = scmp.lt.s32.totalorder %s358, 31
          %s360 = scalar_select %p359, %s358, 31
          %s361 = smul.addr %s360, 8
          %s362 = scalar_lea.vmem %s0, %s361
          %s363 = smul.u32 16, %s27
        $region36: #{transformer_forward.1} parent=31 // pred_fallthru
          _
        // Predicated region
        $region37: #{transformer_forward.1} parent=31 // pred_check
          %p364 = pneg %p141
        $region38: #{transformer_forward.1} parent=31 // pred_check_branch
          %366 = sbr.rel (%p364) target = $region40
        $region39: #{transformer_forward.1} parent=31 // pred_region
          %p367 = scmp.lt.s32.totalorder %s28, 1
          %s368 = scalar_select %p367, %s28, 1
          %s369 = scalar_lea.vmem %s4, %s368
        $region40: #{transformer_forward.1} parent=31 // pred_fallthru
          _
        // Predicated region
        $region41: #{transformer_forward.1} parent=31 // pred_check
          %p370 = pneg %p167
        $region42: #{transformer_forward.1} parent=31 // pred_check_branch
          %372 = sbr.rel (%p370) target = $region44
        $region43: #{transformer_forward.1} parent=31 // pred_region
          %p373 = scmp.lt.s32.totalorder %s28, 1
          %s374 = scalar_select %p373, %s28, 1
          %s375 = scalar_lea.vmem %s5, %s374
        $region44: #{transformer_forward.1} parent=31 // pred_fallthru
          _
        // Predicated region
        $region45: #{transformer_forward.1} parent=31 // pred_check
          %p376 = pneg %p193
        $region46: #{transformer_forward.1} parent=31 // pred_check_branch
          %378 = sbr.rel (%p376) target = $region48
        $region47: #{transformer_forward.1} parent=31 // pred_region
          %p379 = scmp.lt.s32.totalorder %s28, 1
          %s380 = scalar_select %p379, %s28, 1
          %s381 = smul.addr %s380, 48
          %s382 = smul.addr %s381, 4
          %s383 = scalar_lea.vmem %s6, %s382
        $region48: #{transformer_forward.1} parent=31 // pred_fallthru
          _
        // Predicated region
        $region49: #{transformer_forward.1} parent=31 // pred_check
          %p384 = pneg %p219
        $region50: #{transformer_forward.1} parent=31 // pred_check_branch
          %386 = sbr.rel (%p384) target = $region52
        $region51: #{transformer_forward.1} parent=31 // pred_region
          %p387 = scmp.lt.s32.totalorder %s28, 1
          %s388 = scalar_select %p387, %s28, 1
          %s389 = smul.addr %s388, 16
          %s390 = smul.addr %s389, 4
          %s391 = scalar_lea.vmem %s7, %s390
        $region52: #{transformer_forward.1} parent=31 // pred_fallthru
          _
        // Predicated region
        $region53: #{transformer_forward.1} parent=31 // pred_check
          %p392 = pneg %p245
        $region54: #{transformer_forward.1} parent=31 // pred_check_branch
          %394 = sbr.rel (%p392) target = $region56
        $region55: #{transformer_forward.1} parent=31 // pred_region
          %p395 = scmp.lt.s32.totalorder %s28, 1
          %s396 = scalar_select %p395, %s28, 1
          %s397 = smul.addr %s396, 64
          %s398 = smul.addr %s397, 4
          %s399 = scalar_lea.vmem %s8, %s398
        $region56: #{transformer_forward.1} parent=31 // pred_fallthru
          _
        // Predicated region
        $region57: #{transformer_forward.1} parent=31 // pred_check
          %p400 = pneg %p271
        $region58: #{transformer_forward.1} parent=31 // pred_check_branch
          %402 = sbr.rel (%p400) target = $region60
        $region59: #{transformer_forward.1} parent=31 // pred_region
          %p403 = scmp.lt.s32.totalorder %s28, 1
          %s404 = scalar_select %p403, %s28, 1
          %s405 = smul.addr %s404, 32
          %s406 = smul.addr %s405, 4
          %s407 = scalar_lea.vmem %s9, %s406
        $region60: #{transformer_forward.1} parent=31 // pred_fallthru
          _
      $region32: #{transformer_forward.1} parent=5 // pred_fallthru
        _
      %p408 = scmp.le.s32.totalorder 1, %s20
      %p409 = scmp.lt.s32.totalorder %s20, 5
      %p410 = pnand %p408, %p409
      %p411 = pneg %p410
      // Predicated region
      $region61: #{transformer_forward.1} parent=5 // pred_check
        _
      $region62: #{transformer_forward.1} parent=5 // pred_check_branch
        %413 = sbr.rel (%p410) target = $region64
      $region63: #{transformer_forward.1} parent=5 // pred_region
        %s414 = ssub.s32 %s20, 1
        %s415 = smul.u32 16, %s29
        %p416 = scmp.lt.s32.totalorder %s415, 31
        %s417 = scalar_select %p416, %s415, 31
        %s418 = smul.addr %s417, 8
        %s419 = scalar_lea.vmem %s0, %s418
        %p420 = pneg %p58
        %p421 = pneg %p55
        %p422 = pneg %p79
        %p423 = pneg %p76
        %p424 = pneg %p100
        %p425 = pneg %p97
        %p426 = pneg %p121
        %p427 = pneg %p118
        %p428 = scmp.lt.s32.totalorder %s30, 1
        %s429 = scalar_select %p428, %s30, 1
        %s430 = scalar_lea.vmem %s4, %s429
        %p431 = pneg %p147
        %p432 = pneg %p144
        %p433 = scmp.lt.s32.totalorder %s30, 1
        %s434 = scalar_select %p433, %s30, 1
        %s435 = scalar_lea.vmem %s5, %s434
        %p436 = pneg %p173
        %p437 = pneg %p170
        %p438 = scmp.lt.s32.totalorder %s30, 1
        %s439 = scalar_select %p438, %s30, 1
        %s440 = smul.addr %s439, 48
        %s441 = smul.addr %s440, 4
        %s442 = scalar_lea.vmem %s6, %s441
        %p443 = pneg %p199
        %p444 = pneg %p196
        %p445 = scmp.lt.s32.totalorder %s30, 1
        %s446 = scalar_select %p445, %s30, 1
        %s447 = smul.addr %s446, 16
        %s448 = smul.addr %s447, 4
        %s449 = scalar_lea.vmem %s7, %s448
        %p450 = pneg %p225
        %p451 = pneg %p222
        %p452 = scmp.lt.s32.totalorder %s30, 1
        %s453 = scalar_select %p452, %s30, 1
        %s454 = smul.addr %s453, 64
        %s455 = smul.addr %s454, 4
        %s456 = scalar_lea.vmem %s8, %s455
        %p457 = pneg %p251
        %p458 = pneg %p248
        %p459 = scmp.lt.s32.totalorder %s30, 1
        %s460 = scalar_select %p459, %s30, 1
        %s461 = smul.addr %s460, 32
        %s462 = smul.addr %s461, 4
        %s463 = scalar_lea.vmem %s9, %s462
        %p464 = pneg %p277
        %p465 = pneg %p274
        %p466 = pneg %p298
        %p467 = pneg %p295
        %p468 = pneg %p324
        %p469 = pneg %p321
        %s470 = sand.u32 %s311, 1
        %s471 = scalar_lea.sflag [#allocation4], %s470
        %s472 = sand.u32 %s311, 1
        %s473 = smul.addr %s472, 128
        %s474 = scalar_lea.vmem [#allocation3], %s473
        %s475 = smul.u32 16, %s29
        %p476 = scmp.lt.s32.totalorder %s475, 31
        %s477 = scalar_select %p476, %s475, 31
        %s478 = smul.addr %s477, 8
        %s479 = scalar_lea.vmem %s0, %s478
        %s480 = smul.u32 16, %s29
        %p481 = scmp.lt.s32.totalorder %s30, 1
        %s482 = scalar_select %p481, %s30, 1
        %s483 = scalar_lea.vmem %s4, %s482
        %p484 = scmp.lt.s32.totalorder %s30, 1
        %s485 = scalar_select %p484, %s30, 1
        %s486 = scalar_lea.vmem %s5, %s485
        %p487 = scmp.lt.s32.totalorder %s30, 1
        %s488 = scalar_select %p487, %s30, 1
        %s489 = smul.addr %s488, 48
        %s490 = smul.addr %s489, 4
        %s491 = scalar_lea.vmem %s6, %s490
        %p492 = scmp.lt.s32.totalorder %s30, 1
        %s493 = scalar_select %p492, %s30, 1
        %s494 = smul.addr %s493, 16
        %s495 = smul.addr %s494, 4
        %s496 = scalar_lea.vmem %s7, %s495
        %p497 = scmp.lt.s32.totalorder %s30, 1
        %s498 = scalar_select %p497, %s30, 1
        %s499 = smul.addr %s498, 64
        %s500 = smul.addr %s499, 4
        %s501 = scalar_lea.vmem %s8, %s500
        %p502 = scmp.lt.s32.totalorder %s30, 1
        %s503 = scalar_select %p502, %s30, 1
        %s504 = smul.addr %s503, 32
        %s505 = smul.addr %s504, 4
        %s506 = scalar_lea.vmem %s9, %s505
        %s507 = smul.u32 16, %s29
        %p509 = scmp.eq.s32.totalorder %s30, 0
        // Predicated region
        $region65: #{transformer_forward.1} parent=63 // pred_check
          %p510 = pneg %p509
        $region66: #{transformer_forward.1} parent=63 // pred_check_branch
          %512 = sbr.rel (%p510) target = $region68
        $region67: #{transformer_forward.1} parent=63 // pred_region
          %v513 = vld [vmem:[%s479] sm:$0xff]
          %v514 = vld [vmem:[%s479 + $0x8] sm:$0xff]
          %v515 = vld [vmem:[%s479 + $0x10] sm:$0xff]
          %v516 = vld [vmem:[%s479 + $0x18] sm:$0xff]
          %v517 = vld [vmem:[%s479 + $0x20] sm:$0xff]
          %v518 = vld [vmem:[%s479 + $0x28] sm:$0xff]
          %v519 = vld [vmem:[%s479 + $0x30] sm:$0xff]
          %v520 = vld [vmem:[%s479 + $0x38] sm:$0xff]
          %v521 = vld [vmem:[%s479 + $0x40] sm:$0xff]
          %v522 = vld [vmem:[%s479 + $0x48] sm:$0xff]
          %v523 = vld [vmem:[%s479 + $0x50] sm:$0xff]
          %v524 = vld [vmem:[%s479 + $0x58] sm:$0xff]
          %v525 = vld [vmem:[%s479 + $0x60] sm:$0xff]
          %v526 = vld [vmem:[%s479 + $0x68] sm:$0xff]
          %v527 = vld [vmem:[%s479 + $0x70] sm:$0xff]
          %v528 = vld [vmem:[%s479 + $0x78] sm:$0xff]
          %529 = vst [vmem:[#allocation2] sm:$0xff] %v513
          %530 = vst [vmem:[#allocation2 + $0x8] sm:$0xff] %v514
          %531 = vst [vmem:[#allocation2 + $0x10] sm:$0xff] %v515
          %532 = vst [vmem:[#allocation2 + $0x18] sm:$0xff] %v516
          %533 = vst [vmem:[#allocation2 + $0x20] sm:$0xff] %v517
          %534 = vst [vmem:[#allocation2 + $0x28] sm:$0xff] %v518
          %535 = vst [vmem:[#allocation2 + $0x30] sm:$0xff] %v519
          %536 = vst [vmem:[#allocation2 + $0x38] sm:$0xff] %v520
          %537 = vst [vmem:[#allocation2 + $0x40] sm:$0xff] %v521
          %538 = vst [vmem:[#allocation2 + $0x48] sm:$0xff] %v522
          %539 = vst [vmem:[#allocation2 + $0x50] sm:$0xff] %v523
          %540 = vst [vmem:[#allocation2 + $0x58] sm:$0xff] %v524
          %541 = vst [vmem:[#allocation2 + $0x60] sm:$0xff] %v525
          %542 = vst [vmem:[#allocation2 + $0x68] sm:$0xff] %v526
          %543 = vst [vmem:[#allocation2 + $0x70] sm:$0xff] %v527
          %544 = vst [vmem:[#allocation2 + $0x78] sm:$0xff] %v528
        $region68: #{transformer_forward.1} parent=63 // pred_fallthru
          _
        %v545 = vld [vmem:[#allocation2] sm:$0xff]
        %v546 = vld [vmem:[#allocation2 + $0x8] sm:$0xff]
        %v547 = vld [vmem:[#allocation2 + $0x10] sm:$0xff]
        %v548 = vld [vmem:[#allocation2 + $0x18] sm:$0xff]
        %v549 = vld [vmem:[#allocation2 + $0x20] sm:$0xff]
        %v550 = vld [vmem:[#allocation2 + $0x28] sm:$0xff]
        %v551 = vld [vmem:[#allocation2 + $0x30] sm:$0xff]
        %v552 = vld [vmem:[#allocation2 + $0x38] sm:$0xff]
        %v553 = vld [vmem:[#allocation2 + $0x40] sm:$0xff]
        %v554 = vld [vmem:[#allocation2 + $0x48] sm:$0xff]
        %v555 = vld [vmem:[#allocation2 + $0x50] sm:$0xff]
        %v556 = vld [vmem:[#allocation2 + $0x58] sm:$0xff]
        %v557 = vld [vmem:[#allocation2 + $0x60] sm:$0xff]
        %v558 = vld [vmem:[#allocation2 + $0x68] sm:$0xff]
        %v559 = vld [vmem:[#allocation2 + $0x70] sm:$0xff]
        %v560 = vld [vmem:[#allocation2 + $0x78] sm:$0xff]
        %v561 = vld [vmem:[%s483] sm:$0x1]
        %v562 = vmul.f32 %v545, %v545
        %v563 = vmul.f32 %v546, %v546
        %v564 = vmul.f32 %v547, %v547
        %v565 = vmul.f32 %v548, %v548
        %v566 = vmul.f32 %v549, %v549
        %v567 = vmul.f32 %v550, %v550
        %v568 = vmul.f32 %v551, %v551
        %v569 = vmul.f32 %v552, %v552
        %v570 = vmul.f32 %v553, %v553
        %v571 = vmul.f32 %v554, %v554
        %v572 = vmul.f32 %v555, %v555
        %v573 = vmul.f32 %v556, %v556
        %v574 = vmul.f32 %v557, %v557
        %v575 = vmul.f32 %v558, %v558
        %v576 = vmul.f32 %v559, %v559
        %v577 = vmul.f32 %v560, %v560
        %578 = vadd.xlane.f32.xlu0 %v562
        %v579 = vpop.xlane.xlu0 %578
        %580 = vadd.xlane.f32.xlu0 %v563
        %v581 = vpop.xlane.xlu0 %580
        %582 = vadd.xlane.f32.xlu0 %v564
        %v583 = vpop.xlane.xlu0 %582
        %584 = vadd.xlane.f32.xlu0 %v565
        %v585 = vpop.xlane.xlu0 %584
        %586 = vadd.xlane.f32.xlu0 %v566
        %v587 = vpop.xlane.xlu0 %586
        %588 = vadd.xlane.f32.xlu0 %v567
        %v589 = vpop.xlane.xlu0 %588
        %590 = vadd.xlane.f32.xlu0 %v568
        %v591 = vpop.xlane.xlu0 %590
        %592 = vadd.xlane.f32.xlu0 %v569
        %v593 = vpop.xlane.xlu0 %592
        %594 = vadd.xlane.f32.xlu0 %v570
        %v595 = vpop.xlane.xlu0 %594
        %596 = vadd.xlane.f32.xlu0 %v571
        %v597 = vpop.xlane.xlu0 %596
        %598 = vadd.xlane.f32.xlu0 %v572
        %v599 = vpop.xlane.xlu0 %598
        %600 = vadd.xlane.f32.xlu0 %v573
        %v601 = vpop.xlane.xlu0 %600
        %602 = vadd.xlane.f32.xlu0 %v574
        %v603 = vpop.xlane.xlu0 %602
        %604 = vadd.xlane.f32.xlu0 %v575
        %v605 = vpop.xlane.xlu0 %604
        %606 = vadd.xlane.f32.xlu0 %v576
        %v607 = vpop.xlane.xlu0 %606
        %608 = vadd.xlane.f32.xlu0 %v577
        %v609 = vpop.xlane.xlu0 %608
        %v610 = vrcp.pop 128.0
        %v611 = vmul.f32 %v579, %v610
        %v612 = vmul.f32 %v581, %v610
        %v613 = vmul.f32 %v583, %v610
        %v614 = vmul.f32 %v585, %v610
        %v615 = vmul.f32 %v587, %v610
        %v616 = vmul.f32 %v589, %v610
        %v617 = vmul.f32 %v591, %v610
        %v618 = vmul.f32 %v593, %v610
        %v619 = vmul.f32 %v595, %v610
        %v620 = vmul.f32 %v597, %v610
        %v621 = vmul.f32 %v599, %v610
        %v622 = vmul.f32 %v601, %v610
        %v623 = vmul.f32 %v603, %v610
        %v624 = vmul.f32 %v605, %v610
        %v625 = vmul.f32 %v607, %v610
        %v626 = vmul.f32 %v609, %v610
        %v627 = vadd.f32 %v611, 1e-06
        %v628 = vadd.f32 %v612, 1e-06
        %v629 = vadd.f32 %v613, 1e-06
        %v630 = vadd.f32 %v614, 1e-06
        %v631 = vadd.f32 %v615, 1e-06
        %v632 = vadd.f32 %v616, 1e-06
        %v633 = vadd.f32 %v617, 1e-06
        %v634 = vadd.f32 %v618, 1e-06
        %v635 = vadd.f32 %v619, 1e-06
        %v636 = vadd.f32 %v620, 1e-06
        %v637 = vadd.f32 %v621, 1e-06
        %v638 = vadd.f32 %v622, 1e-06
        %v639 = vadd.f32 %v623, 1e-06
        %v640 = vadd.f32 %v624, 1e-06
        %v641 = vadd.f32 %v625, 1e-06
        %v642 = vadd.f32 %v626, 1e-06
        %v643 = vrsqrt.pop %v627
        %v644 = vrsqrt.pop %v628
        %v645 = vrsqrt.pop %v629
        %v646 = vrsqrt.pop %v630
        %v647 = vrsqrt.pop %v631
        %v648 = vrsqrt.pop %v632
        %v649 = vrsqrt.pop %v633
        %v650 = vrsqrt.pop %v634
        %v651 = vrsqrt.pop %v635
        %v652 = vrsqrt.pop %v636
        %v653 = vrsqrt.pop %v637
        %v654 = vrsqrt.pop %v638
        %v655 = vrsqrt.pop %v639
        %v656 = vrsqrt.pop %v640
        %v657 = vrsqrt.pop %v641
        %v658 = vrsqrt.pop %v642
        %v659 = vmul.f32 %v545, %v643
        %v660 = vmul.f32 %v546, %v644
        %v661 = vmul.f32 %v547, %v645
        %v662 = vmul.f32 %v548, %v646
        %v663 = vmul.f32 %v549, %v647
        %v664 = vmul.f32 %v550, %v648
        %v665 = vmul.f32 %v551, %v649
        %v666 = vmul.f32 %v552, %v650
        %v667 = vmul.f32 %v553, %v651
        %v668 = vmul.f32 %v554, %v652
        %v669 = vmul.f32 %v555, %v653
        %v670 = vmul.f32 %v556, %v654
        %v671 = vmul.f32 %v557, %v655
        %v672 = vmul.f32 %v558, %v656
        %v673 = vmul.f32 %v559, %v657
        %v674 = vmul.f32 %v560, %v658
        %v676 = vlaneseq
        %v677 = vshrl.u32 %v676, 7
        %v678 = vsub.s32 0, %v677
        %v679 = vrot.slane %v561, %v678
        %v681 = vmul.f32 %v659, %v679
        %v682 = vmul.f32 %v660, %v679
        %v683 = vmul.f32 %v661, %v679
        %v684 = vmul.f32 %v662, %v679
        %v685 = vmul.f32 %v663, %v679
        %v686 = vmul.f32 %v664, %v679
        %v687 = vmul.f32 %v665, %v679
        %v688 = vmul.f32 %v666, %v679
        %v689 = vmul.f32 %v667, %v679
        %v690 = vmul.f32 %v668, %v679
        %v691 = vmul.f32 %v669, %v679
        %v692 = vmul.f32 %v670, %v679
        %v693 = vmul.f32 %v671, %v679
        %v694 = vmul.f32 %v672, %v679
        %v695 = vmul.f32 %v673, %v679
        %v696 = vmul.f32 %v674, %v679
        %v697 = vpack.c.bf16 %v682, %v681
        %v698 = vpack.c.bf16 %v684, %v683
        %v699 = vpack.c.bf16 %v686, %v685
        %v700 = vpack.c.bf16 %v688, %v687
        %v701 = vpack.c.bf16 %v690, %v689
        %v702 = vpack.c.bf16 %v692, %v691
        %v703 = vpack.c.bf16 %v694, %v693
        %v704 = vpack.c.bf16 %v696, %v695
        %v705 = vld [vmem:[%s491] sm:$0xff]
        %v706 = vld [vmem:[%s491 + $0x8] sm:$0xf]
        %v707 = vld [vmem:[%s491 + $0xc] sm:$0xff]
        %v708 = vld [vmem:[%s491 + $0x14] sm:$0xf]
        %v709 = vld [vmem:[%s491 + $0x18] sm:$0xff]
        %v710 = vld [vmem:[%s491 + $0x20] sm:$0xf]
        %v711 = vld [vmem:[%s491 + $0x24] sm:$0xff]
        %v712 = vld [vmem:[%s491 + $0x2c] sm:$0xf]
        %v713 = vld [vmem:[%s491 + $0x30] sm:$0xff]
        %v714 = vld [vmem:[%s491 + $0x38] sm:$0xf]
        %v715 = vld [vmem:[%s491 + $0x3c] sm:$0xff]
        %v716 = vld [vmem:[%s491 + $0x44] sm:$0xf]
        %v717 = vld [vmem:[%s491 + $0x48] sm:$0xff]
        %v718 = vld [vmem:[%s491 + $0x50] sm:$0xf]
        %v719 = vld [vmem:[%s491 + $0x54] sm:$0xff]
        %v720 = vld [vmem:[%s491 + $0x5c] sm:$0xf]
        %v721 = vld [vmem:[%s491 + $0x60] sm:$0xff]
        %v722 = vld [vmem:[%s491 + $0x68] sm:$0xf]
        %v723 = vld [vmem:[%s491 + $0x6c] sm:$0xff]
        %v724 = vld [vmem:[%s491 + $0x74] sm:$0xf]
        %v725 = vld [vmem:[%s491 + $0x78] sm:$0xff]
        %v726 = vld [vmem:[%s491 + $0x80] sm:$0xf]
        %v727 = vld [vmem:[%s491 + $0x84] sm:$0xff]
        %v728 = vld [vmem:[%s491 + $0x8c] sm:$0xf]
        %v729 = vld [vmem:[%s491 + $0x90] sm:$0xff]
        %v730 = vld [vmem:[%s491 + $0x98] sm:$0xf]
        %v731 = vld [vmem:[%s491 + $0x9c] sm:$0xff]
        %v732 = vld [vmem:[%s491 + $0xa4] sm:$0xf]
        %v733 = vld [vmem:[%s491 + $0xa8] sm:$0xff]
        %v734 = vld [vmem:[%s491 + $0xb0] sm:$0xf]
        %v735 = vld [vmem:[%s491 + $0xb4] sm:$0xff]
        %v736 = vld [vmem:[%s491 + $0xbc] sm:$0xf]
        %v769 = vunpack.c.l.b16 %v705
        %v770 = vunpack.c.h.b16 %v705
        %v771 = vunpack.c.l.b16 %v706
        %v772 = vunpack.c.l.b16 %v707
        %v773 = vunpack.c.h.b16 %v707
        %v774 = vunpack.c.l.b16 %v708
        %v775 = vunpack.c.l.b16 %v709
        %v776 = vunpack.c.h.b16 %v709
        %v777 = vunpack.c.l.b16 %v710
        %v778 = vunpack.c.l.b16 %v711
        %v779 = vunpack.c.h.b16 %v711
        %v780 = vunpack.c.l.b16 %v712
        %v781 = vunpack.c.l.b16 %v713
        %v782 = vunpack.c.h.b16 %v713
        %v783 = vunpack.c.l.b16 %v714
        %v784 = vunpack.c.l.b16 %v715
        %v785 = vunpack.c.h.b16 %v715
        %v786 = vunpack.c.l.b16 %v716
        %v787 = vunpack.c.l.b16 %v717
        %v788 = vunpack.c.h.b16 %v717
        %v789 = vunpack.c.l.b16 %v718
        %v790 = vunpack.c.l.b16 %v719
        %v791 = vunpack.c.h.b16 %v719
        %v792 = vunpack.c.l.b16 %v720
        %v793 = vunpack.c.l.b16 %v721
        %v794 = vunpack.c.h.b16 %v721
        %v795 = vunpack.c.l.b16 %v722
        %v796 = vunpack.c.l.b16 %v723
        %v797 = vunpack.c.h.b16 %v723
        %v798 = vunpack.c.l.b16 %v724
        %v799 = vunpack.c.l.b16 %v725
        %v800 = vunpack.c.h.b16 %v725
        %v801 = vunpack.c.l.b16 %v726
        %v802 = vunpack.c.l.b16 %v727
        %v803 = vunpack.c.h.b16 %v727
        %v804 = vunpack.c.l.b16 %v728
        %v805 = vunpack.c.l.b16 %v729
        %v806 = vunpack.c.h.b16 %v729
        %v807 = vunpack.c.l.b16 %v730
        %v808 = vunpack.c.l.b16 %v731
        %v809 = vunpack.c.h.b16 %v731
        %v810 = vunpack.c.l.b16 %v732
        %v811 = vunpack.c.l.b16 %v733
        %v812 = vunpack.c.h.b16 %v733
        %v813 = vunpack.c.l.b16 %v734
        %v814 = vunpack.c.l.b16 %v735
        %v815 = vunpack.c.h.b16 %v735
        %v816 = vunpack.c.l.b16 %v736
        %v817 = vpack.c.b16 %v772, %v769
        %v818 = vpack.c.b16 %v773, %v770
        %v819 = vpack.c.b16 %v774, %v771
        %v820 = vpack.c.b16 %v778, %v775
        %v821 = vpack.c.b16 %v779, %v776
        %v822 = vpack.c.b16 %v780, %v777
        %v823 = vpack.c.b16 %v784, %v781
        %v824 = vpack.c.b16 %v785, %v782
        %v825 = vpack.c.b16 %v786, %v783
        %v826 = vpack.c.b16 %v790, %v787
        %v827 = vpack.c.b16 %v791, %v788
        %v828 = vpack.c.b16 %v792, %v789
        %v829 = vpack.c.b16 %v796, %v793
        %v830 = vpack.c.b16 %v797, %v794
        %v831 = vpack.c.b16 %v798, %v795
        %v832 = vpack.c.b16 %v802, %v799
        %v833 = vpack.c.b16 %v803, %v800
        %v834 = vpack.c.b16 %v804, %v801
        %v835 = vpack.c.b16 %v808, %v805
        %v836 = vpack.c.b16 %v809, %v806
        %v837 = vpack.c.b16 %v810, %v807
        %v838 = vpack.c.b16 %v814, %v811
        %v839 = vpack.c.b16 %v815, %v812
        %v840 = vpack.c.b16 %v816, %v813
        %865 = vmatprep.subr.bf16.mxu0 %v818
        %866 = vmatpush1.bf16.msra.mxu0 %v817
        %867 = vmatprep.subr.bf16.mxu0 %v821
        %868 = vmatpush1.bf16.msra.mxu0 %v820
        %869 = vmatprep.subr.bf16.mxu0 %v824
        %870 = vmatpush1.bf16.msra.mxu0 %v823
        %871 = vmatprep.subr.bf16.mxu0 %v827
        %872 = vmatpush1.bf16.msra.mxu0 %v826
        %873 = vmatprep.subr.bf16.mxu0 %v830
        %874 = vmatpush1.bf16.msra.mxu0 %v829
        %875 = vmatprep.subr.bf16.mxu0 %v833
        %876 = vmatpush1.bf16.msra.mxu0 %v832
        %877 = vmatprep.subr.bf16.mxu0 %v836
        %878 = vmatpush1.bf16.msra.mxu0 %v835
        %879 = vmatprep.subr.bf16.mxu0 %v839
        %880 = vmatpush1.bf16.msra.mxu0 %v838
        %881 = vmatprep.subr.bf16.mxu0 0
        %882 = vmatpush1.bf16.msra.mxu0 0
        %883 = vmatprep.subr.bf16.mxu0 0
        %884 = vmatpush1.bf16.msra.mxu0 0
        %885 = vmatprep.subr.bf16.mxu0 0
        %886 = vmatpush1.bf16.msra.mxu0 0
        %887 = vmatprep.subr.bf16.mxu0 0
        %888 = vmatpush1.bf16.msra.mxu0 0
        %889 = vmatprep.subr.bf16.mxu0 0
        %890 = vmatpush1.bf16.msra.mxu0 0
        %891 = vmatprep.subr.bf16.mxu0 0
        %892 = vmatpush1.bf16.msra.mxu0 0
        %893 = vmatprep.subr.bf16.mxu0 0
        %894 = vmatpush1.bf16.msra.mxu0 0
        %895 = vmatprep.subr.bf16.mxu0 0
        %896 = vmatpush1.bf16.msra.mxu0 0
        %897 = vmatprep.mubr.bf16.mxu0 0
        %898 = vmatmul.mubr.bf16.gmra.mrb[0].mxu0 %v697
        %v899 = vpop.f32.mrb[0].mxu0
        %v900 = vadd.f32 0.0, %v899
        %v901 = vpop.f32.mrb[0].mxu0
        %v902 = vadd.f32 0.0, %v901
        %v903 = vpop.f32.mrb[0].mxu0
        %v904 = vadd.f32 0.0, %v903
        %v905 = vpop.f32.mrb[0].mxu0
        %v906 = vadd.f32 0.0, %v905
        %907 = vmatprep.mubr.bf16.mxu0 0
        %908 = vmatmul.mubr.bf16.gmra.mrb[0].mxu0 %v698
        %v909 = vpop.f32.mrb[0].mxu0
        %v910 = vadd.f32 0.0, %v909
        %v911 = vpop.f32.mrb[0].mxu0
        %v912 = vadd.f32 0.0, %v911
        %v913 = vpop.f32.mrb[0].mxu0
        %v914 = vadd.f32 0.0, %v913
        %v915 = vpop.f32.mrb[0].mxu0
        %v916 = vadd.f32 0.0, %v915
        %917 = vmatprep.mubr.bf16.mxu0 0
        %918 = vmatmul.mubr.bf16.gmra.mrb[0].mxu0 %v699
        %v919 = vpop.f32.mrb[0].mxu0
        %v920 = vadd.f32 0.0, %v919
        %v921 = vpop.f32.mrb[0].mxu0
        %v922 = vadd.f32 0.0, %v921
        %v923 = vpop.f32.mrb[0].mxu0
        %v924 = vadd.f32 0.0, %v923
        %v925 = vpop.f32.mrb[0].mxu0
        %v926 = vadd.f32 0.0, %v925
        %927 = vmatprep.mubr.bf16.mxu0 0
        %928 = vmatmul.mubr.bf16.gmra.mrb[0].mxu0 %v700
        %v929 = vpop.f32.mrb[0].mxu0
        %v930 = vadd.f32 0.0, %v929
        %v931 = vpop.f32.mrb[0].mxu0
        %v932 = vadd.f32 0.0, %v931
        %v933 = vpop.f32.mrb[0].mxu0
        %v934 = vadd.f32 0.0, %v933
        %v935 = vpop.f32.mrb[0].mxu0
        %v936 = vadd.f32 0.0, %v935
        %937 = vmatprep.mubr.bf16.mxu0 0
        %938 = vmatmul.mubr.bf16.gmra.mrb[0].mxu0 %v701
        %v939 = vpop.f32.mrb[0].mxu0
        %v940 = vadd.f32 0.0, %v939
        %v941 = vpop.f32.mrb[0].mxu0
        %v942 = vadd.f32 0.0, %v941
        %v943 = vpop.f32.mrb[0].mxu0
        %v944 = vadd.f32 0.0, %v943
        %v945 = vpop.f32.mrb[0].mxu0
        %v946 = vadd.f32 0.0, %v945
        %947 = vmatprep.mubr.bf16.mxu0 0
        %948 = vmatmul.mubr.bf16.gmra.mrb[0].mxu0 %v702
        %v949 = vpop.f32.mrb[0].mxu0
        %v950 = vadd.f32 0.0, %v949
        %v951 = vpop.f32.mrb[0].mxu0
        %v952 = vadd.f32 0.0, %v951
        %v953 = vpop.f32.mrb[0].mxu0
        %v954 = vadd.f32 0.0, %v953
        %v955 = vpop.f32.mrb[0].mxu0
        %v956 = vadd.f32 0.0, %v955
        %957 = vmatprep.mubr.bf16.mxu0 0
        %958 = vmatmul.mubr.bf16.gmra.mrb[0].mxu0 %v703
        %v959 = vpop.f32.mrb[0].mxu0
        %v960 = vadd.f32 0.0, %v959
        %v961 = vpop.f32.mrb[0].mxu0
        %v962 = vadd.f32 0.0, %v961
        %v963 = vpop.f32.mrb[0].mxu0
        %v964 = vadd.f32 0.0, %v963
        %v965 = vpop.f32.mrb[0].mxu0
        %v966 = vadd.f32 0.0, %v965
        %967 = vmatprep.mubr.bf16.mxu0 0
        %968 = vmatmul.mubr.bf16.gmra.mrb[0].mxu0 %v704
        %v969 = vpop.f32.mrb[0].mxu0
        %v970 = vadd.f32 0.0, %v969
        %v971 = vpop.f32.mrb[0].mxu0
        %v972 = vadd.f32 0.0, %v971
        %v973 = vpop.f32.mrb[0].mxu0
        %v974 = vadd.f32 0.0, %v973
        %v975 = vpop.f32.mrb[0].mxu0
        %v976 = vadd.f32 0.0, %v975
        %977 = vdwg.mxu0
        %978 = vmatprep.subr.bf16.mxu0 0
        %979 = vmatpush1.bf16.msra.mxu0 %v819
        %980 = vmatprep.subr.bf16.mxu0 0
        %981 = vmatpush1.bf16.msra.mxu0 %v822
        %982 = vmatprep.subr.bf16.mxu0 0
        %983 = vmatpush1.bf16.msra.mxu0 %v825
        %984 = vmatprep.subr.bf16.mxu0 0
        %985 = vmatpush1.bf16.msra.mxu0 %v828
        %986 = vmatprep.subr.bf16.mxu0 0
        %987 = vmatpush1.bf16.msra.mxu0 %v831
        %988 = vmatprep.subr.bf16.mxu0 0
        %989 = vmatpush1.bf16.msra.mxu0 %v834
        %990 = vmatprep.subr.bf16.mxu0 0
        %991 = vmatpush1.bf16.msra.mxu0 %v837
        %992 = vmatprep.subr.bf16.mxu0 0
        %993 = vmatpush1.bf16.msra.mxu0 %v840
        %994 = vmatprep.subr.bf16.mxu0 0
        %995 = vmatpush1.bf16.msra.mxu0 0
        %996 = vmatprep.subr.bf16.mxu0 0
        %997 = vmatpush1.bf16.msra.mxu0 0
        %998 = vmatprep.subr.bf16.mxu0 0
        %999 = vmatpush1.bf16.msra.mxu0 0
        %1000 = vmatprep.subr.bf16.mxu0 0
        %1001 = vmatpush1.bf16.msra.mxu0 0
        %1002 = vmatprep.subr.bf16.mxu0 0
        %1003 = vmatpush1.bf16.msra.mxu0 0
        %1004 = vmatprep.subr.bf16.mxu0 0
        %1005 = vmatpush1.bf16.msra.mxu0 0
        %1006 = vmatprep.subr.bf16.mxu0 0
        %1007 = vmatpush1.bf16.msra.mxu0 0
        %1008 = vmatprep.subr.bf16.mxu0 0
        %1009 = vmatpush1.bf16.msra.mxu0 0
        %1010 = vmatprep.mubr.bf16.mxu0 0
        %1011 = vmatmul.mubr.bf16.gmra.mrb[0].mxu0 %v697
        %v1012 = vpop.f32.mrb[0].mxu0
        %v1013 = vadd.f32 0.0, %v1012
        %v1014 = vpop.f32.mrb[0].mxu0
        %v1015 = vpop.f32.mrb[0].mxu0
        %v1016 = vadd.f32 0.0, %v1015
        %v1017 = vpop.f32.mrb[0].mxu0
        %1018 = vmatprep.mubr.bf16.mxu0 0
        %1019 = vmatmul.mubr.bf16.gmra.mrb[0].mxu0 %v698
        %v1020 = vpop.f32.mrb[0].mxu0
        %v1021 = vadd.f32 0.0, %v1020
        %v1022 = vpop.f32.mrb[0].mxu0
        %v1023 = vpop.f32.mrb[0].mxu0
        %v1024 = vadd.f32 0.0, %v1023
        %v1025 = vpop.f32.mrb[0].mxu0
        %1026 = vmatprep.mubr.bf16.mxu0 0
        %1027 = vmatmul.mubr.bf16.gmra.mrb[0].mxu0 %v699
        %v1028 = vpop.f32.mrb[0].mxu0
        %v1029 = vadd.f32 0.0, %v1028
        %v1030 = vpop.f32.mrb[0].mxu0
        %v1031 = vpop.f32.mrb[0].mxu0
        %v1032 = vadd.f32 0.0, %v1031
        %v1033 = vpop.f32.mrb[0].mxu0
        %1034 = vmatprep.mubr.bf16.mxu0 0
        %1035 = vmatmul.mubr.bf16.gmra.mrb[0].mxu0 %v700
        %v1036 = vpop.f32.mrb[0].mxu0
        %v1037 = vadd.f32 0.0, %v1036
        %v1038 = vpop.f32.mrb[0].mxu0
        %v1039 = vpop.f32.mrb[0].mxu0
        %v1040 = vadd.f32 0.0, %v1039
        %v1041 = vpop.f32.mrb[0].mxu0
        %1042 = vmatprep.mubr.bf16.mxu0 0
        %1043 = vmatmul.mubr.bf16.gmra.mrb[0].mxu0 %v701
        %v1044 = vpop.f32.mrb[0].mxu0
        %v1045 = vadd.f32 0.0, %v1044
        %v1046 = vpop.f32.mrb[0].mxu0
        %v1047 = vpop.f32.mrb[0].mxu0
        %v1048 = vadd.f32 0.0, %v1047
        %v1049 = vpop.f32.mrb[0].mxu0
        %1050 = vmatprep.mubr.bf16.mxu0 0
        %1051 = vmatmul.mubr.bf16.gmra.mrb[0].mxu0 %v702
        %v1052 = vpop.f32.mrb[0].mxu0
        %v1053 = vadd.f32 0.0, %v1052
        %v1054 = vpop.f32.mrb[0].mxu0
        %v1055 = vpop.f32.mrb[0].mxu0
        %v1056 = vadd.f32 0.0, %v1055
        %v1057 = vpop.f32.mrb[0].mxu0
        %1058 = vmatprep.mubr.bf16.mxu0 0
        %1059 = vmatmul.mubr.bf16.gmra.mrb[0].mxu0 %v703
        %v1060 = vpop.f32.mrb[0].mxu0
        %v1061 = vadd.f32 0.0, %v1060
        %v1062 = vpop.f32.mrb[0].mxu0
        %v1063 = vpop.f32.mrb[0].mxu0
        %v1064 = vadd.f32 0.0, %v1063
        %v1065 = vpop.f32.mrb[0].mxu0
        %1066 = vmatprep.mubr.bf16.mxu0 0
        %1067 = vmatmul.mubr.bf16.gmra.mrb[0].mxu0 %v704
        %v1068 = vpop.f32.mrb[0].mxu0
        %v1069 = vadd.f32 0.0, %v1068
        %v1070 = vpop.f32.mrb[0].mxu0
        %v1071 = vpop.f32.mrb[0].mxu0
        %v1072 = vadd.f32 0.0, %v1071
        %v1073 = vpop.f32.mrb[0].mxu0
        %1074 = vdwg.mxu0
        %v1075 = vld [vmem:[%s1] sm:$0xff]
        %v1076 = vld [vmem:[%s1 + $0x8] sm:$0xff]
        %v1077 = vld [vmem:[%s1 + $0x10] sm:$0xff]
        %v1078 = vld [vmem:[%s1 + $0x18] sm:$0xff]
        %v1079 = vld [vmem:[%s1 + $0x20] sm:$0xff]
        %v1080 = vld [vmem:[%s1 + $0x28] sm:$0xff]
        %v1081 = vld [vmem:[%s1 + $0x30] sm:$0xff]
        %v1082 = vld [vmem:[%s1 + $0x38] sm:$0xff]
        %v1083 = vld [vmem:[%s1 + $0x40] sm:$0xff]
        %v1084 = vld [vmem:[%s1 + $0x48] sm:$0xff]
        %v1085 = vld [vmem:[%s1 + $0x50] sm:$0xff]
        %v1086 = vld [vmem:[%s1 + $0x58] sm:$0xff]
        %v1087 = vld [vmem:[%s1 + $0x60] sm:$0xff]
        %v1088 = vld [vmem:[%s1 + $0x68] sm:$0xff]
        %v1089 = vld [vmem:[%s1 + $0x70] sm:$0xff]
        %v1090 = vld [vmem:[%s1 + $0x78] sm:$0xff]
        %v1091 = vld [vmem:[%s2] sm:$0xff]
        %v1092 = vld [vmem:[%s2 + $0x8] sm:$0xff]
        %v1093 = vld [vmem:[%s2 + $0x10] sm:$0xff]
        %v1094 = vld [vmem:[%s2 + $0x18] sm:$0xff]
        %v1095 = vld [vmem:[%s2 + $0x20] sm:$0xff]
        %v1096 = vld [vmem:[%s2 + $0x28] sm:$0xff]
        %v1097 = vld [vmem:[%s2 + $0x30] sm:$0xff]
        %v1098 = vld [vmem:[%s2 + $0x38] sm:$0xff]
        %v1099 = vld [vmem:[%s2 + $0x40] sm:$0xff]
        %v1100 = vld [vmem:[%s2 + $0x48] sm:$0xff]
        %v1101 = vld [vmem:[%s2 + $0x50] sm:$0xff]
        %v1102 = vld [vmem:[%s2 + $0x58] sm:$0xff]
        %v1103 = vld [vmem:[%s2 + $0x60] sm:$0xff]
        %v1104 = vld [vmem:[%s2 + $0x68] sm:$0xff]
        %v1105 = vld [vmem:[%s2 + $0x70] sm:$0xff]
        %v1106 = vld [vmem:[%s2 + $0x78] sm:$0xff]
        %v1107 = vld [vmem:[%s3] sm:$0xff]
        %v1108 = vld [vmem:[%s3 + $0x8] sm:$0xff]
        %v1109 = vld [vmem:[%s3 + $0x10] sm:$0xff]
        %v1110 = vld [vmem:[%s3 + $0x18] sm:$0xff]
        %v1111 = vld [vmem:[%s3 + $0x20] sm:$0xff]
        %v1112 = vld [vmem:[%s3 + $0x28] sm:$0xff]
        %v1113 = vld [vmem:[%s3 + $0x30] sm:$0xff]
        %v1114 = vld [vmem:[%s3 + $0x38] sm:$0xff]
        %v1115 = vld [vmem:[%s3 + $0x40] sm:$0xff]
        %v1116 = vld [vmem:[%s3 + $0x48] sm:$0xff]
        %v1117 = vld [vmem:[%s3 + $0x50] sm:$0xff]
        %v1118 = vld [vmem:[%s3 + $0x58] sm:$0xff]
        %v1119 = vld [vmem:[%s3 + $0x60] sm:$0xff]
        %v1120 = vld [vmem:[%s3 + $0x68] sm:$0xff]
        %v1121 = vld [vmem:[%s3 + $0x70] sm:$0xff]
        %v1122 = vld [vmem:[%s3 + $0x78] sm:$0xff]
        %v1123 = vmul.f32 %v900, %v1075
        %v1124 = vmul.f32 %v904, %v1076
        %v1125 = vmul.f32 %v910, %v1077
        %v1126 = vmul.f32 %v914, %v1078
        %v1127 = vmul.f32 %v920, %v1079
        %v1128 = vmul.f32 %v924, %v1080
        %v1129 = vmul.f32 %v930, %v1081
        %v1130 = vmul.f32 %v934, %v1082
        %v1131 = vmul.f32 %v940, %v1083
        %v1132 = vmul.f32 %v944, %v1084
        %v1133 = vmul.f32 %v950, %v1085
        %v1134 = vmul.f32 %v954, %v1086
        %v1135 = vmul.f32 %v960, %v1087
        %v1136 = vmul.f32 %v964, %v1088
        %v1137 = vmul.f32 %v970, %v1089
        %v1138 = vmul.f32 %v974, %v1090
        %v1139 = vsub.f32 0.0, %v900
        %v1140 = vsub.f32 0.0, %v904
        %v1141 = vsub.f32 0.0, %v910
        %v1142 = vsub.f32 0.0, %v914
        %v1143 = vsub.f32 0.0, %v920
        %v1144 = vsub.f32 0.0, %v924
        %v1145 = vsub.f32 0.0, %v930
        %v1146 = vsub.f32 0.0, %v934
        %v1147 = vsub.f32 0.0, %v940
        %v1148 = vsub.f32 0.0, %v944
        %v1149 = vsub.f32 0.0, %v950
        %v1150 = vsub.f32 0.0, %v954
        %v1151 = vsub.f32 0.0, %v960
        %v1152 = vsub.f32 0.0, %v964
        %v1153 = vsub.f32 0.0, %v970
        %v1154 = vsub.f32 0.0, %v974
        %1171 = vrot.lane.b32.xlu0 %v1139, 112
        %v1172 = vpop.permute.xlu0 %1171
        %1173 = vrot.lane.b32.xlu0 %v1140, 112
        %v1174 = vpop.permute.xlu0 %1173
        %1175 = vrot.lane.b32.xlu0 %v1141, 112
        %v1176 = vpop.permute.xlu0 %1175
        %1177 = vrot.lane.b32.xlu0 %v1142, 112
        %v1178 = vpop.permute.xlu0 %1177
        %1179 = vrot.lane.b32.xlu0 %v1143, 112
        %v1180 = vpop.permute.xlu0 %1179
        %1181 = vrot.lane.b32.xlu0 %v1144, 112
        %v1182 = vpop.permute.xlu0 %1181
        %1183 = vrot.lane.b32.xlu0 %v1145, 112
        %v1184 = vpop.permute.xlu0 %1183
        %1185 = vrot.lane.b32.xlu0 %v1146, 112
        %v1186 = vpop.permute.xlu0 %1185
        %1187 = vrot.lane.b32.xlu0 %v1147, 112
        %v1188 = vpop.permute.xlu0 %1187
        %1189 = vrot.lane.b32.xlu0 %v1148, 112
        %v1190 = vpop.permute.xlu0 %1189
        %1191 = vrot.lane.b32.xlu0 %v1149, 112
        %v1192 = vpop.permute.xlu0 %1191
        %1193 = vrot.lane.b32.xlu0 %v1150, 112
        %v1194 = vpop.permute.xlu0 %1193
        %1195 = vrot.lane.b32.xlu0 %v1151, 112
        %v1196 = vpop.permute.xlu0 %1195
        %1197 = vrot.lane.b32.xlu0 %v1152, 112
        %v1198 = vpop.permute.xlu0 %1197
        %1199 = vrot.lane.b32.xlu0 %v1153, 112
        %v1200 = vpop.permute.xlu0 %1199
        %1201 = vrot.lane.b32.xlu0 %v1154, 112
        %v1202 = vpop.permute.xlu0 %1201
        %1235 = vrot.lane.b32.xlu0 %v900, 16
        %v1236 = vpop.permute.xlu0 %1235
        %1237 = vrot.lane.b32.xlu0 %v904, 16
        %v1238 = vpop.permute.xlu0 %1237
        %1239 = vrot.lane.b32.xlu0 %v910, 16
        %v1240 = vpop.permute.xlu0 %1239
        %1241 = vrot.lane.b32.xlu0 %v914, 16
        %v1242 = vpop.permute.xlu0 %1241
        %1243 = vrot.lane.b32.xlu0 %v920, 16
        %v1244 = vpop.permute.xlu0 %1243
        %1245 = vrot.lane.b32.xlu0 %v924, 16
        %v1246 = vpop.permute.xlu0 %1245
        %1247 = vrot.lane.b32.xlu0 %v930, 16
        %v1248 = vpop.permute.xlu0 %1247
        %1249 = vrot.lane.b32.xlu0 %v934, 16
        %v1250 = vpop.permute.xlu0 %1249
        %1251 = vrot.lane.b32.xlu0 %v940, 16
        %v1252 = vpop.permute.xlu0 %1251
        %1253 = vrot.lane.b32.xlu0 %v944, 16
        %v1254 = vpop.permute.xlu0 %1253
        %1255 = vrot.lane.b32.xlu0 %v950, 16
        %v1256 = vpop.permute.xlu0 %1255
        %1257 = vrot.lane.b32.xlu0 %v954, 16
        %v1258 = vpop.permute.xlu0 %1257
        %1259 = vrot.lane.b32.xlu0 %v960, 16
        %v1260 = vpop.permute.xlu0 %1259
        %1261 = vrot.lane.b32.xlu0 %v964, 16
        %v1262 = vpop.permute.xlu0 %1261
        %1263 = vrot.lane.b32.xlu0 %v970, 16
        %v1264 = vpop.permute.xlu0 %1263
        %1265 = vrot.lane.b32.xlu0 %v974, 16
        %v1266 = vpop.permute.xlu0 %1265
        %vm1283 = vcmask 130048
        %v1284 = vsel %vm1283, %v1172, %v1236
        %v1285 = vsel %vm1283, %v1174, %v1238
        %v1286 = vsel %vm1283, %v1176, %v1240
        %v1287 = vsel %vm1283, %v1178, %v1242
        %v1288 = vsel %vm1283, %v1180, %v1244
        %v1289 = vsel %vm1283, %v1182, %v1246
        %v1290 = vsel %vm1283, %v1184, %v1248
        %v1291 = vsel %vm1283, %v1186, %v1250
        %v1292 = vsel %vm1283, %v1188, %v1252
        %v1293 = vsel %vm1283, %v1190, %v1254
        %v1294 = vsel %vm1283, %v1192, %v1256
        %v1295 = vsel %vm1283, %v1194, %v1258
        %v1296 = vsel %vm1283, %v1196, %v1260
        %v1297 = vsel %vm1283, %v1198, %v1262
        %v1298 = vsel %vm1283, %v1200, %v1264
        %v1299 = vsel %vm1283, %v1202, %v1266
        %v1300 = vmul.f32 %v1284, %v1091
        %v1301 = vmul.f32 %v1285, %v1092
        %v1302 = vmul.f32 %v1286, %v1093
        %v1303 = vmul.f32 %v1287, %v1094
        %v1304 = vmul.f32 %v1288, %v1095
        %v1305 = vmul.f32 %v1289, %v1096
        %v1306 = vmul.f32 %v1290, %v1097
        %v1307 = vmul.f32 %v1291, %v1098
        %v1308 = vmul.f32 %v1292, %v1099
        %v1309 = vmul.f32 %v1293, %v1100
        %v1310 = vmul.f32 %v1294, %v1101
        %v1311 = vmul.f32 %v1295, %v1102
        %v1312 = vmul.f32 %v1296, %v1103
        %v1313 = vmul.f32 %v1297, %v1104
        %v1314 = vmul.f32 %v1298, %v1105
        %v1315 = vmul.f32 %v1299, %v1106
        %v1316 = vadd.f32 %v1123, %v1300
        %v1317 = vadd.f32 %v1124, %v1301
        %v1318 = vadd.f32 %v1125, %v1302
        %v1319 = vadd.f32 %v1126, %v1303
        %v1320 = vadd.f32 %v1127, %v1304
        %v1321 = vadd.f32 %v1128, %v1305
        %v1322 = vadd.f32 %v1129, %v1306
        %v1323 = vadd.f32 %v1130, %v1307
        %v1324 = vadd.f32 %v1131, %v1308
        %v1325 = vadd.f32 %v1132, %v1309
        %v1326 = vadd.f32 %v1133, %v1310
        %v1327 = vadd.f32 %v1134, %v1311
        %v1328 = vadd.f32 %v1135, %v1312
        %v1329 = vadd.f32 %v1136, %v1313
        %v1330 = vadd.f32 %v1137, %v1314
        %v1331 = vadd.f32 %v1138, %v1315
        %v1332 = vmul.f32 %v902, %v1075
        %v1333 = vmul.f32 %v906, %v1076
        %v1334 = vmul.f32 %v912, %v1077
        %v1335 = vmul.f32 %v916, %v1078
        %v1336 = vmul.f32 %v922, %v1079
        %v1337 = vmul.f32 %v926, %v1080
        %v1338 = vmul.f32 %v932, %v1081
        %v1339 = vmul.f32 %v936, %v1082
        %v1340 = vmul.f32 %v942, %v1083
        %v1341 = vmul.f32 %v946, %v1084
        %v1342 = vmul.f32 %v952, %v1085
        %v1343 = vmul.f32 %v956, %v1086
        %v1344 = vmul.f32 %v962, %v1087
        %v1345 = vmul.f32 %v966, %v1088
        %v1346 = vmul.f32 %v972, %v1089
        %v1347 = vmul.f32 %v976, %v1090
        %v1348 = vsub.f32 0.0, %v902
        %v1349 = vsub.f32 0.0, %v906
        %v1350 = vsub.f32 0.0, %v912
        %v1351 = vsub.f32 0.0, %v916
        %v1352 = vsub.f32 0.0, %v922
        %v1353 = vsub.f32 0.0, %v926
        %v1354 = vsub.f32 0.0, %v932
        %v1355 = vsub.f32 0.0, %v936
        %v1356 = vsub.f32 0.0, %v942
        %v1357 = vsub.f32 0.0, %v946
        %v1358 = vsub.f32 0.0, %v952
        %v1359 = vsub.f32 0.0, %v956
        %v1360 = vsub.f32 0.0, %v962
        %v1361 = vsub.f32 0.0, %v966
        %v1362 = vsub.f32 0.0, %v972
        %v1363 = vsub.f32 0.0, %v976
        %1380 = vrot.lane.b32.xlu0 %v1348, 112
        %v1381 = vpop.permute.xlu0 %1380
        %1382 = vrot.lane.b32.xlu0 %v1349, 112
        %v1383 = vpop.permute.xlu0 %1382
        %1384 = vrot.lane.b32.xlu0 %v1350, 112
        %v1385 = vpop.permute.xlu0 %1384
        %1386 = vrot.lane.b32.xlu0 %v1351, 112
        %v1387 = vpop.permute.xlu0 %1386
        %1388 = vrot.lane.b32.xlu0 %v1352, 112
        %v1389 = vpop.permute.xlu0 %1388
        %1390 = vrot.lane.b32.xlu0 %v1353, 112
        %v1391 = vpop.permute.xlu0 %1390
        %1392 = vrot.lane.b32.xlu0 %v1354, 112
        %v1393 = vpop.permute.xlu0 %1392
        %1394 = vrot.lane.b32.xlu0 %v1355, 112
        %v1395 = vpop.permute.xlu0 %1394
        %1396 = vrot.lane.b32.xlu0 %v1356, 112
        %v1397 = vpop.permute.xlu0 %1396
        %1398 = vrot.lane.b32.xlu0 %v1357, 112
        %v1399 = vpop.permute.xlu0 %1398
        %1400 = vrot.lane.b32.xlu0 %v1358, 112
        %v1401 = vpop.permute.xlu0 %1400
        %1402 = vrot.lane.b32.xlu0 %v1359, 112
        %v1403 = vpop.permute.xlu0 %1402
        %1404 = vrot.lane.b32.xlu0 %v1360, 112
        %v1405 = vpop.permute.xlu0 %1404
        %1406 = vrot.lane.b32.xlu0 %v1361, 112
        %v1407 = vpop.permute.xlu0 %1406
        %1408 = vrot.lane.b32.xlu0 %v1362, 112
        %v1409 = vpop.permute.xlu0 %1408
        %1410 = vrot.lane.b32.xlu0 %v1363, 112
        %v1411 = vpop.permute.xlu0 %1410
        %1444 = vrot.lane.b32.xlu0 %v902, 16
        %v1445 = vpop.permute.xlu0 %1444
        %1446 = vrot.lane.b32.xlu0 %v906, 16
        %v1447 = vpop.permute.xlu0 %1446
        %1448 = vrot.lane.b32.xlu0 %v912, 16
        %v1449 = vpop.permute.xlu0 %1448
        %1450 = vrot.lane.b32.xlu0 %v916, 16
        %v1451 = vpop.permute.xlu0 %1450
        %1452 = vrot.lane.b32.xlu0 %v922, 16
        %v1453 = vpop.permute.xlu0 %1452
        %1454 = vrot.lane.b32.xlu0 %v926, 16
        %v1455 = vpop.permute.xlu0 %1454
        %1456 = vrot.lane.b32.xlu0 %v932, 16
        %v1457 = vpop.permute.xlu0 %1456
        %1458 = vrot.lane.b32.xlu0 %v936, 16
        %v1459 = vpop.permute.xlu0 %1458
        %1460 = vrot.lane.b32.xlu0 %v942, 16
        %v1461 = vpop.permute.xlu0 %1460
        %1462 = vrot.lane.b32.xlu0 %v946, 16
        %v1463 = vpop.permute.xlu0 %1462
        %1464 = vrot.lane.b32.xlu0 %v952, 16
        %v1465 = vpop.permute.xlu0 %1464
        %1466 = vrot.lane.b32.xlu0 %v956, 16
        %v1467 = vpop.permute.xlu0 %1466
        %1468 = vrot.lane.b32.xlu0 %v962, 16
        %v1469 = vpop.permute.xlu0 %1468
        %1470 = vrot.lane.b32.xlu0 %v966, 16
        %v1471 = vpop.permute.xlu0 %1470
        %1472 = vrot.lane.b32.xlu0 %v972, 16
        %v1473 = vpop.permute.xlu0 %1472
        %1474 = vrot.lane.b32.xlu0 %v976, 16
        %v1475 = vpop.permute.xlu0 %1474
        %v1492 = vsel %vm1283, %v1381, %v1445
        %v1493 = vsel %vm1283, %v1383, %v1447
        %v1494 = vsel %vm1283, %v1385, %v1449
        %v1495 = vsel %vm1283, %v1387, %v1451
        %v1496 = vsel %vm1283, %v1389, %v1453
        %v1497 = vsel %vm1283, %v1391, %v1455
        %v1498 = vsel %vm1283, %v1393, %v1457
        %v1499 = vsel %vm1283, %v1395, %v1459
        %v1500 = vsel %vm1283, %v1397, %v1461
        %v1501 = vsel %vm1283, %v1399, %v1463
        %v1502 = vsel %vm1283, %v1401, %v1465
        %v1503 = vsel %vm1283, %v1403, %v1467
        %v1504 = vsel %vm1283, %v1405, %v1469
        %v1505 = vsel %vm1283, %v1407, %v1471
        %v1506 = vsel %vm1283, %v1409, %v1473
        %v1507 = vsel %vm1283, %v1411, %v1475
        %v1508 = vmul.f32 %v1492, %v1091
        %v1509 = vmul.f32 %v1493, %v1092
        %v1510 = vmul.f32 %v1494, %v1093
        %v1511 = vmul.f32 %v1495, %v1094
        %v1512 = vmul.f32 %v1496, %v1095
        %v1513 = vmul.f32 %v1497, %v1096
        %v1514 = vmul.f32 %v1498, %v1097
        %v1515 = vmul.f32 %v1499, %v1098
        %v1516 = vmul.f32 %v1500, %v1099
        %v1517 = vmul.f32 %v1501, %v1100
        %v1518 = vmul.f32 %v1502, %v1101
        %v1519 = vmul.f32 %v1503, %v1102
        %v1520 = vmul.f32 %v1504, %v1103
        %v1521 = vmul.f32 %v1505, %v1104
        %v1522 = vmul.f32 %v1506, %v1105
        %v1523 = vmul.f32 %v1507, %v1106
        %v1524 = vadd.f32 %v1332, %v1508
        %v1525 = vadd.f32 %v1333, %v1509
        %v1526 = vadd.f32 %v1334, %v1510
        %v1527 = vadd.f32 %v1335, %v1511
        %v1528 = vadd.f32 %v1336, %v1512
        %v1529 = vadd.f32 %v1337, %v1513
        %v1530 = vadd.f32 %v1338, %v1514
        %v1531 = vadd.f32 %v1339, %v1515
        %v1532 = vadd.f32 %v1340, %v1516
        %v1533 = vadd.f32 %v1341, %v1517
        %v1534 = vadd.f32 %v1342, %v1518
        %v1535 = vadd.f32 %v1343, %v1519
        %v1536 = vadd.f32 %v1344, %v1520
        %v1537 = vadd.f32 %v1345, %v1521
        %v1538 = vadd.f32 %v1346, %v1522
        %v1539 = vadd.f32 %v1347, %v1523
        %v1540 = vmul.f32 %v1316, 0.17677669
        %v1541 = vmul.f32 %v1317, 0.17677669
        %v1542 = vmul.f32 %v1318, 0.17677669
        %v1543 = vmul.f32 %v1319, 0.17677669
        %v1544 = vmul.f32 %v1320, 0.17677669
        %v1545 = vmul.f32 %v1321, 0.17677669
        %v1546 = vmul.f32 %v1322, 0.17677669
        %v1547 = vmul.f32 %v1323, 0.17677669
        %v1548 = vmul.f32 %v1324, 0.17677669
        %v1549 = vmul.f32 %v1325, 0.17677669
        %v1550 = vmul.f32 %v1326, 0.17677669
        %v1551 = vmul.f32 %v1327, 0.17677669
        %v1552 = vmul.f32 %v1328, 0.17677669
        %v1553 = vmul.f32 %v1329, 0.17677669
        %v1554 = vmul.f32 %v1330, 0.17677669
        %v1555 = vmul.f32 %v1331, 0.17677669
        %v1556 = vpack.c.bf16 %v1541, %v1540
        %v1557 = vpack.c.bf16 %v1543, %v1542
        %v1558 = vpack.c.bf16 %v1545, %v1544
        %v1559 = vpack.c.bf16 %v1547, %v1546
        %v1560 = vpack.c.bf16 %v1549, %v1548
        %v1561 = vpack.c.bf16 %v1551, %v1550
        %v1562 = vpack.c.bf16 %v1553, %v1552
        %v1563 = vpack.c.bf16 %v1555, %v1554
        %v1564 = vpack.c.bf16 %v1525, %v1524
        %v1565 = vpack.c.bf16 %v1527, %v1526
        %v1566 = vpack.c.bf16 %v1529, %v1528
        %v1567 = vpack.c.bf16 %v1531, %v1530
        %v1568 = vpack.c.bf16 %v1533, %v1532
        %v1569 = vpack.c.bf16 %v1535, %v1534
        %v1570 = vpack.c.bf16 %v1537, %v1536
        %v1571 = vpack.c.bf16 %v1539, %v1538
        %vm1572 = vcmask 261120
        %v1574 = vsel %vm1572, %v1556, 0
        %v1577 = vsel %vm1572, %v1557, 0
        %v1580 = vsel %vm1572, %v1558, 0
        %v1583 = vsel %vm1572, %v1559, 0
        %v1586 = vsel %vm1572, %v1560, 0
        %v1589 = vsel %vm1572, %v1561, 0
        %v1592 = vsel %vm1572, %v1562, 0
        %v1595 = vsel %vm1572, %v1563, 0
        %v1598 = vsel %vm1572, %v1564, 0
        %v1601 = vsel %vm1572, %v1565, 0
        %v1604 = vsel %vm1572, %v1566, 0
        %v1607 = vsel %vm1572, %v1567, 0
        %v1610 = vsel %vm1572, %v1568, 0
        %v1613 = vsel %vm1572, %v1569, 0
        %v1616 = vsel %vm1572, %v1570, 0
        %v1619 = vsel %vm1572, %v1571, 0
        %1621 = vmatprep.subr.bf16.mxu0 0
        %1622 = vmatpush1.bf16.xpose.msra.mxu0 %v1598
        %1623 = vmatprep.subr.bf16.mxu0 0
        %1624 = vmatpush1.bf16.xpose.msra.mxu0 %v1601
        %1625 = vmatprep.subr.bf16.mxu0 0
        %1626 = vmatpush1.bf16.xpose.msra.mxu0 %v1604
        %1627 = vmatprep.subr.bf16.mxu0 0
        %1628 = vmatpush1.bf16.xpose.msra.mxu0 %v1607
        %1629 = vmatprep.subr.bf16.mxu0 0
        %1630 = vmatpush1.bf16.xpose.msra.mxu0 %v1610
        %1631 = vmatprep.subr.bf16.mxu0 0
        %1632 = vmatpush1.bf16.xpose.msra.mxu0 %v1613
        %1633 = vmatprep.subr.bf16.mxu0 0
        %1634 = vmatpush1.bf16.xpose.msra.mxu0 %v1616
        %1635 = vmatprep.subr.bf16.mxu0 0
        %1636 = vmatpush1.bf16.xpose.msra.mxu0 %v1619
        %1637 = vmatprep.subr.bf16.mxu0 0
        %1638 = vmatpush1.bf16.xpose.msra.mxu0 0
        %1639 = vmatprep.subr.bf16.mxu0 0
        %1640 = vmatpush1.bf16.xpose.msra.mxu0 0
        %1641 = vmatprep.subr.bf16.mxu0 0
        %1642 = vmatpush1.bf16.xpose.msra.mxu0 0
        %1643 = vmatprep.subr.bf16.mxu0 0
        %1644 = vmatpush1.bf16.xpose.msra.mxu0 0
        %1645 = vmatprep.subr.bf16.mxu0 0
        %1646 = vmatpush1.bf16.xpose.msra.mxu0 0
        %1647 = vmatprep.subr.bf16.mxu0 0
        %1648 = vmatpush1.bf16.xpose.msra.mxu0 0
        %1649 = vmatprep.subr.bf16.mxu0 0
        %1650 = vmatpush1.bf16.xpose.msra.mxu0 0
        %1651 = vmatprep.subr.bf16.mxu0 0
        %1652 = vmatpush1.bf16.xpose.msra.mxu0 0
        %1653 = vmatprep.mubr.bf16.mxu0 0
        %1654 = vmatmul.mubr.bf16.gmra.mrb[0].mxu0 %v1574
        %v1655 = vpop.f32.mrb[0].mxu0
        %v1656 = vadd.f32 %v1107, %v1655
        %v1657 = vpop.f32.mrb[0].mxu0
        %v1658 = vpop.f32.mrb[0].mxu0
        %v1659 = vadd.f32 %v1108, %v1658
        %v1660 = vpop.f32.mrb[0].mxu0
        %1661 = vmatprep.mubr.bf16.mxu0 0
        %1662 = vmatmul.mubr.bf16.gmra.mrb[0].mxu0 %v1577
        %v1663 = vpop.f32.mrb[0].mxu0
        %v1664 = vadd.f32 %v1109, %v1663
        %v1665 = vpop.f32.mrb[0].mxu0
        %v1666 = vpop.f32.mrb[0].mxu0
        %v1667 = vadd.f32 %v1110, %v1666
        %v1668 = vpop.f32.mrb[0].mxu0
        %1669 = vmatprep.mubr.bf16.mxu0 0
        %1670 = vmatmul.mubr.bf16.gmra.mrb[0].mxu0 %v1580
        %v1671 = vpop.f32.mrb[0].mxu0
        %v1672 = vadd.f32 %v1111, %v1671
        %v1673 = vpop.f32.mrb[0].mxu0
        %v1674 = vpop.f32.mrb[0].mxu0
        %v1675 = vadd.f32 %v1112, %v1674
        %v1676 = vpop.f32.mrb[0].mxu0
        %1677 = vmatprep.mubr.bf16.mxu0 0
        %1678 = vmatmul.mubr.bf16.gmra.mrb[0].mxu0 %v1583
        %v1679 = vpop.f32.mrb[0].mxu0
        %v1680 = vadd.f32 %v1113, %v1679
        %v1681 = vpop.f32.mrb[0].mxu0
        %v1682 = vpop.f32.mrb[0].mxu0
        %v1683 = vadd.f32 %v1114, %v1682
        %v1684 = vpop.f32.mrb[0].mxu0
        %1685 = vmatprep.mubr.bf16.mxu0 0
        %1686 = vmatmul.mubr.bf16.gmra.mrb[0].mxu0 %v1586
        %v1687 = vpop.f32.mrb[0].mxu0
        %v1688 = vadd.f32 %v1115, %v1687
        %v1689 = vpop.f32.mrb[0].mxu0
        %v1690 = vpop.f32.mrb[0].mxu0
        %v1691 = vadd.f32 %v1116, %v1690
        %v1692 = vpop.f32.mrb[0].mxu0
        %1693 = vmatprep.mubr.bf16.mxu0 0
        %1694 = vmatmul.mubr.bf16.gmra.mrb[0].mxu0 %v1589
        %v1695 = vpop.f32.mrb[0].mxu0
        %v1696 = vadd.f32 %v1117, %v1695
        %v1697 = vpop.f32.mrb[0].mxu0
        %v1698 = vpop.f32.mrb[0].mxu0
        %v1699 = vadd.f32 %v1118, %v1698
        %v1700 = vpop.f32.mrb[0].mxu0
        %1701 = vmatprep.mubr.bf16.mxu0 0
        %1702 = vmatmul.mubr.bf16.gmra.mrb[0].mxu0 %v1592
        %v1703 = vpop.f32.mrb[0].mxu0
        %v1704 = vadd.f32 %v1119, %v1703
        %v1705 = vpop.f32.mrb[0].mxu0
        %v1706 = vpop.f32.mrb[0].mxu0
        %v1707 = vadd.f32 %v1120, %v1706
        %v1708 = vpop.f32.mrb[0].mxu0
        %1709 = vmatprep.mubr.bf16.mxu0 0
        %1710 = vmatmul.mubr.bf16.gmra.mrb[0].mxu0 %v1595
        %v1711 = vpop.f32.mrb[0].mxu0
        %v1712 = vadd.f32 %v1121, %v1711
        %v1713 = vpop.f32.mrb[0].mxu0
        %v1714 = vpop.f32.mrb[0].mxu0
        %v1715 = vadd.f32 %v1122, %v1714
        %v1716 = vpop.f32.mrb[0].mxu0
        %1717 = vdwg.mxu0
        %1718 = vmax.xlane.f32.xlu0 %v1656
        %v1719 = vpop.xlane.xlu0 %1718
        %1720 = vmax.xlane.f32.xlu0 %v1659
        %v1721 = vpop.xlane.xlu0 %1720
        %1722 = vmax.xlane.f32.xlu0 %v1664
        %v1723 = vpop.xlane.xlu0 %1722
        %1724 = vmax.xlane.f32.xlu0 %v1667
        %v1725 = vpop.xlane.xlu0 %1724
        %1726 = vmax.xlane.f32.xlu0 %v1672
        %v1727 = vpop.xlane.xlu0 %1726
        %1728 = vmax.xlane.f32.xlu0 %v1675
        %v1729 = vpop.xlane.xlu0 %1728
        %1730 = vmax.xlane.f32.xlu0 %v1680
        %v1731 = vpop.xlane.xlu0 %1730
        %1732 = vmax.xlane.f32.xlu0 %v1683
        %v1733 = vpop.xlane.xlu0 %1732
        %1734 = vmax.xlane.f32.xlu0 %v1688
        %v1735 = vpop.xlane.xlu0 %1734
        %1736 = vmax.xlane.f32.xlu0 %v1691
        %v1737 = vpop.xlane.xlu0 %1736
        %1738 = vmax.xlane.f32.xlu0 %v1696
        %v1739 = vpop.xlane.xlu0 %1738
        %1740 = vmax.xlane.f32.xlu0 %v1699
        %v1741 = vpop.xlane.xlu0 %1740
        %1742 = vmax.xlane.f32.xlu0 %v1704
        %v1743 = vpop.xlane.xlu0 %1742
        %1744 = vmax.xlane.f32.xlu0 %v1707
        %v1745 = vpop.xlane.xlu0 %1744
        %1746 = vmax.xlane.f32.xlu0 %v1712
        %v1747 = vpop.xlane.xlu0 %1746
        %1748 = vmax.xlane.f32.xlu0 %v1715
        %v1749 = vpop.xlane.xlu0 %1748
        %v1750 = vsub.f32 %v1656, %v1719
        %v1751 = vsub.f32 %v1659, %v1721
        %v1752 = vsub.f32 %v1664, %v1723
        %v1753 = vsub.f32 %v1667, %v1725
        %v1754 = vsub.f32 %v1672, %v1727
        %v1755 = vsub.f32 %v1675, %v1729
        %v1756 = vsub.f32 %v1680, %v1731
        %v1757 = vsub.f32 %v1683, %v1733
        %v1758 = vsub.f32 %v1688, %v1735
        %v1759 = vsub.f32 %v1691, %v1737
        %v1760 = vsub.f32 %v1696, %v1739
        %v1761 = vsub.f32 %v1699, %v1741
        %v1762 = vsub.f32 %v1704, %v1743
        %v1763 = vsub.f32 %v1707, %v1745
        %v1764 = vsub.f32 %v1712, %v1747
        %v1765 = vsub.f32 %v1715, %v1749
        %v1766 = vmul.f32 %v1750, 1.442695
        %v1767 = vpow.pop %v1766
        %v1768 = vmul.f32 %v1751, 1.442695
        %v1769 = vpow.pop %v1768
        %v1770 = vmul.f32 %v1752, 1.442695
        %v1771 = vpow.pop %v1770
        %v1772 = vmul.f32 %v1753, 1.442695
        %v1773 = vpow.pop %v1772
        %v1774 = vmul.f32 %v1754, 1.442695
        %v1775 = vpow.pop %v1774
        %v1776 = vmul.f32 %v1755, 1.442695
        %v1777 = vpow.pop %v1776
        %v1778 = vmul.f32 %v1756, 1.442695
        %v1779 = vpow.pop %v1778
        %v1780 = vmul.f32 %v1757, 1.442695
        %v1781 = vpow.pop %v1780
        %v1782 = vmul.f32 %v1758, 1.442695
        %v1783 = vpow.pop %v1782
        %v1784 = vmul.f32 %v1759, 1.442695
        %v1785 = vpow.pop %v1784
        %v1786 = vmul.f32 %v1760, 1.442695
        %v1787 = vpow.pop %v1786
        %v1788 = vmul.f32 %v1761, 1.442695
        %v1789 = vpow.pop %v1788
        %v1790 = vmul.f32 %v1762, 1.442695
        %v1791 = vpow.pop %v1790
        %v1792 = vmul.f32 %v1763, 1.442695
        %v1793 = vpow.pop %v1792
        %v1794 = vmul.f32 %v1764, 1.442695
        %v1795 = vpow.pop %v1794
        %v1796 = vmul.f32 %v1765, 1.442695
        %v1797 = vpow.pop %v1796
        %1798 = vadd.xlane.f32.xlu0 %v1767
        %v1799 = vpop.xlane.xlu0 %1798
        %1800 = vadd.xlane.f32.xlu0 %v1769
        %v1801 = vpop.xlane.xlu0 %1800
        %1802 = vadd.xlane.f32.xlu0 %v1771
        %v1803 = vpop.xlane.xlu0 %1802
        %1804 = vadd.xlane.f32.xlu0 %v1773
        %v1805 = vpop.xlane.xlu0 %1804
        %1806 = vadd.xlane.f32.xlu0 %v1775
        %v1807 = vpop.xlane.xlu0 %1806
        %1808 = vadd.xlane.f32.xlu0 %v1777
        %v1809 = vpop.xlane.xlu0 %1808
        %1810 = vadd.xlane.f32.xlu0 %v1779
        %v1811 = vpop.xlane.xlu0 %1810
        %1812 = vadd.xlane.f32.xlu0 %v1781
        %v1813 = vpop.xlane.xlu0 %1812
        %1814 = vadd.xlane.f32.xlu0 %v1783
        %v1815 = vpop.xlane.xlu0 %1814
        %1816 = vadd.xlane.f32.xlu0 %v1785
        %v1817 = vpop.xlane.xlu0 %1816
        %1818 = vadd.xlane.f32.xlu0 %v1787
        %v1819 = vpop.xlane.xlu0 %1818
        %1820 = vadd.xlane.f32.xlu0 %v1789
        %v1821 = vpop.xlane.xlu0 %1820
        %1822 = vadd.xlane.f32.xlu0 %v1791
        %v1823 = vpop.xlane.xlu0 %1822
        %1824 = vadd.xlane.f32.xlu0 %v1793
        %v1825 = vpop.xlane.xlu0 %1824
        %1826 = vadd.xlane.f32.xlu0 %v1795
        %v1827 = vpop.xlane.xlu0 %1826
        %1828 = vadd.xlane.f32.xlu0 %v1797
        %v1829 = vpop.xlane.xlu0 %1828
        %v1830 = vrcp.pop %v1799
        %v1831 = vrcp.pop %v1801
        %v1832 = vrcp.pop %v1803
        %v1833 = vrcp.pop %v1805
        %v1834 = vrcp.pop %v1807
        %v1835 = vrcp.pop %v1809
        %v1836 = vrcp.pop %v1811
        %v1837 = vrcp.pop %v1813
        %v1838 = vrcp.pop %v1815
        %v1839 = vrcp.pop %v1817
        %v1840 = vrcp.pop %v1819
        %v1841 = vrcp.pop %v1821
        %v1842 = vrcp.pop %v1823
        %v1843 = vrcp.pop %v1825
        %v1844 = vrcp.pop %v1827
        %v1845 = vrcp.pop %v1829
        %v1846 = vmul.f32 %v1767, %v1830
        %v1847 = vmul.f32 %v1769, %v1831
        %v1848 = vmul.f32 %v1771, %v1832
        %v1849 = vmul.f32 %v1773, %v1833
        %v1850 = vmul.f32 %v1775, %v1834
        %v1851 = vmul.f32 %v1777, %v1835
        %v1852 = vmul.f32 %v1779, %v1836
        %v1853 = vmul.f32 %v1781, %v1837
        %v1854 = vmul.f32 %v1783, %v1838
        %v1855 = vmul.f32 %v1785, %v1839
        %v1856 = vmul.f32 %v1787, %v1840
        %v1857 = vmul.f32 %v1789, %v1841
        %v1858 = vmul.f32 %v1791, %v1842
        %v1859 = vmul.f32 %v1793, %v1843
        %v1860 = vmul.f32 %v1795, %v1844
        %v1861 = vmul.f32 %v1797, %v1845
        %v1862 = vpack.c.bf16 %v1847, %v1846
        %v1863 = vpack.c.bf16 %v1849, %v1848
        %v1864 = vpack.c.bf16 %v1851, %v1850
        %v1865 = vpack.c.bf16 %v1853, %v1852
        %v1866 = vpack.c.bf16 %v1855, %v1854
        %v1867 = vpack.c.bf16 %v1857, %v1856
        %v1868 = vpack.c.bf16 %v1859, %v1858
        %v1869 = vpack.c.bf16 %v1861, %v1860
        %v1870 = vpack.c.bf16 %v1016, %v1013
        %v1871 = vpack.c.bf16 %v1024, %v1021
        %v1872 = vpack.c.bf16 %v1032, %v1029
        %v1873 = vpack.c.bf16 %v1040, %v1037
        %v1874 = vpack.c.bf16 %v1048, %v1045
        %v1875 = vpack.c.bf16 %v1056, %v1053
        %v1876 = vpack.c.bf16 %v1064, %v1061
        %v1877 = vpack.c.bf16 %v1072, %v1069
        %1878 = vmatprep.subr.bf16.mxu0 0
        %1879 = vmatpush1.bf16.msra.mxu0 %v1870
        %1880 = vmatprep.subr.bf16.mxu0 0
        %1881 = vmatpush1.bf16.msra.mxu0 %v1871
        %1882 = vmatprep.subr.bf16.mxu0 0
        %1883 = vmatpush1.bf16.msra.mxu0 %v1872
        %1884 = vmatprep.subr.bf16.mxu0 0
        %1885 = vmatpush1.bf16.msra.mxu0 %v1873
        %1886 = vmatprep.subr.bf16.mxu0 0
        %1887 = vmatpush1.bf16.msra.mxu0 %v1874
        %1888 = vmatprep.subr.bf16.mxu0 0
        %1889 = vmatpush1.bf16.msra.mxu0 %v1875
        %1890 = vmatprep.subr.bf16.mxu0 0
        %1891 = vmatpush1.bf16.msra.mxu0 %v1876
        %1892 = vmatprep.subr.bf16.mxu0 0
        %1893 = vmatpush1.bf16.msra.mxu0 %v1877
        %1894 = vmatprep.subr.bf16.mxu0 0
        %1895 = vmatpush1.bf16.msra.mxu0 0
        %1896 = vmatprep.subr.bf16.mxu0 0
        %1897 = vmatpush1.bf16.msra.mxu0 0
        %1898 = vmatprep.subr.bf16.mxu0 0
        %1899 = vmatpush1.bf16.msra.mxu0 0
        %1900 = vmatprep.subr.bf16.mxu0 0
        %1901 = vmatpush1.bf16.msra.mxu0 0
        %1902 = vmatprep.subr.bf16.mxu0 0
        %1903 = vmatpush1.bf16.msra.mxu0 0
        %1904 = vmatprep.subr.bf16.mxu0 0
        %1905 = vmatpush1.bf16.msra.mxu0 0
        %1906 = vmatprep.subr.bf16.mxu0 0
        %1907 = vmatpush1.bf16.msra.mxu0 0
        %1908 = vmatprep.subr.bf16.mxu0 0
        %1909 = vmatpush1.bf16.msra.mxu0 0
        %1910 = vmatprep.mubr.bf16.mxu0 0
        %1911 = vmatmul.mubr.bf16.gmra.mrb[0].mxu0 %v1862
        %v1912 = vpop.f32.mrb[0].mxu0
        %v1913 = vadd.f32 0.0, %v1912
        %v1914 = vpop.f32.mrb[0].mxu0
        %v1915 = vpop.f32.mrb[0].mxu0
        %v1916 = vadd.f32 0.0, %v1915
        %v1917 = vpop.f32.mrb[0].mxu0
        %1918 = vmatprep.mubr.bf16.mxu0 0
        %1919 = vmatmul.mubr.bf16.gmra.mrb[0].mxu0 %v1863
        %v1920 = vpop.f32.mrb[0].mxu0
        %v1921 = vadd.f32 0.0, %v1920
        %v1922 = vpop.f32.mrb[0].mxu0
        %v1923 = vpop.f32.mrb[0].mxu0
        %v1924 = vadd.f32 0.0, %v1923
        %v1925 = vpop.f32.mrb[0].mxu0
        %1926 = vmatprep.mubr.bf16.mxu0 0
        %1927 = vmatmul.mubr.bf16.gmra.mrb[0].mxu0 %v1864
        %v1928 = vpop.f32.mrb[0].mxu0
        %v1929 = vadd.f32 0.0, %v1928
        %v1930 = vpop.f32.mrb[0].mxu0
        %v1931 = vpop.f32.mrb[0].mxu0
        %v1932 = vadd.f32 0.0, %v1931
        %v1933 = vpop.f32.mrb[0].mxu0
        %1934 = vmatprep.mubr.bf16.mxu0 0
        %1935 = vmatmul.mubr.bf16.gmra.mrb[0].mxu0 %v1865
        %v1936 = vpop.f32.mrb[0].mxu0
        %v1937 = vadd.f32 0.0, %v1936
        %v1938 = vpop.f32.mrb[0].mxu0
        %v1939 = vpop.f32.mrb[0].mxu0
        %v1940 = vadd.f32 0.0, %v1939
        %v1941 = vpop.f32.mrb[0].mxu0
        %1942 = vmatprep.mubr.bf16.mxu0 0
        %1943 = vmatmul.mubr.bf16.gmra.mrb[0].mxu0 %v1866
        %v1944 = vpop.f32.mrb[0].mxu0
        %v1945 = vadd.f32 0.0, %v1944
        %v1946 = vpop.f32.mrb[0].mxu0
        %v1947 = vpop.f32.mrb[0].mxu0
        %v1948 = vadd.f32 0.0, %v1947
        %v1949 = vpop.f32.mrb[0].mxu0
        %1950 = vmatprep.mubr.bf16.mxu0 0
        %1951 = vmatmul.mubr.bf16.gmra.mrb[0].mxu0 %v1867
        %v1952 = vpop.f32.mrb[0].mxu0
        %v1953 = vadd.f32 0.0, %v1952
        %v1954 = vpop.f32.mrb[0].mxu0
        %v1955 = vpop.f32.mrb[0].mxu0
        %v1956 = vadd.f32 0.0, %v1955
        %v1957 = vpop.f32.mrb[0].mxu0
        %1958 = vmatprep.mubr.bf16.mxu0 0
        %1959 = vmatmul.mubr.bf16.gmra.mrb[0].mxu0 %v1868
        %v1960 = vpop.f32.mrb[0].mxu0
        %v1961 = vadd.f32 0.0, %v1960
        %v1962 = vpop.f32.mrb[0].mxu0
        %v1963 = vpop.f32.mrb[0].mxu0
        %v1964 = vadd.f32 0.0, %v1963
        %v1965 = vpop.f32.mrb[0].mxu0
        %1966 = vmatprep.mubr.bf16.mxu0 0
        %1967 = vmatmul.mubr.bf16.gmra.mrb[0].mxu0 %v1869
        %v1968 = vpop.f32.mrb[0].mxu0
        %v1969 = vadd.f32 0.0, %v1968
        %v1970 = vpop.f32.mrb[0].mxu0
        %v1971 = vpop.f32.mrb[0].mxu0
        %v1972 = vadd.f32 0.0, %v1971
        %v1973 = vpop.f32.mrb[0].mxu0
        %1974 = vdwg.mxu0
        %1991 = vrot.lane.b32.xlu0 %v1075, 32
        %v1992 = vpop.permute.xlu0 %1991
        %1993 = vrot.lane.b32.xlu0 %v1076, 32
        %v1994 = vpop.permute.xlu0 %1993
        %1995 = vrot.lane.b32.xlu0 %v1077, 32
        %v1996 = vpop.permute.xlu0 %1995
        %1997 = vrot.lane.b32.xlu0 %v1078, 32
        %v1998 = vpop.permute.xlu0 %1997
        %1999 = vrot.lane.b32.xlu0 %v1079, 32
        %v2000 = vpop.permute.xlu0 %1999
        %2001 = vrot.lane.b32.xlu0 %v1080, 32
        %v2002 = vpop.permute.xlu0 %2001
        %2003 = vrot.lane.b32.xlu0 %v1081, 32
        %v2004 = vpop.permute.xlu0 %2003
        %2005 = vrot.lane.b32.xlu0 %v1082, 32
        %v2006 = vpop.permute.xlu0 %2005
        %2007 = vrot.lane.b32.xlu0 %v1083, 32
        %v2008 = vpop.permute.xlu0 %2007
        %2009 = vrot.lane.b32.xlu0 %v1084, 32
        %v2010 = vpop.permute.xlu0 %2009
        %2011 = vrot.lane.b32.xlu0 %v1085, 32
        %v2012 = vpop.permute.xlu0 %2011
        %2013 = vrot.lane.b32.xlu0 %v1086, 32
        %v2014 = vpop.permute.xlu0 %2013
        %2015 = vrot.lane.b32.xlu0 %v1087, 32
        %v2016 = vpop.permute.xlu0 %2015
        %2017 = vrot.lane.b32.xlu0 %v1088, 32
        %v2018 = vpop.permute.xlu0 %2017
        %2019 = vrot.lane.b32.xlu0 %v1089, 32
        %v2020 = vpop.permute.xlu0 %2019
        %2021 = vrot.lane.b32.xlu0 %v1090, 32
        %v2022 = vpop.permute.xlu0 %2021
        %v2039 = vmul.f32 %v900, %v1992
        %v2040 = vmul.f32 %v904, %v1994
        %v2041 = vmul.f32 %v910, %v1996
        %v2042 = vmul.f32 %v914, %v1998
        %v2043 = vmul.f32 %v920, %v2000
        %v2044 = vmul.f32 %v924, %v2002
        %v2045 = vmul.f32 %v930, %v2004
        %v2046 = vmul.f32 %v934, %v2006
        %v2047 = vmul.f32 %v940, %v2008
        %v2048 = vmul.f32 %v944, %v2010
        %v2049 = vmul.f32 %v950, %v2012
        %v2050 = vmul.f32 %v954, %v2014
        %v2051 = vmul.f32 %v960, %v2016
        %v2052 = vmul.f32 %v964, %v2018
        %v2053 = vmul.f32 %v970, %v2020
        %v2054 = vmul.f32 %v974, %v2022
        %2055 = vrot.lane.b32.xlu0 %v1139, 80
        %v2056 = vpop.permute.xlu0 %2055
        %2057 = vrot.lane.b32.xlu0 %v1140, 80
        %v2058 = vpop.permute.xlu0 %2057
        %2059 = vrot.lane.b32.xlu0 %v1141, 80
        %v2060 = vpop.permute.xlu0 %2059
        %2061 = vrot.lane.b32.xlu0 %v1142, 80
        %v2062 = vpop.permute.xlu0 %2061
        %2063 = vrot.lane.b32.xlu0 %v1143, 80
        %v2064 = vpop.permute.xlu0 %2063
        %2065 = vrot.lane.b32.xlu0 %v1144, 80
        %v2066 = vpop.permute.xlu0 %2065
        %2067 = vrot.lane.b32.xlu0 %v1145, 80
        %v2068 = vpop.permute.xlu0 %2067
        %2069 = vrot.lane.b32.xlu0 %v1146, 80
        %v2070 = vpop.permute.xlu0 %2069
        %2071 = vrot.lane.b32.xlu0 %v1147, 80
        %v2072 = vpop.permute.xlu0 %2071
        %2073 = vrot.lane.b32.xlu0 %v1148, 80
        %v2074 = vpop.permute.xlu0 %2073
        %2075 = vrot.lane.b32.xlu0 %v1149, 80
        %v2076 = vpop.permute.xlu0 %2075
        %2077 = vrot.lane.b32.xlu0 %v1150, 80
        %v2078 = vpop.permute.xlu0 %2077
        %2079 = vrot.lane.b32.xlu0 %v1151, 80
        %v2080 = vpop.permute.xlu0 %2079
        %2081 = vrot.lane.b32.xlu0 %v1152, 80
        %v2082 = vpop.permute.xlu0 %2081
        %2083 = vrot.lane.b32.xlu0 %v1153, 80
        %v2084 = vpop.permute.xlu0 %2083
        %2085 = vrot.lane.b32.xlu0 %v1154, 80
        %v2086 = vpop.permute.xlu0 %2085
        %2103 = vrot.lane.b32.xlu0 %v900, 112
        %v2104 = vpop.permute.xlu0 %2103
        %2105 = vrot.lane.b32.xlu0 %v904, 112
        %v2106 = vpop.permute.xlu0 %2105
        %2107 = vrot.lane.b32.xlu0 %v910, 112
        %v2108 = vpop.permute.xlu0 %2107
        %2109 = vrot.lane.b32.xlu0 %v914, 112
        %v2110 = vpop.permute.xlu0 %2109
        %2111 = vrot.lane.b32.xlu0 %v920, 112
        %v2112 = vpop.permute.xlu0 %2111
        %2113 = vrot.lane.b32.xlu0 %v924, 112
        %v2114 = vpop.permute.xlu0 %2113
        %2115 = vrot.lane.b32.xlu0 %v930, 112
        %v2116 = vpop.permute.xlu0 %2115
        %2117 = vrot.lane.b32.xlu0 %v934, 112
        %v2118 = vpop.permute.xlu0 %2117
        %2119 = vrot.lane.b32.xlu0 %v940, 112
        %v2120 = vpop.permute.xlu0 %2119
        %2121 = vrot.lane.b32.xlu0 %v944, 112
        %v2122 = vpop.permute.xlu0 %2121
        %2123 = vrot.lane.b32.xlu0 %v950, 112
        %v2124 = vpop.permute.xlu0 %2123
        %2125 = vrot.lane.b32.xlu0 %v954, 112
        %v2126 = vpop.permute.xlu0 %2125
        %2127 = vrot.lane.b32.xlu0 %v960, 112
        %v2128 = vpop.permute.xlu0 %2127
        %2129 = vrot.lane.b32.xlu0 %v964, 112
        %v2130 = vpop.permute.xlu0 %2129
        %2131 = vrot.lane.b32.xlu0 %v970, 112
        %v2132 = vpop.permute.xlu0 %2131
        %2133 = vrot.lane.b32.xlu0 %v974, 112
        %v2134 = vpop.permute.xlu0 %2133
        %v2151 = vsel %vm1283, %v2056, %v2104
        %v2152 = vsel %vm1283, %v2058, %v2106
        %v2153 = vsel %vm1283, %v2060, %v2108
        %v2154 = vsel %vm1283, %v2062, %v2110
        %v2155 = vsel %vm1283, %v2064, %v2112
        %v2156 = vsel %vm1283, %v2066, %v2114
        %v2157 = vsel %vm1283, %v2068, %v2116
        %v2158 = vsel %vm1283, %v2070, %v2118
        %v2159 = vsel %vm1283, %v2072, %v2120
        %v2160 = vsel %vm1283, %v2074, %v2122
        %v2161 = vsel %vm1283, %v2076, %v2124
        %v2162 = vsel %vm1283, %v2078, %v2126
        %v2163 = vsel %vm1283, %v2080, %v2128
        %v2164 = vsel %vm1283, %v2082, %v2130
        %v2165 = vsel %vm1283, %v2084, %v2132
        %v2166 = vsel %vm1283, %v2086, %v2134
        %v2167 = vmul.f32 %v2151, %v1091
        %v2168 = vmul.f32 %v2152, %v1092
        %v2169 = vmul.f32 %v2153, %v1093
        %v2170 = vmul.f32 %v2154, %v1094
        %v2171 = vmul.f32 %v2155, %v1095
        %v2172 = vmul.f32 %v2156, %v1096
        %v2173 = vmul.f32 %v2157, %v1097
        %v2174 = vmul.f32 %v2158, %v1098
        %v2175 = vmul.f32 %v2159, %v1099
        %v2176 = vmul.f32 %v2160, %v1100
        %v2177 = vmul.f32 %v2161, %v1101
        %v2178 = vmul.f32 %v2162, %v1102
        %v2179 = vmul.f32 %v2163, %v1103
        %v2180 = vmul.f32 %v2164, %v1104
        %v2181 = vmul.f32 %v2165, %v1105
        %v2182 = vmul.f32 %v2166, %v1106
        %2199 = vrot.lane.b32.xlu0 %v2167, 32
        %v2200 = vpop.permute.xlu0 %2199
        %2201 = vrot.lane.b32.xlu0 %v2168, 32
        %v2202 = vpop.permute.xlu0 %2201
        %2203 = vrot.lane.b32.xlu0 %v2169, 32
        %v2204 = vpop.permute.xlu0 %2203
        %2205 = vrot.lane.b32.xlu0 %v2170, 32
        %v2206 = vpop.permute.xlu0 %2205
        %2207 = vrot.lane.b32.xlu0 %v2171, 32
        %v2208 = vpop.permute.xlu0 %2207
        %2209 = vrot.lane.b32.xlu0 %v2172, 32
        %v2210 = vpop.permute.xlu0 %2209
        %2211 = vrot.lane.b32.xlu0 %v2173, 32
        %v2212 = vpop.permute.xlu0 %2211
        %2213 = vrot.lane.b32.xlu0 %v2174, 32
        %v2214 = vpop.permute.xlu0 %2213
        %2215 = vrot.lane.b32.xlu0 %v2175, 32
        %v2216 = vpop.permute.xlu0 %2215
        %2217 = vrot.lane.b32.xlu0 %v2176, 32
        %v2218 = vpop.permute.xlu0 %2217
        %2219 = vrot.lane.b32.xlu0 %v2177, 32
        %v2220 = vpop.permute.xlu0 %2219
        %2221 = vrot.lane.b32.xlu0 %v2178, 32
        %v2222 = vpop.permute.xlu0 %2221
        %2223 = vrot.lane.b32.xlu0 %v2179, 32
        %v2224 = vpop.permute.xlu0 %2223
        %2225 = vrot.lane.b32.xlu0 %v2180, 32
        %v2226 = vpop.permute.xlu0 %2225
        %2227 = vrot.lane.b32.xlu0 %v2181, 32
        %v2228 = vpop.permute.xlu0 %2227
        %2229 = vrot.lane.b32.xlu0 %v2182, 32
        %v2230 = vpop.permute.xlu0 %2229
        %v2247 = vadd.f32 %v2039, %v2200
        %v2248 = vadd.f32 %v2040, %v2202
        %v2249 = vadd.f32 %v2041, %v2204
        %v2250 = vadd.f32 %v2042, %v2206
        %v2251 = vadd.f32 %v2043, %v2208
        %v2252 = vadd.f32 %v2044, %v2210
        %v2253 = vadd.f32 %v2045, %v2212
        %v2254 = vadd.f32 %v2046, %v2214
        %v2255 = vadd.f32 %v2047, %v2216
        %v2256 = vadd.f32 %v2048, %v2218
        %v2257 = vadd.f32 %v2049, %v2220
        %v2258 = vadd.f32 %v2050, %v2222
        %v2259 = vadd.f32 %v2051, %v2224
        %v2260 = vadd.f32 %v2052, %v2226
        %v2261 = vadd.f32 %v2053, %v2228
        %v2262 = vadd.f32 %v2054, %v2230
        %v2263 = vmul.f32 %v902, %v1992
        %v2264 = vmul.f32 %v906, %v1994
        %v2265 = vmul.f32 %v912, %v1996
        %v2266 = vmul.f32 %v916, %v1998
        %v2267 = vmul.f32 %v922, %v2000
        %v2268 = vmul.f32 %v926, %v2002
        %v2269 = vmul.f32 %v932, %v2004
        %v2270 = vmul.f32 %v936, %v2006
        %v2271 = vmul.f32 %v942, %v2008
        %v2272 = vmul.f32 %v946, %v2010
        %v2273 = vmul.f32 %v952, %v2012
        %v2274 = vmul.f32 %v956, %v2014
        %v2275 = vmul.f32 %v962, %v2016
        %v2276 = vmul.f32 %v966, %v2018
        %v2277 = vmul.f32 %v972, %v2020
        %v2278 = vmul.f32 %v976, %v2022
        %2279 = vrot.lane.b32.xlu0 %v1348, 80
        %v2280 = vpop.permute.xlu0 %2279
        %2281 = vrot.lane.b32.xlu0 %v1349, 80
        %v2282 = vpop.permute.xlu0 %2281
        %2283 = vrot.lane.b32.xlu0 %v1350, 80
        %v2284 = vpop.permute.xlu0 %2283
        %2285 = vrot.lane.b32.xlu0 %v1351, 80
        %v2286 = vpop.permute.xlu0 %2285
        %2287 = vrot.lane.b32.xlu0 %v1352, 80
        %v2288 = vpop.permute.xlu0 %2287
        %2289 = vrot.lane.b32.xlu0 %v1353, 80
        %v2290 = vpop.permute.xlu0 %2289
        %2291 = vrot.lane.b32.xlu0 %v1354, 80
        %v2292 = vpop.permute.xlu0 %2291
        %2293 = vrot.lane.b32.xlu0 %v1355, 80
        %v2294 = vpop.permute.xlu0 %2293
        %2295 = vrot.lane.b32.xlu0 %v1356, 80
        %v2296 = vpop.permute.xlu0 %2295
        %2297 = vrot.lane.b32.xlu0 %v1357, 80
        %v2298 = vpop.permute.xlu0 %2297
        %2299 = vrot.lane.b32.xlu0 %v1358, 80
        %v2300 = vpop.permute.xlu0 %2299
        %2301 = vrot.lane.b32.xlu0 %v1359, 80
        %v2302 = vpop.permute.xlu0 %2301
        %2303 = vrot.lane.b32.xlu0 %v1360, 80
        %v2304 = vpop.permute.xlu0 %2303
        %2305 = vrot.lane.b32.xlu0 %v1361, 80
        %v2306 = vpop.permute.xlu0 %2305
        %2307 = vrot.lane.b32.xlu0 %v1362, 80
        %v2308 = vpop.permute.xlu0 %2307
        %2309 = vrot.lane.b32.xlu0 %v1363, 80
        %v2310 = vpop.permute.xlu0 %2309
        %2327 = vrot.lane.b32.xlu0 %v902, 112
        %v2328 = vpop.permute.xlu0 %2327
        %2329 = vrot.lane.b32.xlu0 %v906, 112
        %v2330 = vpop.permute.xlu0 %2329
        %2331 = vrot.lane.b32.xlu0 %v912, 112
        %v2332 = vpop.permute.xlu0 %2331
        %2333 = vrot.lane.b32.xlu0 %v916, 112
        %v2334 = vpop.permute.xlu0 %2333
        %2335 = vrot.lane.b32.xlu0 %v922, 112
        %v2336 = vpop.permute.xlu0 %2335
        %2337 = vrot.lane.b32.xlu0 %v926, 112
        %v2338 = vpop.permute.xlu0 %2337
        %2339 = vrot.lane.b32.xlu0 %v932, 112
        %v2340 = vpop.permute.xlu0 %2339
        %2341 = vrot.lane.b32.xlu0 %v936, 112
        %v2342 = vpop.permute.xlu0 %2341
        %2343 = vrot.lane.b32.xlu0 %v942, 112
        %v2344 = vpop.permute.xlu0 %2343
        %2345 = vrot.lane.b32.xlu0 %v946, 112
        %v2346 = vpop.permute.xlu0 %2345
        %2347 = vrot.lane.b32.xlu0 %v952, 112
        %v2348 = vpop.permute.xlu0 %2347
        %2349 = vrot.lane.b32.xlu0 %v956, 112
        %v2350 = vpop.permute.xlu0 %2349
        %2351 = vrot.lane.b32.xlu0 %v962, 112
        %v2352 = vpop.permute.xlu0 %2351
        %2353 = vrot.lane.b32.xlu0 %v966, 112
        %v2354 = vpop.permute.xlu0 %2353
        %2355 = vrot.lane.b32.xlu0 %v972, 112
        %v2356 = vpop.permute.xlu0 %2355
        %2357 = vrot.lane.b32.xlu0 %v976, 112
        %v2358 = vpop.permute.xlu0 %2357
        %v2375 = vsel %vm1283, %v2280, %v2328
        %v2376 = vsel %vm1283, %v2282, %v2330
        %v2377 = vsel %vm1283, %v2284, %v2332
        %v2378 = vsel %vm1283, %v2286, %v2334
        %v2379 = vsel %vm1283, %v2288, %v2336
        %v2380 = vsel %vm1283, %v2290, %v2338
        %v2381 = vsel %vm1283, %v2292, %v2340
        %v2382 = vsel %vm1283, %v2294, %v2342
        %v2383 = vsel %vm1283, %v2296, %v2344
        %v2384 = vsel %vm1283, %v2298, %v2346
        %v2385 = vsel %vm1283, %v2300, %v2348
        %v2386 = vsel %vm1283, %v2302, %v2350
        %v2387 = vsel %vm1283, %v2304, %v2352
        %v2388 = vsel %vm1283, %v2306, %v2354
        %v2389 = vsel %vm1283, %v2308, %v2356
        %v2390 = vsel %vm1283, %v2310, %v2358
        %v2391 = vmul.f32 %v2375, %v1091
        %v2392 = vmul.f32 %v2376, %v1092
        %v2393 = vmul.f32 %v2377, %v1093
        %v2394 = vmul.f32 %v2378, %v1094
        %v2395 = vmul.f32 %v2379, %v1095
        %v2396 = vmul.f32 %v2380, %v1096
        %v2397 = vmul.f32 %v2381, %v1097
        %v2398 = vmul.f32 %v2382, %v1098
        %v2399 = vmul.f32 %v2383, %v1099
        %v2400 = vmul.f32 %v2384, %v1100
        %v2401 = vmul.f32 %v2385, %v1101
        %v2402 = vmul.f32 %v2386, %v1102
        %v2403 = vmul.f32 %v2387, %v1103
        %v2404 = vmul.f32 %v2388, %v1104
        %v2405 = vmul.f32 %v2389, %v1105
        %v2406 = vmul.f32 %v2390, %v1106
        %2423 = vrot.lane.b32.xlu0 %v2391, 32
        %v2424 = vpop.permute.xlu0 %2423
        %2425 = vrot.lane.b32.xlu0 %v2392, 32
        %v2426 = vpop.permute.xlu0 %2425
        %2427 = vrot.lane.b32.xlu0 %v2393, 32
        %v2428 = vpop.permute.xlu0 %2427
        %2429 = vrot.lane.b32.xlu0 %v2394, 32
        %v2430 = vpop.permute.xlu0 %2429
        %2431 = vrot.lane.b32.xlu0 %v2395, 32
        %v2432 = vpop.permute.xlu0 %2431
        %2433 = vrot.lane.b32.xlu0 %v2396, 32
        %v2434 = vpop.permute.xlu0 %2433
        %2435 = vrot.lane.b32.xlu0 %v2397, 32
        %v2436 = vpop.permute.xlu0 %2435
        %2437 = vrot.lane.b32.xlu0 %v2398, 32
        %v2438 = vpop.permute.xlu0 %2437
        %2439 = vrot.lane.b32.xlu0 %v2399, 32
        %v2440 = vpop.permute.xlu0 %2439
        %2441 = vrot.lane.b32.xlu0 %v2400, 32
        %v2442 = vpop.permute.xlu0 %2441
        %2443 = vrot.lane.b32.xlu0 %v2401, 32
        %v2444 = vpop.permute.xlu0 %2443
        %2445 = vrot.lane.b32.xlu0 %v2402, 32
        %v2446 = vpop.permute.xlu0 %2445
        %2447 = vrot.lane.b32.xlu0 %v2403, 32
        %v2448 = vpop.permute.xlu0 %2447
        %2449 = vrot.lane.b32.xlu0 %v2404, 32
        %v2450 = vpop.permute.xlu0 %2449
        %2451 = vrot.lane.b32.xlu0 %v2405, 32
        %v2452 = vpop.permute.xlu0 %2451
        %2453 = vrot.lane.b32.xlu0 %v2406, 32
        %v2454 = vpop.permute.xlu0 %2453
        %v2471 = vadd.f32 %v2263, %v2424
        %v2472 = vadd.f32 %v2264, %v2426
        %v2473 = vadd.f32 %v2265, %v2428
        %v2474 = vadd.f32 %v2266, %v2430
        %v2475 = vadd.f32 %v2267, %v2432
        %v2476 = vadd.f32 %v2268, %v2434
        %v2477 = vadd.f32 %v2269, %v2436
        %v2478 = vadd.f32 %v2270, %v2438
        %v2479 = vadd.f32 %v2271, %v2440
        %v2480 = vadd.f32 %v2272, %v2442
        %v2481 = vadd.f32 %v2273, %v2444
        %v2482 = vadd.f32 %v2274, %v2446
        %v2483 = vadd.f32 %v2275, %v2448
        %v2484 = vadd.f32 %v2276, %v2450
        %v2485 = vadd.f32 %v2277, %v2452
        %v2486 = vadd.f32 %v2278, %v2454
        %v2487 = vmul.f32 %v2247, 0.17677669
        %v2488 = vmul.f32 %v2248, 0.17677669
        %v2489 = vmul.f32 %v2249, 0.17677669
        %v2490 = vmul.f32 %v2250, 0.17677669
        %v2491 = vmul.f32 %v2251, 0.17677669
        %v2492 = vmul.f32 %v2252, 0.17677669
        %v2493 = vmul.f32 %v2253, 0.17677669
        %v2494 = vmul.f32 %v2254, 0.17677669
        %v2495 = vmul.f32 %v2255, 0.17677669
        %v2496 = vmul.f32 %v2256, 0.17677669
        %v2497 = vmul.f32 %v2257, 0.17677669
        %v2498 = vmul.f32 %v2258, 0.17677669
        %v2499 = vmul.f32 %v2259, 0.17677669
        %v2500 = vmul.f32 %v2260, 0.17677669
        %v2501 = vmul.f32 %v2261, 0.17677669
        %v2502 = vmul.f32 %v2262, 0.17677669
        %v2503 = vpack.c.bf16 %v2488, %v2487
        %v2504 = vpack.c.bf16 %v2490, %v2489
        %v2505 = vpack.c.bf16 %v2492, %v2491
        %v2506 = vpack.c.bf16 %v2494, %v2493
        %v2507 = vpack.c.bf16 %v2496, %v2495
        %v2508 = vpack.c.bf16 %v2498, %v2497
        %v2509 = vpack.c.bf16 %v2500, %v2499
        %v2510 = vpack.c.bf16 %v2502, %v2501
        %v2511 = vpack.c.bf16 %v2472, %v2471
        %v2512 = vpack.c.bf16 %v2474, %v2473
        %v2513 = vpack.c.bf16 %v2476, %v2475
        %v2514 = vpack.c.bf16 %v2478, %v2477
        %v2515 = vpack.c.bf16 %v2480, %v2479
        %v2516 = vpack.c.bf16 %v2482, %v2481
        %v2517 = vpack.c.bf16 %v2484, %v2483
        %v2518 = vpack.c.bf16 %v2486, %v2485
        %2527 = vrot.lane.b32.xlu0 %v2503, 96
        %v2528 = vpop.permute.xlu0 %2527
        %2529 = vrot.lane.b32.xlu0 %v2504, 96
        %v2530 = vpop.permute.xlu0 %2529
        %2531 = vrot.lane.b32.xlu0 %v2505, 96
        %v2532 = vpop.permute.xlu0 %2531
        %2533 = vrot.lane.b32.xlu0 %v2506, 96
        %v2534 = vpop.permute.xlu0 %2533
        %2535 = vrot.lane.b32.xlu0 %v2507, 96
        %v2536 = vpop.permute.xlu0 %2535
        %2537 = vrot.lane.b32.xlu0 %v2508, 96
        %v2538 = vpop.permute.xlu0 %2537
        %2539 = vrot.lane.b32.xlu0 %v2509, 96
        %v2540 = vpop.permute.xlu0 %2539
        %2541 = vrot.lane.b32.xlu0 %v2510, 96
        %v2542 = vpop.permute.xlu0 %2541
        %2551 = vrot.lane.b32.xlu0 %v2511, 96
        %v2552 = vpop.permute.xlu0 %2551
        %2553 = vrot.lane.b32.xlu0 %v2512, 96
        %v2554 = vpop.permute.xlu0 %2553
        %2555 = vrot.lane.b32.xlu0 %v2513, 96
        %v2556 = vpop.permute.xlu0 %2555
        %2557 = vrot.lane.b32.xlu0 %v2514, 96
        %v2558 = vpop.permute.xlu0 %2557
        %2559 = vrot.lane.b32.xlu0 %v2515, 96
        %v2560 = vpop.permute.xlu0 %2559
        %2561 = vrot.lane.b32.xlu0 %v2516, 96
        %v2562 = vpop.permute.xlu0 %2561
        %2563 = vrot.lane.b32.xlu0 %v2517, 96
        %v2564 = vpop.permute.xlu0 %2563
        %2565 = vrot.lane.b32.xlu0 %v2518, 96
        %v2566 = vpop.permute.xlu0 %2565
        %v2568 = vsel %vm1572, %v2528, 0
        %v2571 = vsel %vm1572, %v2530, 0
        %v2574 = vsel %vm1572, %v2532, 0
        %v2577 = vsel %vm1572, %v2534, 0
        %v2580 = vsel %vm1572, %v2536, 0
        %v2583 = vsel %vm1572, %v2538, 0
        %v2586 = vsel %vm1572, %v2540, 0
        %v2589 = vsel %vm1572, %v2542, 0
        %v2592 = vsel %vm1572, %v2552, 0
        %v2595 = vsel %vm1572, %v2554, 0
        %v2598 = vsel %vm1572, %v2556, 0
        %v2601 = vsel %vm1572, %v2558, 0
        %v2604 = vsel %vm1572, %v2560, 0
        %v2607 = vsel %vm1572, %v2562, 0
        %v2610 = vsel %vm1572, %v2564, 0
        %v2613 = vsel %vm1572, %v2566, 0
        %2615 = vmatprep.subr.bf16.mxu0 0
        %2616 = vmatpush1.bf16.xpose.msra.mxu0 %v2592
        %2617 = vmatprep.subr.bf16.mxu0 0
        %2618 = vmatpush1.bf16.xpose.msra.mxu0 %v2595
        %2619 = vmatprep.subr.bf16.mxu0 0
        %2620 = vmatpush1.bf16.xpose.msra.mxu0 %v2598
        %2621 = vmatprep.subr.bf16.mxu0 0
        %2622 = vmatpush1.bf16.xpose.msra.mxu0 %v2601
        %2623 = vmatprep.subr.bf16.mxu0 0
        %2624 = vmatpush1.bf16.xpose.msra.mxu0 %v2604
        %2625 = vmatprep.subr.bf16.mxu0 0
        %2626 = vmatpush1.bf16.xpose.msra.mxu0 %v2607
        %2627 = vmatprep.subr.bf16.mxu0 0
        %2628 = vmatpush1.bf16.xpose.msra.mxu0 %v2610
        %2629 = vmatprep.subr.bf16.mxu0 0
        %2630 = vmatpush1.bf16.xpose.msra.mxu0 %v2613
        %2631 = vmatprep.subr.bf16.mxu0 0
        %2632 = vmatpush1.bf16.xpose.msra.mxu0 0
        %2633 = vmatprep.subr.bf16.mxu0 0
        %2634 = vmatpush1.bf16.xpose.msra.mxu0 0
        %2635 = vmatprep.subr.bf16.mxu0 0
        %2636 = vmatpush1.bf16.xpose.msra.mxu0 0
        %2637 = vmatprep.subr.bf16.mxu0 0
        %2638 = vmatpush1.bf16.xpose.msra.mxu0 0
        %2639 = vmatprep.subr.bf16.mxu0 0
        %2640 = vmatpush1.bf16.xpose.msra.mxu0 0
        %2641 = vmatprep.subr.bf16.mxu0 0
        %2642 = vmatpush1.bf16.xpose.msra.mxu0 0
        %2643 = vmatprep.subr.bf16.mxu0 0
        %2644 = vmatpush1.bf16.xpose.msra.mxu0 0
        %2645 = vmatprep.subr.bf16.mxu0 0
        %2646 = vmatpush1.bf16.xpose.msra.mxu0 0
        %2647 = vmatprep.mubr.bf16.mxu0 0
        %2648 = vmatmul.mubr.bf16.gmra.mrb[0].mxu0 %v2568
        %v2649 = vpop.f32.mrb[0].mxu0
        %v2650 = vadd.f32 %v1107, %v2649
        %v2651 = vpop.f32.mrb[0].mxu0
        %v2652 = vpop.f32.mrb[0].mxu0
        %v2653 = vadd.f32 %v1108, %v2652
        %v2654 = vpop.f32.mrb[0].mxu0
        %2655 = vmatprep.mubr.bf16.mxu0 0
        %2656 = vmatmul.mubr.bf16.gmra.mrb[0].mxu0 %v2571
        %v2657 = vpop.f32.mrb[0].mxu0
        %v2658 = vadd.f32 %v1109, %v2657
        %v2659 = vpop.f32.mrb[0].mxu0
        %v2660 = vpop.f32.mrb[0].mxu0
        %v2661 = vadd.f32 %v1110, %v2660
        %v2662 = vpop.f32.mrb[0].mxu0
        %2663 = vmatprep.mubr.bf16.mxu0 0
        %2664 = vmatmul.mubr.bf16.gmra.mrb[0].mxu0 %v2574
        %v2665 = vpop.f32.mrb[0].mxu0
        %v2666 = vadd.f32 %v1111, %v2665
        %v2667 = vpop.f32.mrb[0].mxu0
        %v2668 = vpop.f32.mrb[0].mxu0
        %v2669 = vadd.f32 %v1112, %v2668
        %v2670 = vpop.f32.mrb[0].mxu0
        %2671 = vmatprep.mubr.bf16.mxu0 0
        %2672 = vmatmul.mubr.bf16.gmra.mrb[0].mxu0 %v2577
        %v2673 = vpop.f32.mrb[0].mxu0
        %v2674 = vadd.f32 %v1113, %v2673
        %v2675 = vpop.f32.mrb[0].mxu0
        %v2676 = vpop.f32.mrb[0].mxu0
        %v2677 = vadd.f32 %v1114, %v2676
        %v2678 = vpop.f32.mrb[0].mxu0
        %2679 = vmatprep.mubr.bf16.mxu0 0
        %2680 = vmatmul.mubr.bf16.gmra.mrb[0].mxu0 %v2580
        %v2681 = vpop.f32.mrb[0].mxu0
        %v2682 = vadd.f32 %v1115, %v2681
        %v2683 = vpop.f32.mrb[0].mxu0
        %v2684 = vpop.f32.mrb[0].mxu0
        %v2685 = vadd.f32 %v1116, %v2684
        %v2686 = vpop.f32.mrb[0].mxu0
        %2687 = vmatprep.mubr.bf16.mxu0 0
        %2688 = vmatmul.mubr.bf16.gmra.mrb[0].mxu0 %v2583
        %v2689 = vpop.f32.mrb[0].mxu0
        %v2690 = vadd.f32 %v1117, %v2689
        %v2691 = vpop.f32.mrb[0].mxu0
        %v2692 = vpop.f32.mrb[0].mxu0
        %v2693 = vadd.f32 %v1118, %v2692
        %v2694 = vpop.f32.mrb[0].mxu0
        %2695 = vmatprep.mubr.bf16.mxu0 0
        %2696 = vmatmul.mubr.bf16.gmra.mrb[0].mxu0 %v2586
        %v2697 = vpop.f32.mrb[0].mxu0
        %v2698 = vadd.f32 %v1119, %v2697
        %v2699 = vpop.f32.mrb[0].mxu0
        %v2700 = vpop.f32.mrb[0].mxu0
        %v2701 = vadd.f32 %v1120, %v2700
        %v2702 = vpop.f32.mrb[0].mxu0
        %2703 = vmatprep.mubr.bf16.mxu0 0
        %2704 = vmatmul.mubr.bf16.gmra.mrb[0].mxu0 %v2589
        %v2705 = vpop.f32.mrb[0].mxu0
        %v2706 = vadd.f32 %v1121, %v2705
        %v2707 = vpop.f32.mrb[0].mxu0
        %v2708 = vpop.f32.mrb[0].mxu0
        %v2709 = vadd.f32 %v1122, %v2708
        %v2710 = vpop.f32.mrb[0].mxu0
        %2711 = vdwg.mxu0
        %2712 = vmax.xlane.f32.xlu0 %v2650
        %v2713 = vpop.xlane.xlu0 %2712
        %2714 = vmax.xlane.f32.xlu0 %v2653
        %v2715 = vpop.xlane.xlu0 %2714
        %2716 = vmax.xlane.f32.xlu0 %v2658
        %v2717 = vpop.xlane.xlu0 %2716
        %2718 = vmax.xlane.f32.xlu0 %v2661
        %v2719 = vpop.xlane.xlu0 %2718
        %2720 = vmax.xlane.f32.xlu0 %v2666
        %v2721 = vpop.xlane.xlu0 %2720
        %2722 = vmax.xlane.f32.xlu0 %v2669
        %v2723 = vpop.xlane.xlu0 %2722
        %2724 = vmax.xlane.f32.xlu0 %v2674
        %v2725 = vpop.xlane.xlu0 %2724
        %2726 = vmax.xlane.f32.xlu0 %v2677
        %v2727 = vpop.xlane.xlu0 %2726
        %2728 = vmax.xlane.f32.xlu0 %v2682
        %v2729 = vpop.xlane.xlu0 %2728
        %2730 = vmax.xlane.f32.xlu0 %v2685
        %v2731 = vpop.xlane.xlu0 %2730
        %2732 = vmax.xlane.f32.xlu0 %v2690
        %v2733 = vpop.xlane.xlu0 %2732
        %2734 = vmax.xlane.f32.xlu0 %v2693
        %v2735 = vpop.xlane.xlu0 %2734
        %2736 = vmax.xlane.f32.xlu0 %v2698
        %v2737 = vpop.xlane.xlu0 %2736
        %2738 = vmax.xlane.f32.xlu0 %v2701
        %v2739 = vpop.xlane.xlu0 %2738
        %2740 = vmax.xlane.f32.xlu0 %v2706
        %v2741 = vpop.xlane.xlu0 %2740
        %2742 = vmax.xlane.f32.xlu0 %v2709
        %v2743 = vpop.xlane.xlu0 %2742
        %v2744 = vsub.f32 %v2650, %v2713
        %v2745 = vsub.f32 %v2653, %v2715
        %v2746 = vsub.f32 %v2658, %v2717
        %v2747 = vsub.f32 %v2661, %v2719
        %v2748 = vsub.f32 %v2666, %v2721
        %v2749 = vsub.f32 %v2669, %v2723
        %v2750 = vsub.f32 %v2674, %v2725
        %v2751 = vsub.f32 %v2677, %v2727
        %v2752 = vsub.f32 %v2682, %v2729
        %v2753 = vsub.f32 %v2685, %v2731
        %v2754 = vsub.f32 %v2690, %v2733
        %v2755 = vsub.f32 %v2693, %v2735
        %v2756 = vsub.f32 %v2698, %v2737
        %v2757 = vsub.f32 %v2701, %v2739
        %v2758 = vsub.f32 %v2706, %v2741
        %v2759 = vsub.f32 %v2709, %v2743
        %v2760 = vmul.f32 %v2744, 1.442695
        %v2761 = vpow.pop %v2760
        %v2762 = vmul.f32 %v2745, 1.442695
        %v2763 = vpow.pop %v2762
        %v2764 = vmul.f32 %v2746, 1.442695
        %v2765 = vpow.pop %v2764
        %v2766 = vmul.f32 %v2747, 1.442695
        %v2767 = vpow.pop %v2766
        %v2768 = vmul.f32 %v2748, 1.442695
        %v2769 = vpow.pop %v2768
        %v2770 = vmul.f32 %v2749, 1.442695
        %v2771 = vpow.pop %v2770
        %v2772 = vmul.f32 %v2750, 1.442695
        %v2773 = vpow.pop %v2772
        %v2774 = vmul.f32 %v2751, 1.442695
        %v2775 = vpow.pop %v2774
        %v2776 = vmul.f32 %v2752, 1.442695
        %v2777 = vpow.pop %v2776
        %v2778 = vmul.f32 %v2753, 1.442695
        %v2779 = vpow.pop %v2778
        %v2780 = vmul.f32 %v2754, 1.442695
        %v2781 = vpow.pop %v2780
        %v2782 = vmul.f32 %v2755, 1.442695
        %v2783 = vpow.pop %v2782
        %v2784 = vmul.f32 %v2756, 1.442695
        %v2785 = vpow.pop %v2784
        %v2786 = vmul.f32 %v2757, 1.442695
        %v2787 = vpow.pop %v2786
        %v2788 = vmul.f32 %v2758, 1.442695
        %v2789 = vpow.pop %v2788
        %v2790 = vmul.f32 %v2759, 1.442695
        %v2791 = vpow.pop %v2790
        %2792 = vadd.xlane.f32.xlu0 %v2761
        %v2793 = vpop.xlane.xlu0 %2792
        %2794 = vadd.xlane.f32.xlu0 %v2763
        %v2795 = vpop.xlane.xlu0 %2794
        %2796 = vadd.xlane.f32.xlu0 %v2765
        %v2797 = vpop.xlane.xlu0 %2796
        %2798 = vadd.xlane.f32.xlu0 %v2767
        %v2799 = vpop.xlane.xlu0 %2798
        %2800 = vadd.xlane.f32.xlu0 %v2769
        %v2801 = vpop.xlane.xlu0 %2800
        %2802 = vadd.xlane.f32.xlu0 %v2771
        %v2803 = vpop.xlane.xlu0 %2802
        %2804 = vadd.xlane.f32.xlu0 %v2773
        %v2805 = vpop.xlane.xlu0 %2804
        %2806 = vadd.xlane.f32.xlu0 %v2775
        %v2807 = vpop.xlane.xlu0 %2806
        %2808 = vadd.xlane.f32.xlu0 %v2777
        %v2809 = vpop.xlane.xlu0 %2808
        %2810 = vadd.xlane.f32.xlu0 %v2779
        %v2811 = vpop.xlane.xlu0 %2810
        %2812 = vadd.xlane.f32.xlu0 %v2781
        %v2813 = vpop.xlane.xlu0 %2812
        %2814 = vadd.xlane.f32.xlu0 %v2783
        %v2815 = vpop.xlane.xlu0 %2814
        %2816 = vadd.xlane.f32.xlu0 %v2785
        %v2817 = vpop.xlane.xlu0 %2816
        %2818 = vadd.xlane.f32.xlu0 %v2787
        %v2819 = vpop.xlane.xlu0 %2818
        %2820 = vadd.xlane.f32.xlu0 %v2789
        %v2821 = vpop.xlane.xlu0 %2820
        %2822 = vadd.xlane.f32.xlu0 %v2791
        %v2823 = vpop.xlane.xlu0 %2822
        %v2824 = vrcp.pop %v2793
        %v2825 = vrcp.pop %v2795
        %v2826 = vrcp.pop %v2797
        %v2827 = vrcp.pop %v2799
        %v2828 = vrcp.pop %v2801
        %v2829 = vrcp.pop %v2803
        %v2830 = vrcp.pop %v2805
        %v2831 = vrcp.pop %v2807
        %v2832 = vrcp.pop %v2809
        %v2833 = vrcp.pop %v2811
        %v2834 = vrcp.pop %v2813
        %v2835 = vrcp.pop %v2815
        %v2836 = vrcp.pop %v2817
        %v2837 = vrcp.pop %v2819
        %v2838 = vrcp.pop %v2821
        %v2839 = vrcp.pop %v2823
        %v2840 = vmul.f32 %v2761, %v2824
        %v2841 = vmul.f32 %v2763, %v2825
        %v2842 = vmul.f32 %v2765, %v2826
        %v2843 = vmul.f32 %v2767, %v2827
        %v2844 = vmul.f32 %v2769, %v2828
        %v2845 = vmul.f32 %v2771, %v2829
        %v2846 = vmul.f32 %v2773, %v2830
        %v2847 = vmul.f32 %v2775, %v2831
        %v2848 = vmul.f32 %v2777, %v2832
        %v2849 = vmul.f32 %v2779, %v2833
        %v2850 = vmul.f32 %v2781, %v2834
        %v2851 = vmul.f32 %v2783, %v2835
        %v2852 = vmul.f32 %v2785, %v2836
        %v2853 = vmul.f32 %v2787, %v2837
        %v2854 = vmul.f32 %v2789, %v2838
        %v2855 = vmul.f32 %v2791, %v2839
        %v2856 = vpack.c.bf16 %v2841, %v2840
        %v2857 = vpack.c.bf16 %v2843, %v2842
        %v2858 = vpack.c.bf16 %v2845, %v2844
        %v2859 = vpack.c.bf16 %v2847, %v2846
        %v2860 = vpack.c.bf16 %v2849, %v2848
        %v2861 = vpack.c.bf16 %v2851, %v2850
        %v2862 = vpack.c.bf16 %v2853, %v2852
        %v2863 = vpack.c.bf16 %v2855, %v2854
        %2872 = vrot.lane.b32.xlu0 %v1870, 96
        %v2873 = vpop.permute.xlu0 %2872
        %2874 = vrot.lane.b32.xlu0 %v1871, 96
        %v2875 = vpop.permute.xlu0 %2874
        %2876 = vrot.lane.b32.xlu0 %v1872, 96
        %v2877 = vpop.permute.xlu0 %2876
        %2878 = vrot.lane.b32.xlu0 %v1873, 96
        %v2879 = vpop.permute.xlu0 %2878
        %2880 = vrot.lane.b32.xlu0 %v1874, 96
        %v2881 = vpop.permute.xlu0 %2880
        %2882 = vrot.lane.b32.xlu0 %v1875, 96
        %v2883 = vpop.permute.xlu0 %2882
        %2884 = vrot.lane.b32.xlu0 %v1876, 96
        %v2885 = vpop.permute.xlu0 %2884
        %2886 = vrot.lane.b32.xlu0 %v1877, 96
        %v2887 = vpop.permute.xlu0 %2886
        %2896 = vmatprep.subr.bf16.mxu0 0
        %2897 = vmatpush1.bf16.msra.mxu0 %v2873
        %2898 = vmatprep.subr.bf16.mxu0 0
        %2899 = vmatpush1.bf16.msra.mxu0 %v2875
        %2900 = vmatprep.subr.bf16.mxu0 0
        %2901 = vmatpush1.bf16.msra.mxu0 %v2877
        %2902 = vmatprep.subr.bf16.mxu0 0
        %2903 = vmatpush1.bf16.msra.mxu0 %v2879
        %2904 = vmatprep.subr.bf16.mxu0 0
        %2905 = vmatpush1.bf16.msra.mxu0 %v2881
        %2906 = vmatprep.subr.bf16.mxu0 0
        %2907 = vmatpush1.bf16.msra.mxu0 %v2883
        %2908 = vmatprep.subr.bf16.mxu0 0
        %2909 = vmatpush1.bf16.msra.mxu0 %v2885
        %2910 = vmatprep.subr.bf16.mxu0 0
        %2911 = vmatpush1.bf16.msra.mxu0 %v2887
        %2912 = vmatprep.subr.bf16.mxu0 0
        %2913 = vmatpush1.bf16.msra.mxu0 0
        %2914 = vmatprep.subr.bf16.mxu0 0
        %2915 = vmatpush1.bf16.msra.mxu0 0
        %2916 = vmatprep.subr.bf16.mxu0 0
        %2917 = vmatpush1.bf16.msra.mxu0 0
        %2918 = vmatprep.subr.bf16.mxu0 0
        %2919 = vmatpush1.bf16.msra.mxu0 0
        %2920 = vmatprep.subr.bf16.mxu0 0
        %2921 = vmatpush1.bf16.msra.mxu0 0
        %2922 = vmatprep.subr.bf16.mxu0 0
        %2923 = vmatpush1.bf16.msra.mxu0 0
        %2924 = vmatprep.subr.bf16.mxu0 0
        %2925 = vmatpush1.bf16.msra.mxu0 0
        %2926 = vmatprep.subr.bf16.mxu0 0
        %2927 = vmatpush1.bf16.msra.mxu0 0
        %2928 = vmatprep.mubr.bf16.mxu0 0
        %2929 = vmatmul.mubr.bf16.gmra.mrb[0].mxu0 %v2856
        %v2930 = vpop.f32.mrb[0].mxu0
        %v2931 = vadd.f32 0.0, %v2930
        %v2932 = vpop.f32.mrb[0].mxu0
        %v2933 = vpop.f32.mrb[0].mxu0
        %v2934 = vadd.f32 0.0, %v2933
        %v2935 = vpop.f32.mrb[0].mxu0
        %2936 = vmatprep.mubr.bf16.mxu0 0
        %2937 = vmatmul.mubr.bf16.gmra.mrb[0].mxu0 %v2857
        %v2938 = vpop.f32.mrb[0].mxu0
        %v2939 = vadd.f32 0.0, %v2938
        %v2940 = vpop.f32.mrb[0].mxu0
        %v2941 = vpop.f32.mrb[0].mxu0
        %v2942 = vadd.f32 0.0, %v2941
        %v2943 = vpop.f32.mrb[0].mxu0
        %2944 = vmatprep.mubr.bf16.mxu0 0
        %2945 = vmatmul.mubr.bf16.gmra.mrb[0].mxu0 %v2858
        %v2946 = vpop.f32.mrb[0].mxu0
        %v2947 = vadd.f32 0.0, %v2946
        %v2948 = vpop.f32.mrb[0].mxu0
        %v2949 = vpop.f32.mrb[0].mxu0
        %v2950 = vadd.f32 0.0, %v2949
        %v2951 = vpop.f32.mrb[0].mxu0
        %2952 = vmatprep.mubr.bf16.mxu0 0
        %2953 = vmatmul.mubr.bf16.gmra.mrb[0].mxu0 %v2859
        %v2954 = vpop.f32.mrb[0].mxu0
        %v2955 = vadd.f32 0.0, %v2954
        %v2956 = vpop.f32.mrb[0].mxu0
        %v2957 = vpop.f32.mrb[0].mxu0
        %v2958 = vadd.f32 0.0, %v2957
        %v2959 = vpop.f32.mrb[0].mxu0
        %2960 = vmatprep.mubr.bf16.mxu0 0
        %2961 = vmatmul.mubr.bf16.gmra.mrb[0].mxu0 %v2860
        %v2962 = vpop.f32.mrb[0].mxu0
        %v2963 = vadd.f32 0.0, %v2962
        %v2964 = vpop.f32.mrb[0].mxu0
        %v2965 = vpop.f32.mrb[0].mxu0
        %v2966 = vadd.f32 0.0, %v2965
        %v2967 = vpop.f32.mrb[0].mxu0
        %2968 = vmatprep.mubr.bf16.mxu0 0
        %2969 = vmatmul.mubr.bf16.gmra.mrb[0].mxu0 %v2861
        %v2970 = vpop.f32.mrb[0].mxu0
        %v2971 = vadd.f32 0.0, %v2970
        %v2972 = vpop.f32.mrb[0].mxu0
        %v2973 = vpop.f32.mrb[0].mxu0
        %v2974 = vadd.f32 0.0, %v2973
        %v2975 = vpop.f32.mrb[0].mxu0
        %2976 = vmatprep.mubr.bf16.mxu0 0
        %2977 = vmatmul.mubr.bf16.gmra.mrb[0].mxu0 %v2862
        %v2978 = vpop.f32.mrb[0].mxu0
        %v2979 = vadd.f32 0.0, %v2978
        %v2980 = vpop.f32.mrb[0].mxu0
        %v2981 = vpop.f32.mrb[0].mxu0
        %v2982 = vadd.f32 0.0, %v2981
        %v2983 = vpop.f32.mrb[0].mxu0
        %2984 = vmatprep.mubr.bf16.mxu0 0
        %2985 = vmatmul.mubr.bf16.gmra.mrb[0].mxu0 %v2863
        %v2986 = vpop.f32.mrb[0].mxu0
        %v2987 = vadd.f32 0.0, %v2986
        %v2988 = vpop.f32.mrb[0].mxu0
        %v2989 = vpop.f32.mrb[0].mxu0
        %v2990 = vadd.f32 0.0, %v2989
        %v2991 = vpop.f32.mrb[0].mxu0
        %2992 = vdwg.mxu0
        %2993 = vrot.lane.b32.xlu0 %v1075, 64
        %v2994 = vpop.permute.xlu0 %2993
        %2995 = vrot.lane.b32.xlu0 %v1076, 64
        %v2996 = vpop.permute.xlu0 %2995
        %2997 = vrot.lane.b32.xlu0 %v1077, 64
        %v2998 = vpop.permute.xlu0 %2997
        %2999 = vrot.lane.b32.xlu0 %v1078, 64
        %v3000 = vpop.permute.xlu0 %2999
        %3001 = vrot.lane.b32.xlu0 %v1079, 64
        %v3002 = vpop.permute.xlu0 %3001
        %3003 = vrot.lane.b32.xlu0 %v1080, 64
        %v3004 = vpop.permute.xlu0 %3003
        %3005 = vrot.lane.b32.xlu0 %v1081, 64
        %v3006 = vpop.permute.xlu0 %3005
        %3007 = vrot.lane.b32.xlu0 %v1082, 64
        %v3008 = vpop.permute.xlu0 %3007
        %3009 = vrot.lane.b32.xlu0 %v1083, 64
        %v3010 = vpop.permute.xlu0 %3009
        %3011 = vrot.lane.b32.xlu0 %v1084, 64
        %v3012 = vpop.permute.xlu0 %3011
        %3013 = vrot.lane.b32.xlu0 %v1085, 64
        %v3014 = vpop.permute.xlu0 %3013
        %3015 = vrot.lane.b32.xlu0 %v1086, 64
        %v3016 = vpop.permute.xlu0 %3015
        %3017 = vrot.lane.b32.xlu0 %v1087, 64
        %v3018 = vpop.permute.xlu0 %3017
        %3019 = vrot.lane.b32.xlu0 %v1088, 64
        %v3020 = vpop.permute.xlu0 %3019
        %3021 = vrot.lane.b32.xlu0 %v1089, 64
        %v3022 = vpop.permute.xlu0 %3021
        %3023 = vrot.lane.b32.xlu0 %v1090, 64
        %v3024 = vpop.permute.xlu0 %3023
        %v3041 = vmul.f32 %v900, %v2994
        %v3042 = vmul.f32 %v904, %v2996
        %v3043 = vmul.f32 %v910, %v2998
        %v3044 = vmul.f32 %v914, %v3000
        %v3045 = vmul.f32 %v920, %v3002
        %v3046 = vmul.f32 %v924, %v3004
        %v3047 = vmul.f32 %v930, %v3006
        %v3048 = vmul.f32 %v934, %v3008
        %v3049 = vmul.f32 %v940, %v3010
        %v3050 = vmul.f32 %v944, %v3012
        %v3051 = vmul.f32 %v950, %v3014
        %v3052 = vmul.f32 %v954, %v3016
        %v3053 = vmul.f32 %v960, %v3018
        %v3054 = vmul.f32 %v964, %v3020
        %v3055 = vmul.f32 %v970, %v3022
        %v3056 = vmul.f32 %v974, %v3024
        %3057 = vrot.lane.b32.xlu0 %v1139, 48
        %v3058 = vpop.permute.xlu0 %3057
        %3059 = vrot.lane.b32.xlu0 %v1140, 48
        %v3060 = vpop.permute.xlu0 %3059
        %3061 = vrot.lane.b32.xlu0 %v1141, 48
        %v3062 = vpop.permute.xlu0 %3061
        %3063 = vrot.lane.b32.xlu0 %v1142, 48
        %v3064 = vpop.permute.xlu0 %3063
        %3065 = vrot.lane.b32.xlu0 %v1143, 48
        %v3066 = vpop.permute.xlu0 %3065
        %3067 = vrot.lane.b32.xlu0 %v1144, 48
        %v3068 = vpop.permute.xlu0 %3067
        %3069 = vrot.lane.b32.xlu0 %v1145, 48
        %v3070 = vpop.permute.xlu0 %3069
        %3071 = vrot.lane.b32.xlu0 %v1146, 48
        %v3072 = vpop.permute.xlu0 %3071
        %3073 = vrot.lane.b32.xlu0 %v1147, 48
        %v3074 = vpop.permute.xlu0 %3073
        %3075 = vrot.lane.b32.xlu0 %v1148, 48
        %v3076 = vpop.permute.xlu0 %3075
        %3077 = vrot.lane.b32.xlu0 %v1149, 48
        %v3078 = vpop.permute.xlu0 %3077
        %3079 = vrot.lane.b32.xlu0 %v1150, 48
        %v3080 = vpop.permute.xlu0 %3079
        %3081 = vrot.lane.b32.xlu0 %v1151, 48
        %v3082 = vpop.permute.xlu0 %3081
        %3083 = vrot.lane.b32.xlu0 %v1152, 48
        %v3084 = vpop.permute.xlu0 %3083
        %3085 = vrot.lane.b32.xlu0 %v1153, 48
        %v3086 = vpop.permute.xlu0 %3085
        %3087 = vrot.lane.b32.xlu0 %v1154, 48
        %v3088 = vpop.permute.xlu0 %3087
        %3105 = vrot.lane.b32.xlu0 %v900, 80
        %v3106 = vpop.permute.xlu0 %3105
        %3107 = vrot.lane.b32.xlu0 %v904, 80
        %v3108 = vpop.permute.xlu0 %3107
        %3109 = vrot.lane.b32.xlu0 %v910, 80
        %v3110 = vpop.permute.xlu0 %3109
        %3111 = vrot.lane.b32.xlu0 %v914, 80
        %v3112 = vpop.permute.xlu0 %3111
        %3113 = vrot.lane.b32.xlu0 %v920, 80
        %v3114 = vpop.permute.xlu0 %3113
        %3115 = vrot.lane.b32.xlu0 %v924, 80
        %v3116 = vpop.permute.xlu0 %3115
        %3117 = vrot.lane.b32.xlu0 %v930, 80
        %v3118 = vpop.permute.xlu0 %3117
        %3119 = vrot.lane.b32.xlu0 %v934, 80
        %v3120 = vpop.permute.xlu0 %3119
        %3121 = vrot.lane.b32.xlu0 %v940, 80
        %v3122 = vpop.permute.xlu0 %3121
        %3123 = vrot.lane.b32.xlu0 %v944, 80
        %v3124 = vpop.permute.xlu0 %3123
        %3125 = vrot.lane.b32.xlu0 %v950, 80
        %v3126 = vpop.permute.xlu0 %3125
        %3127 = vrot.lane.b32.xlu0 %v954, 80
        %v3128 = vpop.permute.xlu0 %3127
        %3129 = vrot.lane.b32.xlu0 %v960, 80
        %v3130 = vpop.permute.xlu0 %3129
        %3131 = vrot.lane.b32.xlu0 %v964, 80
        %v3132 = vpop.permute.xlu0 %3131
        %3133 = vrot.lane.b32.xlu0 %v970, 80
        %v3134 = vpop.permute.xlu0 %3133
        %3135 = vrot.lane.b32.xlu0 %v974, 80
        %v3136 = vpop.permute.xlu0 %3135
        %v3153 = vsel %vm1283, %v3058, %v3106
        %v3154 = vsel %vm1283, %v3060, %v3108
        %v3155 = vsel %vm1283, %v3062, %v3110
        %v3156 = vsel %vm1283, %v3064, %v3112
        %v3157 = vsel %vm1283, %v3066, %v3114
        %v3158 = vsel %vm1283, %v3068, %v3116
        %v3159 = vsel %vm1283, %v3070, %v3118
        %v3160 = vsel %vm1283, %v3072, %v3120
        %v3161 = vsel %vm1283, %v3074, %v3122
        %v3162 = vsel %vm1283, %v3076, %v3124
        %v3163 = vsel %vm1283, %v3078, %v3126
        %v3164 = vsel %vm1283, %v3080, %v3128
        %v3165 = vsel %vm1283, %v3082, %v3130
        %v3166 = vsel %vm1283, %v3084, %v3132
        %v3167 = vsel %vm1283, %v3086, %v3134
        %v3168 = vsel %vm1283, %v3088, %v3136
        %v3169 = vmul.f32 %v3153, %v1091
        %v3170 = vmul.f32 %v3154, %v1092
        %v3171 = vmul.f32 %v3155, %v1093
        %v3172 = vmul.f32 %v3156, %v1094
        %v3173 = vmul.f32 %v3157, %v1095
        %v3174 = vmul.f32 %v3158, %v1096
        %v3175 = vmul.f32 %v3159, %v1097
        %v3176 = vmul.f32 %v3160, %v1098
        %v3177 = vmul.f32 %v3161, %v1099
        %v3178 = vmul.f32 %v3162, %v1100
        %v3179 = vmul.f32 %v3163, %v1101
        %v3180 = vmul.f32 %v3164, %v1102
        %v3181 = vmul.f32 %v3165, %v1103
        %v3182 = vmul.f32 %v3166, %v1104
        %v3183 = vmul.f32 %v3167, %v1105
        %v3184 = vmul.f32 %v3168, %v1106
        %3201 = vrot.lane.b32.xlu0 %v3169, 64
        %v3202 = vpop.permute.xlu0 %3201
        %3203 = vrot.lane.b32.xlu0 %v3170, 64
        %v3204 = vpop.permute.xlu0 %3203
        %3205 = vrot.lane.b32.xlu0 %v3171, 64
        %v3206 = vpop.permute.xlu0 %3205
        %3207 = vrot.lane.b32.xlu0 %v3172, 64
        %v3208 = vpop.permute.xlu0 %3207
        %3209 = vrot.lane.b32.xlu0 %v3173, 64
        %v3210 = vpop.permute.xlu0 %3209
        %3211 = vrot.lane.b32.xlu0 %v3174, 64
        %v3212 = vpop.permute.xlu0 %3211
        %3213 = vrot.lane.b32.xlu0 %v3175, 64
        %v3214 = vpop.permute.xlu0 %3213
        %3215 = vrot.lane.b32.xlu0 %v3176, 64
        %v3216 = vpop.permute.xlu0 %3215
        %3217 = vrot.lane.b32.xlu0 %v3177, 64
        %v3218 = vpop.permute.xlu0 %3217
        %3219 = vrot.lane.b32.xlu0 %v3178, 64
        %v3220 = vpop.permute.xlu0 %3219
        %3221 = vrot.lane.b32.xlu0 %v3179, 64
        %v3222 = vpop.permute.xlu0 %3221
        %3223 = vrot.lane.b32.xlu0 %v3180, 64
        %v3224 = vpop.permute.xlu0 %3223
        %3225 = vrot.lane.b32.xlu0 %v3181, 64
        %v3226 = vpop.permute.xlu0 %3225
        %3227 = vrot.lane.b32.xlu0 %v3182, 64
        %v3228 = vpop.permute.xlu0 %3227
        %3229 = vrot.lane.b32.xlu0 %v3183, 64
        %v3230 = vpop.permute.xlu0 %3229
        %3231 = vrot.lane.b32.xlu0 %v3184, 64
        %v3232 = vpop.permute.xlu0 %3231
        %v3249 = vadd.f32 %v3041, %v3202
        %v3250 = vadd.f32 %v3042, %v3204
        %v3251 = vadd.f32 %v3043, %v3206
        %v3252 = vadd.f32 %v3044, %v3208
        %v3253 = vadd.f32 %v3045, %v3210
        %v3254 = vadd.f32 %v3046, %v3212
        %v3255 = vadd.f32 %v3047, %v3214
        %v3256 = vadd.f32 %v3048, %v3216
        %v3257 = vadd.f32 %v3049, %v3218
        %v3258 = vadd.f32 %v3050, %v3220
        %v3259 = vadd.f32 %v3051, %v3222
        %v3260 = vadd.f32 %v3052, %v3224
        %v3261 = vadd.f32 %v3053, %v3226
        %v3262 = vadd.f32 %v3054, %v3228
        %v3263 = vadd.f32 %v3055, %v3230
        %v3264 = vadd.f32 %v3056, %v3232
        %v3265 = vmul.f32 %v902, %v2994
        %v3266 = vmul.f32 %v906, %v2996
        %v3267 = vmul.f32 %v912, %v2998
        %v3268 = vmul.f32 %v916, %v3000
        %v3269 = vmul.f32 %v922, %v3002
        %v3270 = vmul.f32 %v926, %v3004
        %v3271 = vmul.f32 %v932, %v3006
        %v3272 = vmul.f32 %v936, %v3008
        %v3273 = vmul.f32 %v942, %v3010
        %v3274 = vmul.f32 %v946, %v3012
        %v3275 = vmul.f32 %v952, %v3014
        %v3276 = vmul.f32 %v956, %v3016
        %v3277 = vmul.f32 %v962, %v3018
        %v3278 = vmul.f32 %v966, %v3020
        %v3279 = vmul.f32 %v972, %v3022
        %v3280 = vmul.f32 %v976, %v3024
        %3281 = vrot.lane.b32.xlu0 %v1348, 48
        %v3282 = vpop.permute.xlu0 %3281
        %3283 = vrot.lane.b32.xlu0 %v1349, 48
        %v3284 = vpop.permute.xlu0 %3283
        %3285 = vrot.lane.b32.xlu0 %v1350, 48
        %v3286 = vpop.permute.xlu0 %3285
        %3287 = vrot.lane.b32.xlu0 %v1351, 48
        %v3288 = vpop.permute.xlu0 %3287
        %3289 = vrot.lane.b32.xlu0 %v1352, 48
        %v3290 = vpop.permute.xlu0 %3289
        %3291 = vrot.lane.b32.xlu0 %v1353, 48
        %v3292 = vpop.permute.xlu0 %3291
        %3293 = vrot.lane.b32.xlu0 %v1354, 48
        %v3294 = vpop.permute.xlu0 %3293
        %3295 = vrot.lane.b32.xlu0 %v1355, 48
        %v3296 = vpop.permute.xlu0 %3295
        %3297 = vrot.lane.b32.xlu0 %v1356, 48
        %v3298 = vpop.permute.xlu0 %3297
        %3299 = vrot.lane.b32.xlu0 %v1357, 48
        %v3300 = vpop.permute.xlu0 %3299
        %3301 = vrot.lane.b32.xlu0 %v1358, 48
        %v3302 = vpop.permute.xlu0 %3301
        %3303 = vrot.lane.b32.xlu0 %v1359, 48
        %v3304 = vpop.permute.xlu0 %3303
        %3305 = vrot.lane.b32.xlu0 %v1360, 48
        %v3306 = vpop.permute.xlu0 %3305
        %3307 = vrot.lane.b32.xlu0 %v1361, 48
        %v3308 = vpop.permute.xlu0 %3307
        %3309 = vrot.lane.b32.xlu0 %v1362, 48
        %v3310 = vpop.permute.xlu0 %3309
        %3311 = vrot.lane.b32.xlu0 %v1363, 48
        %v3312 = vpop.permute.xlu0 %3311
        %3329 = vrot.lane.b32.xlu0 %v902, 80
        %v3330 = vpop.permute.xlu0 %3329
        %3331 = vrot.lane.b32.xlu0 %v906, 80
        %v3332 = vpop.permute.xlu0 %3331
        %3333 = vrot.lane.b32.xlu0 %v912, 80
        %v3334 = vpop.permute.xlu0 %3333
        %3335 = vrot.lane.b32.xlu0 %v916, 80
        %v3336 = vpop.permute.xlu0 %3335
        %3337 = vrot.lane.b32.xlu0 %v922, 80
        %v3338 = vpop.permute.xlu0 %3337
        %3339 = vrot.lane.b32.xlu0 %v926, 80
        %v3340 = vpop.permute.xlu0 %3339
        %3341 = vrot.lane.b32.xlu0 %v932, 80
        %v3342 = vpop.permute.xlu0 %3341
        %3343 = vrot.lane.b32.xlu0 %v936, 80
        %v3344 = vpop.permute.xlu0 %3343
        %3345 = vrot.lane.b32.xlu0 %v942, 80
        %v3346 = vpop.permute.xlu0 %3345
        %3347 = vrot.lane.b32.xlu0 %v946, 80
        %v3348 = vpop.permute.xlu0 %3347
        %3349 = vrot.lane.b32.xlu0 %v952, 80
        %v3350 = vpop.permute.xlu0 %3349
        %3351 = vrot.lane.b32.xlu0 %v956, 80
        %v3352 = vpop.permute.xlu0 %3351
        %3353 = vrot.lane.b32.xlu0 %v962, 80
        %v3354 = vpop.permute.xlu0 %3353
        %3355 = vrot.lane.b32.xlu0 %v966, 80
        %v3356 = vpop.permute.xlu0 %3355
        %3357 = vrot.lane.b32.xlu0 %v972, 80
        %v3358 = vpop.permute.xlu0 %3357
        %3359 = vrot.lane.b32.xlu0 %v976, 80
        %v3360 = vpop.permute.xlu0 %3359
        %v3377 = vsel %vm1283, %v3282, %v3330
        %v3378 = vsel %vm1283, %v3284, %v3332
        %v3379 = vsel %vm1283, %v3286, %v3334
        %v3380 = vsel %vm1283, %v3288, %v3336
        %v3381 = vsel %vm1283, %v3290, %v3338
        %v3382 = vsel %vm1283, %v3292, %v3340
        %v3383 = vsel %vm1283, %v3294, %v3342
        %v3384 = vsel %vm1283, %v3296, %v3344
        %v3385 = vsel %vm1283, %v3298, %v3346
        %v3386 = vsel %vm1283, %v3300, %v3348
        %v3387 = vsel %vm1283, %v3302, %v3350
        %v3388 = vsel %vm1283, %v3304, %v3352
        %v3389 = vsel %vm1283, %v3306, %v3354
        %v3390 = vsel %vm1283, %v3308, %v3356
        %v3391 = vsel %vm1283, %v3310, %v3358
        %v3392 = vsel %vm1283, %v3312, %v3360
        %v3393 = vmul.f32 %v3377, %v1091
        %v3394 = vmul.f32 %v3378, %v1092
        %v3395 = vmul.f32 %v3379, %v1093
        %v3396 = vmul.f32 %v3380, %v1094
        %v3397 = vmul.f32 %v3381, %v1095
        %v3398 = vmul.f32 %v3382, %v1096
        %v3399 = vmul.f32 %v3383, %v1097
        %v3400 = vmul.f32 %v3384, %v1098
        %v3401 = vmul.f32 %v3385, %v1099
        %v3402 = vmul.f32 %v3386, %v1100
        %v3403 = vmul.f32 %v3387, %v1101
        %v3404 = vmul.f32 %v3388, %v1102
        %v3405 = vmul.f32 %v3389, %v1103
        %v3406 = vmul.f32 %v3390, %v1104
        %v3407 = vmul.f32 %v3391, %v1105
        %v3408 = vmul.f32 %v3392, %v1106
        %3425 = vrot.lane.b32.xlu0 %v3393, 64
        %v3426 = vpop.permute.xlu0 %3425
        %3427 = vrot.lane.b32.xlu0 %v3394, 64
        %v3428 = vpop.permute.xlu0 %3427
        %3429 = vrot.lane.b32.xlu0 %v3395, 64
        %v3430 = vpop.permute.xlu0 %3429
        %3431 = vrot.lane.b32.xlu0 %v3396, 64
        %v3432 = vpop.permute.xlu0 %3431
        %3433 = vrot.lane.b32.xlu0 %v3397, 64
        %v3434 = vpop.permute.xlu0 %3433
        %3435 = vrot.lane.b32.xlu0 %v3398, 64
        %v3436 = vpop.permute.xlu0 %3435
        %3437 = vrot.lane.b32.xlu0 %v3399, 64
        %v3438 = vpop.permute.xlu0 %3437
        %3439 = vrot.lane.b32.xlu0 %v3400, 64
        %v3440 = vpop.permute.xlu0 %3439
        %3441 = vrot.lane.b32.xlu0 %v3401, 64
        %v3442 = vpop.permute.xlu0 %3441
        %3443 = vrot.lane.b32.xlu0 %v3402, 64
        %v3444 = vpop.permute.xlu0 %3443
        %3445 = vrot.lane.b32.xlu0 %v3403, 64
        %v3446 = vpop.permute.xlu0 %3445
        %3447 = vrot.lane.b32.xlu0 %v3404, 64
        %v3448 = vpop.permute.xlu0 %3447
        %3449 = vrot.lane.b32.xlu0 %v3405, 64
        %v3450 = vpop.permute.xlu0 %3449
        %3451 = vrot.lane.b32.xlu0 %v3406, 64
        %v3452 = vpop.permute.xlu0 %3451
        %3453 = vrot.lane.b32.xlu0 %v3407, 64
        %v3454 = vpop.permute.xlu0 %3453
        %3455 = vrot.lane.b32.xlu0 %v3408, 64
        %v3456 = vpop.permute.xlu0 %3455
        %v3473 = vadd.f32 %v3265, %v3426
        %v3474 = vadd.f32 %v3266, %v3428
        %v3475 = vadd.f32 %v3267, %v3430
        %v3476 = vadd.f32 %v3268, %v3432
        %v3477 = vadd.f32 %v3269, %v3434
        %v3478 = vadd.f32 %v3270, %v3436
        %v3479 = vadd.f32 %v3271, %v3438
        %v3480 = vadd.f32 %v3272, %v3440
        %v3481 = vadd.f32 %v3273, %v3442
        %v3482 = vadd.f32 %v3274, %v3444
        %v3483 = vadd.f32 %v3275, %v3446
        %v3484 = vadd.f32 %v3276, %v3448
        %v3485 = vadd.f32 %v3277, %v3450
        %v3486 = vadd.f32 %v3278, %v3452
        %v3487 = vadd.f32 %v3279, %v3454
        %v3488 = vadd.f32 %v3280, %v3456
        %v3489 = vmul.f32 %v3249, 0.17677669
        %v3490 = vmul.f32 %v3250, 0.17677669
        %v3491 = vmul.f32 %v3251, 0.17677669
        %v3492 = vmul.f32 %v3252, 0.17677669
        %v3493 = vmul.f32 %v3253, 0.17677669
        %v3494 = vmul.f32 %v3254, 0.17677669
        %v3495 = vmul.f32 %v3255, 0.17677669
        %v3496 = vmul.f32 %v3256, 0.17677669
        %v3497 = vmul.f32 %v3257, 0.17677669
        %v3498 = vmul.f32 %v3258, 0.17677669
        %v3499 = vmul.f32 %v3259, 0.17677669
        %v3500 = vmul.f32 %v3260, 0.17677669
        %v3501 = vmul.f32 %v3261, 0.17677669
        %v3502 = vmul.f32 %v3262, 0.17677669
        %v3503 = vmul.f32 %v3263, 0.17677669
        %v3504 = vmul.f32 %v3264, 0.17677669
        %v3505 = vpack.c.bf16 %v3490, %v3489
        %v3506 = vpack.c.bf16 %v3492, %v3491
        %v3507 = vpack.c.bf16 %v3494, %v3493
        %v3508 = vpack.c.bf16 %v3496, %v3495
        %v3509 = vpack.c.bf16 %v3498, %v3497
        %v3510 = vpack.c.bf16 %v3500, %v3499
        %v3511 = vpack.c.bf16 %v3502, %v3501
        %v3512 = vpack.c.bf16 %v3504, %v3503
        %v3513 = vpack.c.bf16 %v3474, %v3473
        %v3514 = vpack.c.bf16 %v3476, %v3475
        %v3515 = vpack.c.bf16 %v3478, %v3477
        %v3516 = vpack.c.bf16 %v3480, %v3479
        %v3517 = vpack.c.bf16 %v3482, %v3481
        %v3518 = vpack.c.bf16 %v3484, %v3483
        %v3519 = vpack.c.bf16 %v3486, %v3485
        %v3520 = vpack.c.bf16 %v3488, %v3487
        %3529 = vrot.lane.b32.xlu0 %v3505, 64
        %v3530 = vpop.permute.xlu0 %3529
        %3531 = vrot.lane.b32.xlu0 %v3506, 64
        %v3532 = vpop.permute.xlu0 %3531
        %3533 = vrot.lane.b32.xlu0 %v3507, 64
        %v3534 = vpop.permute.xlu0 %3533
        %3535 = vrot.lane.b32.xlu0 %v3508, 64
        %v3536 = vpop.permute.xlu0 %3535
        %3537 = vrot.lane.b32.xlu0 %v3509, 64
        %v3538 = vpop.permute.xlu0 %3537
        %3539 = vrot.lane.b32.xlu0 %v3510, 64
        %v3540 = vpop.permute.xlu0 %3539
        %3541 = vrot.lane.b32.xlu0 %v3511, 64
        %v3542 = vpop.permute.xlu0 %3541
        %3543 = vrot.lane.b32.xlu0 %v3512, 64
        %v3544 = vpop.permute.xlu0 %3543
        %3553 = vrot.lane.b32.xlu0 %v3513, 64
        %v3554 = vpop.permute.xlu0 %3553
        %3555 = vrot.lane.b32.xlu0 %v3514, 64
        %v3556 = vpop.permute.xlu0 %3555
        %3557 = vrot.lane.b32.xlu0 %v3515, 64
        %v3558 = vpop.permute.xlu0 %3557
        %3559 = vrot.lane.b32.xlu0 %v3516, 64
        %v3560 = vpop.permute.xlu0 %3559
        %3561 = vrot.lane.b32.xlu0 %v3517, 64
        %v3562 = vpop.permute.xlu0 %3561
        %3563 = vrot.lane.b32.xlu0 %v3518, 64
        %v3564 = vpop.permute.xlu0 %3563
        %3565 = vrot.lane.b32.xlu0 %v3519, 64
        %v3566 = vpop.permute.xlu0 %3565
        %3567 = vrot.lane.b32.xlu0 %v3520, 64
        %v3568 = vpop.permute.xlu0 %3567
        %v3570 = vsel %vm1572, %v3530, 0
        %v3573 = vsel %vm1572, %v3532, 0
        %v3576 = vsel %vm1572, %v3534, 0
        %v3579 = vsel %vm1572, %v3536, 0
        %v3582 = vsel %vm1572, %v3538, 0
        %v3585 = vsel %vm1572, %v3540, 0
        %v3588 = vsel %vm1572, %v3542, 0
        %v3591 = vsel %vm1572, %v3544, 0
        %v3594 = vsel %vm1572, %v3554, 0
        %v3597 = vsel %vm1572, %v3556, 0
        %v3600 = vsel %vm1572, %v3558, 0
        %v3603 = vsel %vm1572, %v3560, 0
        %v3606 = vsel %vm1572, %v3562, 0
        %v3609 = vsel %vm1572, %v3564, 0
        %v3612 = vsel %vm1572, %v3566, 0
        %v3615 = vsel %vm1572, %v3568, 0
        %3617 = vmatprep.subr.bf16.mxu0 0
        %3618 = vmatpush1.bf16.xpose.msra.mxu0 %v3594
        %3619 = vmatprep.subr.bf16.mxu0 0
        %3620 = vmatpush1.bf16.xpose.msra.mxu0 %v3597
        %3621 = vmatprep.subr.bf16.mxu0 0
        %3622 = vmatpush1.bf16.xpose.msra.mxu0 %v3600
        %3623 = vmatprep.subr.bf16.mxu0 0
        %3624 = vmatpush1.bf16.xpose.msra.mxu0 %v3603
        %3625 = vmatprep.subr.bf16.mxu0 0
        %3626 = vmatpush1.bf16.xpose.msra.mxu0 %v3606
        %3627 = vmatprep.subr.bf16.mxu0 0
        %3628 = vmatpush1.bf16.xpose.msra.mxu0 %v3609
        %3629 = vmatprep.subr.bf16.mxu0 0
        %3630 = vmatpush1.bf16.xpose.msra.mxu0 %v3612
        %3631 = vmatprep.subr.bf16.mxu0 0
        %3632 = vmatpush1.bf16.xpose.msra.mxu0 %v3615
        %3633 = vmatprep.subr.bf16.mxu0 0
        %3634 = vmatpush1.bf16.xpose.msra.mxu0 0
        %3635 = vmatprep.subr.bf16.mxu0 0
        %3636 = vmatpush1.bf16.xpose.msra.mxu0 0
        %3637 = vmatprep.subr.bf16.mxu0 0
        %3638 = vmatpush1.bf16.xpose.msra.mxu0 0
        %3639 = vmatprep.subr.bf16.mxu0 0
        %3640 = vmatpush1.bf16.xpose.msra.mxu0 0
        %3641 = vmatprep.subr.bf16.mxu0 0
        %3642 = vmatpush1.bf16.xpose.msra.mxu0 0
        %3643 = vmatprep.subr.bf16.mxu0 0
        %3644 = vmatpush1.bf16.xpose.msra.mxu0 0
        %3645 = vmatprep.subr.bf16.mxu0 0
        %3646 = vmatpush1.bf16.xpose.msra.mxu0 0
        %3647 = vmatprep.subr.bf16.mxu0 0
        %3648 = vmatpush1.bf16.xpose.msra.mxu0 0
        %3649 = vmatprep.mubr.bf16.mxu0 0
        %3650 = vmatmul.mubr.bf16.gmra.mrb[0].mxu0 %v3570
        %v3651 = vpop.f32.mrb[0].mxu0
        %v3652 = vadd.f32 %v1107, %v3651
        %v3653 = vpop.f32.mrb[0].mxu0
        %v3654 = vpop.f32.mrb[0].mxu0
        %v3655 = vadd.f32 %v1108, %v3654
        %v3656 = vpop.f32.mrb[0].mxu0
        %3657 = vmatprep.mubr.bf16.mxu0 0
        %3658 = vmatmul.mubr.bf16.gmra.mrb[0].mxu0 %v3573
        %v3659 = vpop.f32.mrb[0].mxu0
        %v3660 = vadd.f32 %v1109, %v3659
        %v3661 = vpop.f32.mrb[0].mxu0
        %v3662 = vpop.f32.mrb[0].mxu0
        %v3663 = vadd.f32 %v1110, %v3662
        %v3664 = vpop.f32.mrb[0].mxu0
        %3665 = vmatprep.mubr.bf16.mxu0 0
        %3666 = vmatmul.mubr.bf16.gmra.mrb[0].mxu0 %v3576
        %v3667 = vpop.f32.mrb[0].mxu0
        %v3668 = vadd.f32 %v1111, %v3667
        %v3669 = vpop.f32.mrb[0].mxu0
        %v3670 = vpop.f32.mrb[0].mxu0
        %v3671 = vadd.f32 %v1112, %v3670
        %v3672 = vpop.f32.mrb[0].mxu0
        %3673 = vmatprep.mubr.bf16.mxu0 0
        %3674 = vmatmul.mubr.bf16.gmra.mrb[0].mxu0 %v3579
        %v3675 = vpop.f32.mrb[0].mxu0
        %v3676 = vadd.f32 %v1113, %v3675
        %v3677 = vpop.f32.mrb[0].mxu0
        %v3678 = vpop.f32.mrb[0].mxu0
        %v3679 = vadd.f32 %v1114, %v3678
        %v3680 = vpop.f32.mrb[0].mxu0
        %3681 = vmatprep.mubr.bf16.mxu0 0
        %3682 = vmatmul.mubr.bf16.gmra.mrb[0].mxu0 %v3582
        %v3683 = vpop.f32.mrb[0].mxu0
        %v3684 = vadd.f32 %v1115, %v3683
        %v3685 = vpop.f32.mrb[0].mxu0
        %v3686 = vpop.f32.mrb[0].mxu0
        %v3687 = vadd.f32 %v1116, %v3686
        %v3688 = vpop.f32.mrb[0].mxu0
        %3689 = vmatprep.mubr.bf16.mxu0 0
        %3690 = vmatmul.mubr.bf16.gmra.mrb[0].mxu0 %v3585
        %v3691 = vpop.f32.mrb[0].mxu0
        %v3692 = vadd.f32 %v1117, %v3691
        %v3693 = vpop.f32.mrb[0].mxu0
        %v3694 = vpop.f32.mrb[0].mxu0
        %v3695 = vadd.f32 %v1118, %v3694
        %v3696 = vpop.f32.mrb[0].mxu0
        %3697 = vmatprep.mubr.bf16.mxu0 0
        %3698 = vmatmul.mubr.bf16.gmra.mrb[0].mxu0 %v3588
        %v3699 = vpop.f32.mrb[0].mxu0
        %v3700 = vadd.f32 %v1119, %v3699
        %v3701 = vpop.f32.mrb[0].mxu0
        %v3702 = vpop.f32.mrb[0].mxu0
        %v3703 = vadd.f32 %v1120, %v3702
        %v3704 = vpop.f32.mrb[0].mxu0
        %3705 = vmatprep.mubr.bf16.mxu0 0
        %3706 = vmatmul.mubr.bf16.gmra.mrb[0].mxu0 %v3591
        %v3707 = vpop.f32.mrb[0].mxu0
        %v3708 = vadd.f32 %v1121, %v3707
        %v3709 = vpop.f32.mrb[0].mxu0
        %v3710 = vpop.f32.mrb[0].mxu0
        %v3711 = vadd.f32 %v1122, %v3710
        %v3712 = vpop.f32.mrb[0].mxu0
        %3713 = vdwg.mxu0
        %3714 = vmax.xlane.f32.xlu0 %v3652
        %v3715 = vpop.xlane.xlu0 %3714
        %3716 = vmax.xlane.f32.xlu0 %v3655
        %v3717 = vpop.xlane.xlu0 %3716
        %3718 = vmax.xlane.f32.xlu0 %v3660
        %v3719 = vpop.xlane.xlu0 %3718
        %3720 = vmax.xlane.f32.xlu0 %v3663
        %v3721 = vpop.xlane.xlu0 %3720
        %3722 = vmax.xlane.f32.xlu0 %v3668
        %v3723 = vpop.xlane.xlu0 %3722
        %3724 = vmax.xlane.f32.xlu0 %v3671
        %v3725 = vpop.xlane.xlu0 %3724
        %3726 = vmax.xlane.f32.xlu0 %v3676
        %v3727 = vpop.xlane.xlu0 %3726
        %3728 = vmax.xlane.f32.xlu0 %v3679
        %v3729 = vpop.xlane.xlu0 %3728
        %3730 = vmax.xlane.f32.xlu0 %v3684
        %v3731 = vpop.xlane.xlu0 %3730
        %3732 = vmax.xlane.f32.xlu0 %v3687
        %v3733 = vpop.xlane.xlu0 %3732
        %3734 = vmax.xlane.f32.xlu0 %v3692
        %v3735 = vpop.xlane.xlu0 %3734
        %3736 = vmax.xlane.f32.xlu0 %v3695
        %v3737 = vpop.xlane.xlu0 %3736
        %3738 = vmax.xlane.f32.xlu0 %v3700
        %v3739 = vpop.xlane.xlu0 %3738
        %3740 = vmax.xlane.f32.xlu0 %v3703
        %v3741 = vpop.xlane.xlu0 %3740
        %3742 = vmax.xlane.f32.xlu0 %v3708
        %v3743 = vpop.xlane.xlu0 %3742
        %3744 = vmax.xlane.f32.xlu0 %v3711
        %v3745 = vpop.xlane.xlu0 %3744
        %v3746 = vsub.f32 %v3652, %v3715
        %v3747 = vsub.f32 %v3655, %v3717
        %v3748 = vsub.f32 %v3660, %v3719
        %v3749 = vsub.f32 %v3663, %v3721
        %v3750 = vsub.f32 %v3668, %v3723
        %v3751 = vsub.f32 %v3671, %v3725
        %v3752 = vsub.f32 %v3676, %v3727
        %v3753 = vsub.f32 %v3679, %v3729
        %v3754 = vsub.f32 %v3684, %v3731
        %v3755 = vsub.f32 %v3687, %v3733
        %v3756 = vsub.f32 %v3692, %v3735
        %v3757 = vsub.f32 %v3695, %v3737
        %v3758 = vsub.f32 %v3700, %v3739
        %v3759 = vsub.f32 %v3703, %v3741
        %v3760 = vsub.f32 %v3708, %v3743
        %v3761 = vsub.f32 %v3711, %v3745
        %v3762 = vmul.f32 %v3746, 1.442695
        %v3763 = vpow.pop %v3762
        %v3764 = vmul.f32 %v3747, 1.442695
        %v3765 = vpow.pop %v3764
        %v3766 = vmul.f32 %v3748, 1.442695
        %v3767 = vpow.pop %v3766
        %v3768 = vmul.f32 %v3749, 1.442695
        %v3769 = vpow.pop %v3768
        %v3770 = vmul.f32 %v3750, 1.442695
        %v3771 = vpow.pop %v3770
        %v3772 = vmul.f32 %v3751, 1.442695
        %v3773 = vpow.pop %v3772
        %v3774 = vmul.f32 %v3752, 1.442695
        %v3775 = vpow.pop %v3774
        %v3776 = vmul.f32 %v3753, 1.442695
        %v3777 = vpow.pop %v3776
        %v3778 = vmul.f32 %v3754, 1.442695
        %v3779 = vpow.pop %v3778
        %v3780 = vmul.f32 %v3755, 1.442695
        %v3781 = vpow.pop %v3780
        %v3782 = vmul.f32 %v3756, 1.442695
        %v3783 = vpow.pop %v3782
        %v3784 = vmul.f32 %v3757, 1.442695
        %v3785 = vpow.pop %v3784
        %v3786 = vmul.f32 %v3758, 1.442695
        %v3787 = vpow.pop %v3786
        %v3788 = vmul.f32 %v3759, 1.442695
        %v3789 = vpow.pop %v3788
        %v3790 = vmul.f32 %v3760, 1.442695
        %v3791 = vpow.pop %v3790
        %v3792 = vmul.f32 %v3761, 1.442695
        %v3793 = vpow.pop %v3792
        %3794 = vadd.xlane.f32.xlu0 %v3763
        %v3795 = vpop.xlane.xlu0 %3794
        %3796 = vadd.xlane.f32.xlu0 %v3765
        %v3797 = vpop.xlane.xlu0 %3796
        %3798 = vadd.xlane.f32.xlu0 %v3767
        %v3799 = vpop.xlane.xlu0 %3798
        %3800 = vadd.xlane.f32.xlu0 %v3769
        %v3801 = vpop.xlane.xlu0 %3800
        %3802 = vadd.xlane.f32.xlu0 %v3771
        %v3803 = vpop.xlane.xlu0 %3802
        %3804 = vadd.xlane.f32.xlu0 %v3773
        %v3805 = vpop.xlane.xlu0 %3804
        %3806 = vadd.xlane.f32.xlu0 %v3775
        %v3807 = vpop.xlane.xlu0 %3806
        %3808 = vadd.xlane.f32.xlu0 %v3777
        %v3809 = vpop.xlane.xlu0 %3808
        %3810 = vadd.xlane.f32.xlu0 %v3779
        %v3811 = vpop.xlane.xlu0 %3810
        %3812 = vadd.xlane.f32.xlu0 %v3781
        %v3813 = vpop.xlane.xlu0 %3812
        %3814 = vadd.xlane.f32.xlu0 %v3783
        %v3815 = vpop.xlane.xlu0 %3814
        %3816 = vadd.xlane.f32.xlu0 %v3785
        %v3817 = vpop.xlane.xlu0 %3816
        %3818 = vadd.xlane.f32.xlu0 %v3787
        %v3819 = vpop.xlane.xlu0 %3818
        %3820 = vadd.xlane.f32.xlu0 %v3789
        %v3821 = vpop.xlane.xlu0 %3820
        %3822 = vadd.xlane.f32.xlu0 %v3791
        %v3823 = vpop.xlane.xlu0 %3822
        %3824 = vadd.xlane.f32.xlu0 %v3793
        %v3825 = vpop.xlane.xlu0 %3824
        %v3826 = vrcp.pop %v3795
        %v3827 = vrcp.pop %v3797
        %v3828 = vrcp.pop %v3799
        %v3829 = vrcp.pop %v3801
        %v3830 = vrcp.pop %v3803
        %v3831 = vrcp.pop %v3805
        %v3832 = vrcp.pop %v3807
        %v3833 = vrcp.pop %v3809
        %v3834 = vrcp.pop %v3811
        %v3835 = vrcp.pop %v3813
        %v3836 = vrcp.pop %v3815
        %v3837 = vrcp.pop %v3817
        %v3838 = vrcp.pop %v3819
        %v3839 = vrcp.pop %v3821
        %v3840 = vrcp.pop %v3823
        %v3841 = vrcp.pop %v3825
        %v3842 = vmul.f32 %v3763, %v3826
        %v3843 = vmul.f32 %v3765, %v3827
        %v3844 = vmul.f32 %v3767, %v3828
        %v3845 = vmul.f32 %v3769, %v3829
        %v3846 = vmul.f32 %v3771, %v3830
        %v3847 = vmul.f32 %v3773, %v3831
        %v3848 = vmul.f32 %v3775, %v3832
        %v3849 = vmul.f32 %v3777, %v3833
        %v3850 = vmul.f32 %v3779, %v3834
        %v3851 = vmul.f32 %v3781, %v3835
        %v3852 = vmul.f32 %v3783, %v3836
        %v3853 = vmul.f32 %v3785, %v3837
        %v3854 = vmul.f32 %v3787, %v3838
        %v3855 = vmul.f32 %v3789, %v3839
        %v3856 = vmul.f32 %v3791, %v3840
        %v3857 = vmul.f32 %v3793, %v3841
        %v3858 = vpack.c.bf16 %v3843, %v3842
        %v3859 = vpack.c.bf16 %v3845, %v3844
        %v3860 = vpack.c.bf16 %v3847, %v3846
        %v3861 = vpack.c.bf16 %v3849, %v3848
        %v3862 = vpack.c.bf16 %v3851, %v3850
        %v3863 = vpack.c.bf16 %v3853, %v3852
        %v3864 = vpack.c.bf16 %v3855, %v3854
        %v3865 = vpack.c.bf16 %v3857, %v3856
        %3866 = vrot.lane.b32.xlu0 %v1870, 64
        %v3867 = vpop.permute.xlu0 %3866
        %3868 = vrot.lane.b32.xlu0 %v1871, 64
        %v3869 = vpop.permute.xlu0 %3868
        %3870 = vrot.lane.b32.xlu0 %v1872, 64
        %v3871 = vpop.permute.xlu0 %3870
        %3872 = vrot.lane.b32.xlu0 %v1873, 64
        %v3873 = vpop.permute.xlu0 %3872
        %3874 = vrot.lane.b32.xlu0 %v1874, 64
        %v3875 = vpop.permute.xlu0 %3874
        %3876 = vrot.lane.b32.xlu0 %v1875, 64
        %v3877 = vpop.permute.xlu0 %3876
        %3878 = vrot.lane.b32.xlu0 %v1876, 64
        %v3879 = vpop.permute.xlu0 %3878
        %3880 = vrot.lane.b32.xlu0 %v1877, 64
        %v3881 = vpop.permute.xlu0 %3880
        %3890 = vmatprep.subr.bf16.mxu0 0
        %3891 = vmatpush1.bf16.msra.mxu0 %v3867
        %3892 = vmatprep.subr.bf16.mxu0 0
        %3893 = vmatpush1.bf16.msra.mxu0 %v3869
        %3894 = vmatprep.subr.bf16.mxu0 0
        %3895 = vmatpush1.bf16.msra.mxu0 %v3871
        %3896 = vmatprep.subr.bf16.mxu0 0
        %3897 = vmatpush1.bf16.msra.mxu0 %v3873
        %3898 = vmatprep.subr.bf16.mxu0 0
        %3899 = vmatpush1.bf16.msra.mxu0 %v3875
        %3900 = vmatprep.subr.bf16.mxu0 0
        %3901 = vmatpush1.bf16.msra.mxu0 %v3877
        %3902 = vmatprep.subr.bf16.mxu0 0
        %3903 = vmatpush1.bf16.msra.mxu0 %v3879
        %3904 = vmatprep.subr.bf16.mxu0 0
        %3905 = vmatpush1.bf16.msra.mxu0 %v3881
        %3906 = vmatprep.subr.bf16.mxu0 0
        %3907 = vmatpush1.bf16.msra.mxu0 0
        %3908 = vmatprep.subr.bf16.mxu0 0
        %3909 = vmatpush1.bf16.msra.mxu0 0
        %3910 = vmatprep.subr.bf16.mxu0 0
        %3911 = vmatpush1.bf16.msra.mxu0 0
        %3912 = vmatprep.subr.bf16.mxu0 0
        %3913 = vmatpush1.bf16.msra.mxu0 0
        %3914 = vmatprep.subr.bf16.mxu0 0
        %3915 = vmatpush1.bf16.msra.mxu0 0
        %3916 = vmatprep.subr.bf16.mxu0 0
        %3917 = vmatpush1.bf16.msra.mxu0 0
        %3918 = vmatprep.subr.bf16.mxu0 0
        %3919 = vmatpush1.bf16.msra.mxu0 0
        %3920 = vmatprep.subr.bf16.mxu0 0
        %3921 = vmatpush1.bf16.msra.mxu0 0
        %3922 = vmatprep.mubr.bf16.mxu0 0
        %3923 = vmatmul.mubr.bf16.gmra.mrb[0].mxu0 %v3858
        %v3924 = vpop.f32.mrb[0].mxu0
        %v3925 = vadd.f32 0.0, %v3924
        %v3926 = vpop.f32.mrb[0].mxu0
        %v3927 = vpop.f32.mrb[0].mxu0
        %v3928 = vadd.f32 0.0, %v3927
        %v3929 = vpop.f32.mrb[0].mxu0
        %3930 = vmatprep.mubr.bf16.mxu0 0
        %3931 = vmatmul.mubr.bf16.gmra.mrb[0].mxu0 %v3859
        %v3932 = vpop.f32.mrb[0].mxu0
        %v3933 = vadd.f32 0.0, %v3932
        %v3934 = vpop.f32.mrb[0].mxu0
        %v3935 = vpop.f32.mrb[0].mxu0
        %v3936 = vadd.f32 0.0, %v3935
        %v3937 = vpop.f32.mrb[0].mxu0
        %3938 = vmatprep.mubr.bf16.mxu0 0
        %3939 = vmatmul.mubr.bf16.gmra.mrb[0].mxu0 %v3860
        %v3940 = vpop.f32.mrb[0].mxu0
        %v3941 = vadd.f32 0.0, %v3940
        %v3942 = vpop.f32.mrb[0].mxu0
        %v3943 = vpop.f32.mrb[0].mxu0
        %v3944 = vadd.f32 0.0, %v3943
        %v3945 = vpop.f32.mrb[0].mxu0
        %3946 = vmatprep.mubr.bf16.mxu0 0
        %3947 = vmatmul.mubr.bf16.gmra.mrb[0].mxu0 %v3861
        %v3948 = vpop.f32.mrb[0].mxu0
        %v3949 = vadd.f32 0.0, %v3948
        %v3950 = vpop.f32.mrb[0].mxu0
        %v3951 = vpop.f32.mrb[0].mxu0
        %v3952 = vadd.f32 0.0, %v3951
        %v3953 = vpop.f32.mrb[0].mxu0
        %3954 = vmatprep.mubr.bf16.mxu0 0
        %3955 = vmatmul.mubr.bf16.gmra.mrb[0].mxu0 %v3862
        %v3956 = vpop.f32.mrb[0].mxu0
        %v3957 = vadd.f32 0.0, %v3956
        %v3958 = vpop.f32.mrb[0].mxu0
        %v3959 = vpop.f32.mrb[0].mxu0
        %v3960 = vadd.f32 0.0, %v3959
        %v3961 = vpop.f32.mrb[0].mxu0
        %3962 = vmatprep.mubr.bf16.mxu0 0
        %3963 = vmatmul.mubr.bf16.gmra.mrb[0].mxu0 %v3863
        %v3964 = vpop.f32.mrb[0].mxu0
        %v3965 = vadd.f32 0.0, %v3964
        %v3966 = vpop.f32.mrb[0].mxu0
        %v3967 = vpop.f32.mrb[0].mxu0
        %v3968 = vadd.f32 0.0, %v3967
        %v3969 = vpop.f32.mrb[0].mxu0
        %3970 = vmatprep.mubr.bf16.mxu0 0
        %3971 = vmatmul.mubr.bf16.gmra.mrb[0].mxu0 %v3864
        %v3972 = vpop.f32.mrb[0].mxu0
        %v3973 = vadd.f32 0.0, %v3972
        %v3974 = vpop.f32.mrb[0].mxu0
        %v3975 = vpop.f32.mrb[0].mxu0
        %v3976 = vadd.f32 0.0, %v3975
        %v3977 = vpop.f32.mrb[0].mxu0
        %3978 = vmatprep.mubr.bf16.mxu0 0
        %3979 = vmatmul.mubr.bf16.gmra.mrb[0].mxu0 %v3865
        %v3980 = vpop.f32.mrb[0].mxu0
        %v3981 = vadd.f32 0.0, %v3980
        %v3982 = vpop.f32.mrb[0].mxu0
        %v3983 = vpop.f32.mrb[0].mxu0
        %v3984 = vadd.f32 0.0, %v3983
        %v3985 = vpop.f32.mrb[0].mxu0
        %3986 = vdwg.mxu0
        %3987 = vrot.lane.b32.xlu0 %v1075, 96
        %v3988 = vpop.permute.xlu0 %3987
        %3989 = vrot.lane.b32.xlu0 %v1076, 96
        %v3990 = vpop.permute.xlu0 %3989
        %3991 = vrot.lane.b32.xlu0 %v1077, 96
        %v3992 = vpop.permute.xlu0 %3991
        %3993 = vrot.lane.b32.xlu0 %v1078, 96
        %v3994 = vpop.permute.xlu0 %3993
        %3995 = vrot.lane.b32.xlu0 %v1079, 96
        %v3996 = vpop.permute.xlu0 %3995
        %3997 = vrot.lane.b32.xlu0 %v1080, 96
        %v3998 = vpop.permute.xlu0 %3997
        %3999 = vrot.lane.b32.xlu0 %v1081, 96
        %v4000 = vpop.permute.xlu0 %3999
        %4001 = vrot.lane.b32.xlu0 %v1082, 96
        %v4002 = vpop.permute.xlu0 %4001
        %4003 = vrot.lane.b32.xlu0 %v1083, 96
        %v4004 = vpop.permute.xlu0 %4003
        %4005 = vrot.lane.b32.xlu0 %v1084, 96
        %v4006 = vpop.permute.xlu0 %4005
        %4007 = vrot.lane.b32.xlu0 %v1085, 96
        %v4008 = vpop.permute.xlu0 %4007
        %4009 = vrot.lane.b32.xlu0 %v1086, 96
        %v4010 = vpop.permute.xlu0 %4009
        %4011 = vrot.lane.b32.xlu0 %v1087, 96
        %v4012 = vpop.permute.xlu0 %4011
        %4013 = vrot.lane.b32.xlu0 %v1088, 96
        %v4014 = vpop.permute.xlu0 %4013
        %4015 = vrot.lane.b32.xlu0 %v1089, 96
        %v4016 = vpop.permute.xlu0 %4015
        %4017 = vrot.lane.b32.xlu0 %v1090, 96
        %v4018 = vpop.permute.xlu0 %4017
        %v4035 = vmul.f32 %v900, %v3988
        %v4036 = vmul.f32 %v904, %v3990
        %v4037 = vmul.f32 %v910, %v3992
        %v4038 = vmul.f32 %v914, %v3994
        %v4039 = vmul.f32 %v920, %v3996
        %v4040 = vmul.f32 %v924, %v3998
        %v4041 = vmul.f32 %v930, %v4000
        %v4042 = vmul.f32 %v934, %v4002
        %v4043 = vmul.f32 %v940, %v4004
        %v4044 = vmul.f32 %v944, %v4006
        %v4045 = vmul.f32 %v950, %v4008
        %v4046 = vmul.f32 %v954, %v4010
        %v4047 = vmul.f32 %v960, %v4012
        %v4048 = vmul.f32 %v964, %v4014
        %v4049 = vmul.f32 %v970, %v4016
        %v4050 = vmul.f32 %v974, %v4018
        %4051 = vrot.lane.b32.xlu0 %v1139, 16
        %v4052 = vpop.permute.xlu0 %4051
        %4053 = vrot.lane.b32.xlu0 %v1140, 16
        %v4054 = vpop.permute.xlu0 %4053
        %4055 = vrot.lane.b32.xlu0 %v1141, 16
        %v4056 = vpop.permute.xlu0 %4055
        %4057 = vrot.lane.b32.xlu0 %v1142, 16
        %v4058 = vpop.permute.xlu0 %4057
        %4059 = vrot.lane.b32.xlu0 %v1143, 16
        %v4060 = vpop.permute.xlu0 %4059
        %4061 = vrot.lane.b32.xlu0 %v1144, 16
        %v4062 = vpop.permute.xlu0 %4061
        %4063 = vrot.lane.b32.xlu0 %v1145, 16
        %v4064 = vpop.permute.xlu0 %4063
        %4065 = vrot.lane.b32.xlu0 %v1146, 16
        %v4066 = vpop.permute.xlu0 %4065
        %4067 = vrot.lane.b32.xlu0 %v1147, 16
        %v4068 = vpop.permute.xlu0 %4067
        %4069 = vrot.lane.b32.xlu0 %v1148, 16
        %v4070 = vpop.permute.xlu0 %4069
        %4071 = vrot.lane.b32.xlu0 %v1149, 16
        %v4072 = vpop.permute.xlu0 %4071
        %4073 = vrot.lane.b32.xlu0 %v1150, 16
        %v4074 = vpop.permute.xlu0 %4073
        %4075 = vrot.lane.b32.xlu0 %v1151, 16
        %v4076 = vpop.permute.xlu0 %4075
        %4077 = vrot.lane.b32.xlu0 %v1152, 16
        %v4078 = vpop.permute.xlu0 %4077
        %4079 = vrot.lane.b32.xlu0 %v1153, 16
        %v4080 = vpop.permute.xlu0 %4079
        %4081 = vrot.lane.b32.xlu0 %v1154, 16
        %v4082 = vpop.permute.xlu0 %4081
        %4099 = vrot.lane.b32.xlu0 %v900, 48
        %v4100 = vpop.permute.xlu0 %4099
        %4101 = vrot.lane.b32.xlu0 %v904, 48
        %v4102 = vpop.permute.xlu0 %4101
        %4103 = vrot.lane.b32.xlu0 %v910, 48
        %v4104 = vpop.permute.xlu0 %4103
        %4105 = vrot.lane.b32.xlu0 %v914, 48
        %v4106 = vpop.permute.xlu0 %4105
        %4107 = vrot.lane.b32.xlu0 %v920, 48
        %v4108 = vpop.permute.xlu0 %4107
        %4109 = vrot.lane.b32.xlu0 %v924, 48
        %v4110 = vpop.permute.xlu0 %4109
        %4111 = vrot.lane.b32.xlu0 %v930, 48
        %v4112 = vpop.permute.xlu0 %4111
        %4113 = vrot.lane.b32.xlu0 %v934, 48
        %v4114 = vpop.permute.xlu0 %4113
        %4115 = vrot.lane.b32.xlu0 %v940, 48
        %v4116 = vpop.permute.xlu0 %4115
        %4117 = vrot.lane.b32.xlu0 %v944, 48
        %v4118 = vpop.permute.xlu0 %4117
        %4119 = vrot.lane.b32.xlu0 %v950, 48
        %v4120 = vpop.permute.xlu0 %4119
        %4121 = vrot.lane.b32.xlu0 %v954, 48
        %v4122 = vpop.permute.xlu0 %4121
        %4123 = vrot.lane.b32.xlu0 %v960, 48
        %v4124 = vpop.permute.xlu0 %4123
        %4125 = vrot.lane.b32.xlu0 %v964, 48
        %v4126 = vpop.permute.xlu0 %4125
        %4127 = vrot.lane.b32.xlu0 %v970, 48
        %v4128 = vpop.permute.xlu0 %4127
        %4129 = vrot.lane.b32.xlu0 %v974, 48
        %v4130 = vpop.permute.xlu0 %4129
        %v4147 = vsel %vm1283, %v4052, %v4100
        %v4148 = vsel %vm1283, %v4054, %v4102
        %v4149 = vsel %vm1283, %v4056, %v4104
        %v4150 = vsel %vm1283, %v4058, %v4106
        %v4151 = vsel %vm1283, %v4060, %v4108
        %v4152 = vsel %vm1283, %v4062, %v4110
        %v4153 = vsel %vm1283, %v4064, %v4112
        %v4154 = vsel %vm1283, %v4066, %v4114
        %v4155 = vsel %vm1283, %v4068, %v4116
        %v4156 = vsel %vm1283, %v4070, %v4118
        %v4157 = vsel %vm1283, %v4072, %v4120
        %v4158 = vsel %vm1283, %v4074, %v4122
        %v4159 = vsel %vm1283, %v4076, %v4124
        %v4160 = vsel %vm1283, %v4078, %v4126
        %v4161 = vsel %vm1283, %v4080, %v4128
        %v4162 = vsel %vm1283, %v4082, %v4130
        %v4163 = vmul.f32 %v4147, %v1091
        %v4164 = vmul.f32 %v4148, %v1092
        %v4165 = vmul.f32 %v4149, %v1093
        %v4166 = vmul.f32 %v4150, %v1094
        %v4167 = vmul.f32 %v4151, %v1095
        %v4168 = vmul.f32 %v4152, %v1096
        %v4169 = vmul.f32 %v4153, %v1097
        %v4170 = vmul.f32 %v4154, %v1098
        %v4171 = vmul.f32 %v4155, %v1099
        %v4172 = vmul.f32 %v4156, %v1100
        %v4173 = vmul.f32 %v4157, %v1101
        %v4174 = vmul.f32 %v4158, %v1102
        %v4175 = vmul.f32 %v4159, %v1103
        %v4176 = vmul.f32 %v4160, %v1104
        %v4177 = vmul.f32 %v4161, %v1105
        %v4178 = vmul.f32 %v4162, %v1106
        %4195 = vrot.lane.b32.xlu0 %v4163, 96
        %v4196 = vpop.permute.xlu0 %4195
        %4197 = vrot.lane.b32.xlu0 %v4164, 96
        %v4198 = vpop.permute.xlu0 %4197
        %4199 = vrot.lane.b32.xlu0 %v4165, 96
        %v4200 = vpop.permute.xlu0 %4199
        %4201 = vrot.lane.b32.xlu0 %v4166, 96
        %v4202 = vpop.permute.xlu0 %4201
        %4203 = vrot.lane.b32.xlu0 %v4167, 96
        %v4204 = vpop.permute.xlu0 %4203
        %4205 = vrot.lane.b32.xlu0 %v4168, 96
        %v4206 = vpop.permute.xlu0 %4205
        %4207 = vrot.lane.b32.xlu0 %v4169, 96
        %v4208 = vpop.permute.xlu0 %4207
        %4209 = vrot.lane.b32.xlu0 %v4170, 96
        %v4210 = vpop.permute.xlu0 %4209
        %4211 = vrot.lane.b32.xlu0 %v4171, 96
        %v4212 = vpop.permute.xlu0 %4211
        %4213 = vrot.lane.b32.xlu0 %v4172, 96
        %v4214 = vpop.permute.xlu0 %4213
        %4215 = vrot.lane.b32.xlu0 %v4173, 96
        %v4216 = vpop.permute.xlu0 %4215
        %4217 = vrot.lane.b32.xlu0 %v4174, 96
        %v4218 = vpop.permute.xlu0 %4217
        %4219 = vrot.lane.b32.xlu0 %v4175, 96
        %v4220 = vpop.permute.xlu0 %4219
        %4221 = vrot.lane.b32.xlu0 %v4176, 96
        %v4222 = vpop.permute.xlu0 %4221
        %4223 = vrot.lane.b32.xlu0 %v4177, 96
        %v4224 = vpop.permute.xlu0 %4223
        %4225 = vrot.lane.b32.xlu0 %v4178, 96
        %v4226 = vpop.permute.xlu0 %4225
        %v4243 = vadd.f32 %v4035, %v4196
        %v4244 = vadd.f32 %v4036, %v4198
        %v4245 = vadd.f32 %v4037, %v4200
        %v4246 = vadd.f32 %v4038, %v4202
        %v4247 = vadd.f32 %v4039, %v4204
        %v4248 = vadd.f32 %v4040, %v4206
        %v4249 = vadd.f32 %v4041, %v4208
        %v4250 = vadd.f32 %v4042, %v4210
        %v4251 = vadd.f32 %v4043, %v4212
        %v4252 = vadd.f32 %v4044, %v4214
        %v4253 = vadd.f32 %v4045, %v4216
        %v4254 = vadd.f32 %v4046, %v4218
        %v4255 = vadd.f32 %v4047, %v4220
        %v4256 = vadd.f32 %v4048, %v4222
        %v4257 = vadd.f32 %v4049, %v4224
        %v4258 = vadd.f32 %v4050, %v4226
        %v4259 = vmul.f32 %v902, %v3988
        %v4260 = vmul.f32 %v906, %v3990
        %v4261 = vmul.f32 %v912, %v3992
        %v4262 = vmul.f32 %v916, %v3994
        %v4263 = vmul.f32 %v922, %v3996
        %v4264 = vmul.f32 %v926, %v3998
        %v4265 = vmul.f32 %v932, %v4000
        %v4266 = vmul.f32 %v936, %v4002
        %v4267 = vmul.f32 %v942, %v4004
        %v4268 = vmul.f32 %v946, %v4006
        %v4269 = vmul.f32 %v952, %v4008
        %v4270 = vmul.f32 %v956, %v4010
        %v4271 = vmul.f32 %v962, %v4012
        %v4272 = vmul.f32 %v966, %v4014
        %v4273 = vmul.f32 %v972, %v4016
        %v4274 = vmul.f32 %v976, %v4018
        %4275 = vrot.lane.b32.xlu0 %v1348, 16
        %v4276 = vpop.permute.xlu0 %4275
        %4277 = vrot.lane.b32.xlu0 %v1349, 16
        %v4278 = vpop.permute.xlu0 %4277
        %4279 = vrot.lane.b32.xlu0 %v1350, 16
        %v4280 = vpop.permute.xlu0 %4279
        %4281 = vrot.lane.b32.xlu0 %v1351, 16
        %v4282 = vpop.permute.xlu0 %4281
        %4283 = vrot.lane.b32.xlu0 %v1352, 16
        %v4284 = vpop.permute.xlu0 %4283
        %4285 = vrot.lane.b32.xlu0 %v1353, 16
        %v4286 = vpop.permute.xlu0 %4285
        %4287 = vrot.lane.b32.xlu0 %v1354, 16
        %v4288 = vpop.permute.xlu0 %4287
        %4289 = vrot.lane.b32.xlu0 %v1355, 16
        %v4290 = vpop.permute.xlu0 %4289
        %4291 = vrot.lane.b32.xlu0 %v1356, 16
        %v4292 = vpop.permute.xlu0 %4291
        %4293 = vrot.lane.b32.xlu0 %v1357, 16
        %v4294 = vpop.permute.xlu0 %4293
        %4295 = vrot.lane.b32.xlu0 %v1358, 16
        %v4296 = vpop.permute.xlu0 %4295
        %4297 = vrot.lane.b32.xlu0 %v1359, 16
        %v4298 = vpop.permute.xlu0 %4297
        %4299 = vrot.lane.b32.xlu0 %v1360, 16
        %v4300 = vpop.permute.xlu0 %4299
        %4301 = vrot.lane.b32.xlu0 %v1361, 16
        %v4302 = vpop.permute.xlu0 %4301
        %4303 = vrot.lane.b32.xlu0 %v1362, 16
        %v4304 = vpop.permute.xlu0 %4303
        %4305 = vrot.lane.b32.xlu0 %v1363, 16
        %v4306 = vpop.permute.xlu0 %4305
        %4323 = vrot.lane.b32.xlu0 %v902, 48
        %v4324 = vpop.permute.xlu0 %4323
        %4325 = vrot.lane.b32.xlu0 %v906, 48
        %v4326 = vpop.permute.xlu0 %4325
        %4327 = vrot.lane.b32.xlu0 %v912, 48
        %v4328 = vpop.permute.xlu0 %4327
        %4329 = vrot.lane.b32.xlu0 %v916, 48
        %v4330 = vpop.permute.xlu0 %4329
        %4331 = vrot.lane.b32.xlu0 %v922, 48
        %v4332 = vpop.permute.xlu0 %4331
        %4333 = vrot.lane.b32.xlu0 %v926, 48
        %v4334 = vpop.permute.xlu0 %4333
        %4335 = vrot.lane.b32.xlu0 %v932, 48
        %v4336 = vpop.permute.xlu0 %4335
        %4337 = vrot.lane.b32.xlu0 %v936, 48
        %v4338 = vpop.permute.xlu0 %4337
        %4339 = vrot.lane.b32.xlu0 %v942, 48
        %v4340 = vpop.permute.xlu0 %4339
        %4341 = vrot.lane.b32.xlu0 %v946, 48
        %v4342 = vpop.permute.xlu0 %4341
        %4343 = vrot.lane.b32.xlu0 %v952, 48
        %v4344 = vpop.permute.xlu0 %4343
        %4345 = vrot.lane.b32.xlu0 %v956, 48
        %v4346 = vpop.permute.xlu0 %4345
        %4347 = vrot.lane.b32.xlu0 %v962, 48
        %v4348 = vpop.permute.xlu0 %4347
        %4349 = vrot.lane.b32.xlu0 %v966, 48
        %v4350 = vpop.permute.xlu0 %4349
        %4351 = vrot.lane.b32.xlu0 %v972, 48
        %v4352 = vpop.permute.xlu0 %4351
        %4353 = vrot.lane.b32.xlu0 %v976, 48
        %v4354 = vpop.permute.xlu0 %4353
        %v4371 = vsel %vm1283, %v4276, %v4324
        %v4372 = vsel %vm1283, %v4278, %v4326
        %v4373 = vsel %vm1283, %v4280, %v4328
        %v4374 = vsel %vm1283, %v4282, %v4330
        %v4375 = vsel %vm1283, %v4284, %v4332
        %v4376 = vsel %vm1283, %v4286, %v4334
        %v4377 = vsel %vm1283, %v4288, %v4336
        %v4378 = vsel %vm1283, %v4290, %v4338
        %v4379 = vsel %vm1283, %v4292, %v4340
        %v4380 = vsel %vm1283, %v4294, %v4342
        %v4381 = vsel %vm1283, %v4296, %v4344
        %v4382 = vsel %vm1283, %v4298, %v4346
        %v4383 = vsel %vm1283, %v4300, %v4348
        %v4384 = vsel %vm1283, %v4302, %v4350
        %v4385 = vsel %vm1283, %v4304, %v4352
        %v4386 = vsel %vm1283, %v4306, %v4354
        %v4387 = vmul.f32 %v4371, %v1091
        %v4388 = vmul.f32 %v4372, %v1092
        %v4389 = vmul.f32 %v4373, %v1093
        %v4390 = vmul.f32 %v4374, %v1094
        %v4391 = vmul.f32 %v4375, %v1095
        %v4392 = vmul.f32 %v4376, %v1096
        %v4393 = vmul.f32 %v4377, %v1097
        %v4394 = vmul.f32 %v4378, %v1098
        %v4395 = vmul.f32 %v4379, %v1099
        %v4396 = vmul.f32 %v4380, %v1100
        %v4397 = vmul.f32 %v4381, %v1101
        %v4398 = vmul.f32 %v4382, %v1102
        %v4399 = vmul.f32 %v4383, %v1103
        %v4400 = vmul.f32 %v4384, %v1104
        %v4401 = vmul.f32 %v4385, %v1105
        %v4402 = vmul.f32 %v4386, %v1106
        %4419 = vrot.lane.b32.xlu0 %v4387, 96
        %v4420 = vpop.permute.xlu0 %4419
        %4421 = vrot.lane.b32.xlu0 %v4388, 96
        %v4422 = vpop.permute.xlu0 %4421
        %4423 = vrot.lane.b32.xlu0 %v4389, 96
        %v4424 = vpop.permute.xlu0 %4423
        %4425 = vrot.lane.b32.xlu0 %v4390, 96
        %v4426 = vpop.permute.xlu0 %4425
        %4427 = vrot.lane.b32.xlu0 %v4391, 96
        %v4428 = vpop.permute.xlu0 %4427
        %4429 = vrot.lane.b32.xlu0 %v4392, 96
        %v4430 = vpop.permute.xlu0 %4429
        %4431 = vrot.lane.b32.xlu0 %v4393, 96
        %v4432 = vpop.permute.xlu0 %4431
        %4433 = vrot.lane.b32.xlu0 %v4394, 96
        %v4434 = vpop.permute.xlu0 %4433
        %4435 = vrot.lane.b32.xlu0 %v4395, 96
        %v4436 = vpop.permute.xlu0 %4435
        %4437 = vrot.lane.b32.xlu0 %v4396, 96
        %v4438 = vpop.permute.xlu0 %4437
        %4439 = vrot.lane.b32.xlu0 %v4397, 96
        %v4440 = vpop.permute.xlu0 %4439
        %4441 = vrot.lane.b32.xlu0 %v4398, 96
        %v4442 = vpop.permute.xlu0 %4441
        %4443 = vrot.lane.b32.xlu0 %v4399, 96
        %v4444 = vpop.permute.xlu0 %4443
        %4445 = vrot.lane.b32.xlu0 %v4400, 96
        %v4446 = vpop.permute.xlu0 %4445
        %4447 = vrot.lane.b32.xlu0 %v4401, 96
        %v4448 = vpop.permute.xlu0 %4447
        %4449 = vrot.lane.b32.xlu0 %v4402, 96
        %v4450 = vpop.permute.xlu0 %4449
        %v4467 = vadd.f32 %v4259, %v4420
        %v4468 = vadd.f32 %v4260, %v4422
        %v4469 = vadd.f32 %v4261, %v4424
        %v4470 = vadd.f32 %v4262, %v4426
        %v4471 = vadd.f32 %v4263, %v4428
        %v4472 = vadd.f32 %v4264, %v4430
        %v4473 = vadd.f32 %v4265, %v4432
        %v4474 = vadd.f32 %v4266, %v4434
        %v4475 = vadd.f32 %v4267, %v4436
        %v4476 = vadd.f32 %v4268, %v4438
        %v4477 = vadd.f32 %v4269, %v4440
        %v4478 = vadd.f32 %v4270, %v4442
        %v4479 = vadd.f32 %v4271, %v4444
        %v4480 = vadd.f32 %v4272, %v4446
        %v4481 = vadd.f32 %v4273, %v4448
        %v4482 = vadd.f32 %v4274, %v4450
        %v4483 = vmul.f32 %v4243, 0.17677669
        %v4484 = vmul.f32 %v4244, 0.17677669
        %v4485 = vmul.f32 %v4245, 0.17677669
        %v4486 = vmul.f32 %v4246, 0.17677669
        %v4487 = vmul.f32 %v4247, 0.17677669
        %v4488 = vmul.f32 %v4248, 0.17677669
        %v4489 = vmul.f32 %v4249, 0.17677669
        %v4490 = vmul.f32 %v4250, 0.17677669
        %v4491 = vmul.f32 %v4251, 0.17677669
        %v4492 = vmul.f32 %v4252, 0.17677669
        %v4493 = vmul.f32 %v4253, 0.17677669
        %v4494 = vmul.f32 %v4254, 0.17677669
        %v4495 = vmul.f32 %v4255, 0.17677669
        %v4496 = vmul.f32 %v4256, 0.17677669
        %v4497 = vmul.f32 %v4257, 0.17677669
        %v4498 = vmul.f32 %v4258, 0.17677669
        %v4499 = vpack.c.bf16 %v4484, %v4483
        %v4500 = vpack.c.bf16 %v4486, %v4485
        %v4501 = vpack.c.bf16 %v4488, %v4487
        %v4502 = vpack.c.bf16 %v4490, %v4489
        %v4503 = vpack.c.bf16 %v4492, %v4491
        %v4504 = vpack.c.bf16 %v4494, %v4493
        %v4505 = vpack.c.bf16 %v4496, %v4495
        %v4506 = vpack.c.bf16 %v4498, %v4497
        %v4507 = vpack.c.bf16 %v4468, %v4467
        %v4508 = vpack.c.bf16 %v4470, %v4469
        %v4509 = vpack.c.bf16 %v4472, %v4471
        %v4510 = vpack.c.bf16 %v4474, %v4473
        %v4511 = vpack.c.bf16 %v4476, %v4475
        %v4512 = vpack.c.bf16 %v4478, %v4477
        %v4513 = vpack.c.bf16 %v4480, %v4479
        %v4514 = vpack.c.bf16 %v4482, %v4481
        %4523 = vrot.lane.b32.xlu0 %v4499, 32
        %v4524 = vpop.permute.xlu0 %4523
        %4525 = vrot.lane.b32.xlu0 %v4500, 32
        %v4526 = vpop.permute.xlu0 %4525
        %4527 = vrot.lane.b32.xlu0 %v4501, 32
        %v4528 = vpop.permute.xlu0 %4527
        %4529 = vrot.lane.b32.xlu0 %v4502, 32
        %v4530 = vpop.permute.xlu0 %4529
        %4531 = vrot.lane.b32.xlu0 %v4503, 32
        %v4532 = vpop.permute.xlu0 %4531
        %4533 = vrot.lane.b32.xlu0 %v4504, 32
        %v4534 = vpop.permute.xlu0 %4533
        %4535 = vrot.lane.b32.xlu0 %v4505, 32
        %v4536 = vpop.permute.xlu0 %4535
        %4537 = vrot.lane.b32.xlu0 %v4506, 32
        %v4538 = vpop.permute.xlu0 %4537
        %4547 = vrot.lane.b32.xlu0 %v4507, 32
        %v4548 = vpop.permute.xlu0 %4547
        %4549 = vrot.lane.b32.xlu0 %v4508, 32
        %v4550 = vpop.permute.xlu0 %4549
        %4551 = vrot.lane.b32.xlu0 %v4509, 32
        %v4552 = vpop.permute.xlu0 %4551
        %4553 = vrot.lane.b32.xlu0 %v4510, 32
        %v4554 = vpop.permute.xlu0 %4553
        %4555 = vrot.lane.b32.xlu0 %v4511, 32
        %v4556 = vpop.permute.xlu0 %4555
        %4557 = vrot.lane.b32.xlu0 %v4512, 32
        %v4558 = vpop.permute.xlu0 %4557
        %4559 = vrot.lane.b32.xlu0 %v4513, 32
        %v4560 = vpop.permute.xlu0 %4559
        %4561 = vrot.lane.b32.xlu0 %v4514, 32
        %v4562 = vpop.permute.xlu0 %4561
        %v4564 = vsel %vm1572, %v4524, 0
        %v4567 = vsel %vm1572, %v4526, 0
        %v4570 = vsel %vm1572, %v4528, 0
        %v4573 = vsel %vm1572, %v4530, 0
        %v4576 = vsel %vm1572, %v4532, 0
        %v4579 = vsel %vm1572, %v4534, 0
        %v4582 = vsel %vm1572, %v4536, 0
        %v4585 = vsel %vm1572, %v4538, 0
        %v4588 = vsel %vm1572, %v4548, 0
        %v4591 = vsel %vm1572, %v4550, 0
        %v4594 = vsel %vm1572, %v4552, 0
        %v4597 = vsel %vm1572, %v4554, 0
        %v4600 = vsel %vm1572, %v4556, 0
        %v4603 = vsel %vm1572, %v4558, 0
        %v4606 = vsel %vm1572, %v4560, 0
        %v4609 = vsel %vm1572, %v4562, 0
        %4611 = vmatprep.subr.bf16.mxu0 0
        %4612 = vmatpush1.bf16.xpose.msra.mxu0 %v4588
        %4613 = vmatprep.subr.bf16.mxu0 0
        %4614 = vmatpush1.bf16.xpose.msra.mxu0 %v4591
        %4615 = vmatprep.subr.bf16.mxu0 0
        %4616 = vmatpush1.bf16.xpose.msra.mxu0 %v4594
        %4617 = vmatprep.subr.bf16.mxu0 0
        %4618 = vmatpush1.bf16.xpose.msra.mxu0 %v4597
        %4619 = vmatprep.subr.bf16.mxu0 0
        %4620 = vmatpush1.bf16.xpose.msra.mxu0 %v4600
        %4621 = vmatprep.subr.bf16.mxu0 0
        %4622 = vmatpush1.bf16.xpose.msra.mxu0 %v4603
        %4623 = vmatprep.subr.bf16.mxu0 0
        %4624 = vmatpush1.bf16.xpose.msra.mxu0 %v4606
        %4625 = vmatprep.subr.bf16.mxu0 0
        %4626 = vmatpush1.bf16.xpose.msra.mxu0 %v4609
        %4627 = vmatprep.subr.bf16.mxu0 0
        %4628 = vmatpush1.bf16.xpose.msra.mxu0 0
        %4629 = vmatprep.subr.bf16.mxu0 0
        %4630 = vmatpush1.bf16.xpose.msra.mxu0 0
        %4631 = vmatprep.subr.bf16.mxu0 0
        %4632 = vmatpush1.bf16.xpose.msra.mxu0 0
        %4633 = vmatprep.subr.bf16.mxu0 0
        %4634 = vmatpush1.bf16.xpose.msra.mxu0 0
        %4635 = vmatprep.subr.bf16.mxu0 0
        %4636 = vmatpush1.bf16.xpose.msra.mxu0 0
        %4637 = vmatprep.subr.bf16.mxu0 0
        %4638 = vmatpush1.bf16.xpose.msra.mxu0 0
        %4639 = vmatprep.subr.bf16.mxu0 0
        %4640 = vmatpush1.bf16.xpose.msra.mxu0 0
        %4641 = vmatprep.subr.bf16.mxu0 0
        %4642 = vmatpush1.bf16.xpose.msra.mxu0 0
        %4643 = vmatprep.mubr.bf16.mxu0 0
        %4644 = vmatmul.mubr.bf16.gmra.mrb[0].mxu0 %v4564
        %v4645 = vpop.f32.mrb[0].mxu0
        %v4646 = vadd.f32 %v1107, %v4645
        %v4647 = vpop.f32.mrb[0].mxu0
        %v4648 = vpop.f32.mrb[0].mxu0
        %v4649 = vadd.f32 %v1108, %v4648
        %v4650 = vpop.f32.mrb[0].mxu0
        %4651 = vmatprep.mubr.bf16.mxu0 0
        %4652 = vmatmul.mubr.bf16.gmra.mrb[0].mxu0 %v4567
        %v4653 = vpop.f32.mrb[0].mxu0
        %v4654 = vadd.f32 %v1109, %v4653
        %v4655 = vpop.f32.mrb[0].mxu0
        %v4656 = vpop.f32.mrb[0].mxu0
        %v4657 = vadd.f32 %v1110, %v4656
        %v4658 = vpop.f32.mrb[0].mxu0
        %4659 = vmatprep.mubr.bf16.mxu0 0
        %4660 = vmatmul.mubr.bf16.gmra.mrb[0].mxu0 %v4570
        %v4661 = vpop.f32.mrb[0].mxu0
        %v4662 = vadd.f32 %v1111, %v4661
        %v4663 = vpop.f32.mrb[0].mxu0
        %v4664 = vpop.f32.mrb[0].mxu0
        %v4665 = vadd.f32 %v1112, %v4664
        %v4666 = vpop.f32.mrb[0].mxu0
        %4667 = vmatprep.mubr.bf16.mxu0 0
        %4668 = vmatmul.mubr.bf16.gmra.mrb[0].mxu0 %v4573
        %v4669 = vpop.f32.mrb[0].mxu0
        %v4670 = vadd.f32 %v1113, %v4669
        %v4671 = vpop.f32.mrb[0].mxu0
        %v4672 = vpop.f32.mrb[0].mxu0
        %v4673 = vadd.f32 %v1114, %v4672
        %v4674 = vpop.f32.mrb[0].mxu0
        %4675 = vmatprep.mubr.bf16.mxu0 0
        %4676 = vmatmul.mubr.bf16.gmra.mrb[0].mxu0 %v4576
        %v4677 = vpop.f32.mrb[0].mxu0
        %v4678 = vadd.f32 %v1115, %v4677
        %v4679 = vpop.f32.mrb[0].mxu0
        %v4680 = vpop.f32.mrb[0].mxu0
        %v4681 = vadd.f32 %v1116, %v4680
        %v4682 = vpop.f32.mrb[0].mxu0
        %4683 = vmatprep.mubr.bf16.mxu0 0
        %4684 = vmatmul.mubr.bf16.gmra.mrb[0].mxu0 %v4579
        %v4685 = vpop.f32.mrb[0].mxu0
        %v4686 = vadd.f32 %v1117, %v4685
        %v4687 = vpop.f32.mrb[0].mxu0
        %v4688 = vpop.f32.mrb[0].mxu0
        %v4689 = vadd.f32 %v1118, %v4688
        %v4690 = vpop.f32.mrb[0].mxu0
        %4691 = vmatprep.mubr.bf16.mxu0 0
        %4692 = vmatmul.mubr.bf16.gmra.mrb[0].mxu0 %v4582
        %v4693 = vpop.f32.mrb[0].mxu0
        %v4694 = vadd.f32 %v1119, %v4693
        %v4695 = vpop.f32.mrb[0].mxu0
        %v4696 = vpop.f32.mrb[0].mxu0
        %v4697 = vadd.f32 %v1120, %v4696
        %v4698 = vpop.f32.mrb[0].mxu0
        %4699 = vmatprep.mubr.bf16.mxu0 0
        %4700 = vmatmul.mubr.bf16.gmra.mrb[0].mxu0 %v4585
        %v4701 = vpop.f32.mrb[0].mxu0
        %v4702 = vadd.f32 %v1121, %v4701
        %v4703 = vpop.f32.mrb[0].mxu0
        %v4704 = vpop.f32.mrb[0].mxu0
        %v4705 = vadd.f32 %v1122, %v4704
        %v4706 = vpop.f32.mrb[0].mxu0
        %4707 = vdwg.mxu0
        %4708 = vmax.xlane.f32.xlu0 %v4646
        %v4709 = vpop.xlane.xlu0 %4708
        %4710 = vmax.xlane.f32.xlu0 %v4649
        %v4711 = vpop.xlane.xlu0 %4710
        %4712 = vmax.xlane.f32.xlu0 %v4654
        %v4713 = vpop.xlane.xlu0 %4712
        %4714 = vmax.xlane.f32.xlu0 %v4657
        %v4715 = vpop.xlane.xlu0 %4714
        %4716 = vmax.xlane.f32.xlu0 %v4662
        %v4717 = vpop.xlane.xlu0 %4716
        %4718 = vmax.xlane.f32.xlu0 %v4665
        %v4719 = vpop.xlane.xlu0 %4718
        %4720 = vmax.xlane.f32.xlu0 %v4670
        %v4721 = vpop.xlane.xlu0 %4720
        %4722 = vmax.xlane.f32.xlu0 %v4673
        %v4723 = vpop.xlane.xlu0 %4722
        %4724 = vmax.xlane.f32.xlu0 %v4678
        %v4725 = vpop.xlane.xlu0 %4724
        %4726 = vmax.xlane.f32.xlu0 %v4681
        %v4727 = vpop.xlane.xlu0 %4726
        %4728 = vmax.xlane.f32.xlu0 %v4686
        %v4729 = vpop.xlane.xlu0 %4728
        %4730 = vmax.xlane.f32.xlu0 %v4689
        %v4731 = vpop.xlane.xlu0 %4730
        %4732 = vmax.xlane.f32.xlu0 %v4694
        %v4733 = vpop.xlane.xlu0 %4732
        %4734 = vmax.xlane.f32.xlu0 %v4697
        %v4735 = vpop.xlane.xlu0 %4734
        %4736 = vmax.xlane.f32.xlu0 %v4702
        %v4737 = vpop.xlane.xlu0 %4736
        %4738 = vmax.xlane.f32.xlu0 %v4705
        %v4739 = vpop.xlane.xlu0 %4738
        %v4740 = vsub.f32 %v4646, %v4709
        %v4741 = vsub.f32 %v4649, %v4711
        %v4742 = vsub.f32 %v4654, %v4713
        %v4743 = vsub.f32 %v4657, %v4715
        %v4744 = vsub.f32 %v4662, %v4717
        %v4745 = vsub.f32 %v4665, %v4719
        %v4746 = vsub.f32 %v4670, %v4721
        %v4747 = vsub.f32 %v4673, %v4723
        %v4748 = vsub.f32 %v4678, %v4725
        %v4749 = vsub.f32 %v4681, %v4727
        %v4750 = vsub.f32 %v4686, %v4729
        %v4751 = vsub.f32 %v4689, %v4731
        %v4752 = vsub.f32 %v4694, %v4733
        %v4753 = vsub.f32 %v4697, %v4735
        %v4754 = vsub.f32 %v4702, %v4737
        %v4755 = vsub.f32 %v4705, %v4739
        %v4756 = vmul.f32 %v4740, 1.442695
        %v4757 = vpow.pop %v4756
        %v4758 = vmul.f32 %v4741, 1.442695
        %v4759 = vpow.pop %v4758
        %v4760 = vmul.f32 %v4742, 1.442695
        %v4761 = vpow.pop %v4760
        %v4762 = vmul.f32 %v4743, 1.442695
        %v4763 = vpow.pop %v4762
        %v4764 = vmul.f32 %v4744, 1.442695
        %v4765 = vpow.pop %v4764
        %v4766 = vmul.f32 %v4745, 1.442695
        %v4767 = vpow.pop %v4766
        %v4768 = vmul.f32 %v4746, 1.442695
        %v4769 = vpow.pop %v4768
        %v4770 = vmul.f32 %v4747, 1.442695
        %v4771 = vpow.pop %v4770
        %v4772 = vmul.f32 %v4748, 1.442695
        %v4773 = vpow.pop %v4772
        %v4774 = vmul.f32 %v4749, 1.442695
        %v4775 = vpow.pop %v4774
        %v4776 = vmul.f32 %v4750, 1.442695
        %v4777 = vpow.pop %v4776
        %v4778 = vmul.f32 %v4751, 1.442695
        %v4779 = vpow.pop %v4778
        %v4780 = vmul.f32 %v4752, 1.442695
        %v4781 = vpow.pop %v4780
        %v4782 = vmul.f32 %v4753, 1.442695
        %v4783 = vpow.pop %v4782
        %v4784 = vmul.f32 %v4754, 1.442695
        %v4785 = vpow.pop %v4784
        %v4786 = vmul.f32 %v4755, 1.442695
        %v4787 = vpow.pop %v4786
        %4788 = vadd.xlane.f32.xlu0 %v4757
        %v4789 = vpop.xlane.xlu0 %4788
        %4790 = vadd.xlane.f32.xlu0 %v4759
        %v4791 = vpop.xlane.xlu0 %4790
        %4792 = vadd.xlane.f32.xlu0 %v4761
        %v4793 = vpop.xlane.xlu0 %4792
        %4794 = vadd.xlane.f32.xlu0 %v4763
        %v4795 = vpop.xlane.xlu0 %4794
        %4796 = vadd.xlane.f32.xlu0 %v4765
        %v4797 = vpop.xlane.xlu0 %4796
        %4798 = vadd.xlane.f32.xlu0 %v4767
        %v4799 = vpop.xlane.xlu0 %4798
        %4800 = vadd.xlane.f32.xlu0 %v4769
        %v4801 = vpop.xlane.xlu0 %4800
        %4802 = vadd.xlane.f32.xlu0 %v4771
        %v4803 = vpop.xlane.xlu0 %4802
        %4804 = vadd.xlane.f32.xlu0 %v4773
        %v4805 = vpop.xlane.xlu0 %4804
        %4806 = vadd.xlane.f32.xlu0 %v4775
        %v4807 = vpop.xlane.xlu0 %4806
        %4808 = vadd.xlane.f32.xlu0 %v4777
        %v4809 = vpop.xlane.xlu0 %4808
        %4810 = vadd.xlane.f32.xlu0 %v4779
        %v4811 = vpop.xlane.xlu0 %4810
        %4812 = vadd.xlane.f32.xlu0 %v4781
        %v4813 = vpop.xlane.xlu0 %4812
        %4814 = vadd.xlane.f32.xlu0 %v4783
        %v4815 = vpop.xlane.xlu0 %4814
        %4816 = vadd.xlane.f32.xlu0 %v4785
        %v4817 = vpop.xlane.xlu0 %4816
        %4818 = vadd.xlane.f32.xlu0 %v4787
        %v4819 = vpop.xlane.xlu0 %4818
        %v4820 = vrcp.pop %v4789
        %v4821 = vrcp.pop %v4791
        %v4822 = vrcp.pop %v4793
        %v4823 = vrcp.pop %v4795
        %v4824 = vrcp.pop %v4797
        %v4825 = vrcp.pop %v4799
        %v4826 = vrcp.pop %v4801
        %v4827 = vrcp.pop %v4803
        %v4828 = vrcp.pop %v4805
        %v4829 = vrcp.pop %v4807
        %v4830 = vrcp.pop %v4809
        %v4831 = vrcp.pop %v4811
        %v4832 = vrcp.pop %v4813
        %v4833 = vrcp.pop %v4815
        %v4834 = vrcp.pop %v4817
        %v4835 = vrcp.pop %v4819
        %v4836 = vmul.f32 %v4757, %v4820
        %v4837 = vmul.f32 %v4759, %v4821
        %v4838 = vmul.f32 %v4761, %v4822
        %v4839 = vmul.f32 %v4763, %v4823
        %v4840 = vmul.f32 %v4765, %v4824
        %v4841 = vmul.f32 %v4767, %v4825
        %v4842 = vmul.f32 %v4769, %v4826
        %v4843 = vmul.f32 %v4771, %v4827
        %v4844 = vmul.f32 %v4773, %v4828
        %v4845 = vmul.f32 %v4775, %v4829
        %v4846 = vmul.f32 %v4777, %v4830
        %v4847 = vmul.f32 %v4779, %v4831
        %v4848 = vmul.f32 %v4781, %v4832
        %v4849 = vmul.f32 %v4783, %v4833
        %v4850 = vmul.f32 %v4785, %v4834
        %v4851 = vmul.f32 %v4787, %v4835
        %v4852 = vpack.c.bf16 %v4837, %v4836
        %v4853 = vpack.c.bf16 %v4839, %v4838
        %v4854 = vpack.c.bf16 %v4841, %v4840
        %v4855 = vpack.c.bf16 %v4843, %v4842
        %v4856 = vpack.c.bf16 %v4845, %v4844
        %v4857 = vpack.c.bf16 %v4847, %v4846
        %v4858 = vpack.c.bf16 %v4849, %v4848
        %v4859 = vpack.c.bf16 %v4851, %v4850
        %4860 = vrot.lane.b32.xlu0 %v1870, 32
        %v4861 = vpop.permute.xlu0 %4860
        %4862 = vrot.lane.b32.xlu0 %v1871, 32
        %v4863 = vpop.permute.xlu0 %4862
        %4864 = vrot.lane.b32.xlu0 %v1872, 32
        %v4865 = vpop.permute.xlu0 %4864
        %4866 = vrot.lane.b32.xlu0 %v1873, 32
        %v4867 = vpop.permute.xlu0 %4866
        %4868 = vrot.lane.b32.xlu0 %v1874, 32
        %v4869 = vpop.permute.xlu0 %4868
        %4870 = vrot.lane.b32.xlu0 %v1875, 32
        %v4871 = vpop.permute.xlu0 %4870
        %4872 = vrot.lane.b32.xlu0 %v1876, 32
        %v4873 = vpop.permute.xlu0 %4872
        %4874 = vrot.lane.b32.xlu0 %v1877, 32
        %v4875 = vpop.permute.xlu0 %4874
        %4884 = vmatprep.subr.bf16.mxu0 0
        %4885 = vmatpush1.bf16.msra.mxu0 %v4861
        %4886 = vmatprep.subr.bf16.mxu0 0
        %4887 = vmatpush1.bf16.msra.mxu0 %v4863
        %4888 = vmatprep.subr.bf16.mxu0 0
        %4889 = vmatpush1.bf16.msra.mxu0 %v4865
        %4890 = vmatprep.subr.bf16.mxu0 0
        %4891 = vmatpush1.bf16.msra.mxu0 %v4867
        %4892 = vmatprep.subr.bf16.mxu0 0
        %4893 = vmatpush1.bf16.msra.mxu0 %v4869
        %4894 = vmatprep.subr.bf16.mxu0 0
        %4895 = vmatpush1.bf16.msra.mxu0 %v4871
        %4896 = vmatprep.subr.bf16.mxu0 0
        %4897 = vmatpush1.bf16.msra.mxu0 %v4873
        %4898 = vmatprep.subr.bf16.mxu0 0
        %4899 = vmatpush1.bf16.msra.mxu0 %v4875
        %4900 = vmatprep.subr.bf16.mxu0 0
        %4901 = vmatpush1.bf16.msra.mxu0 0
        %4902 = vmatprep.subr.bf16.mxu0 0
        %4903 = vmatpush1.bf16.msra.mxu0 0
        %4904 = vmatprep.subr.bf16.mxu0 0
        %4905 = vmatpush1.bf16.msra.mxu0 0
        %4906 = vmatprep.subr.bf16.mxu0 0
        %4907 = vmatpush1.bf16.msra.mxu0 0
        %4908 = vmatprep.subr.bf16.mxu0 0
        %4909 = vmatpush1.bf16.msra.mxu0 0
        %4910 = vmatprep.subr.bf16.mxu0 0
        %4911 = vmatpush1.bf16.msra.mxu0 0
        %4912 = vmatprep.subr.bf16.mxu0 0
        %4913 = vmatpush1.bf16.msra.mxu0 0
        %4914 = vmatprep.subr.bf16.mxu0 0
        %4915 = vmatpush1.bf16.msra.mxu0 0
        %4916 = vmatprep.mubr.bf16.mxu0 0
        %4917 = vmatmul.mubr.bf16.gmra.mrb[0].mxu0 %v4852
        %v4918 = vpop.f32.mrb[0].mxu0
        %v4919 = vadd.f32 0.0, %v4918
        %v4920 = vpop.f32.mrb[0].mxu0
        %v4921 = vpop.f32.mrb[0].mxu0
        %v4922 = vadd.f32 0.0, %v4921
        %v4923 = vpop.f32.mrb[0].mxu0
        %4924 = vmatprep.mubr.bf16.mxu0 0
        %4925 = vmatmul.mubr.bf16.gmra.mrb[0].mxu0 %v4853
        %v4926 = vpop.f32.mrb[0].mxu0
        %v4927 = vadd.f32 0.0, %v4926
        %v4928 = vpop.f32.mrb[0].mxu0
        %v4929 = vpop.f32.mrb[0].mxu0
        %v4930 = vadd.f32 0.0, %v4929
        %v4931 = vpop.f32.mrb[0].mxu0
        %4932 = vmatprep.mubr.bf16.mxu0 0
        %4933 = vmatmul.mubr.bf16.gmra.mrb[0].mxu0 %v4854
        %v4934 = vpop.f32.mrb[0].mxu0
        %v4935 = vadd.f32 0.0, %v4934
        %v4936 = vpop.f32.mrb[0].mxu0
        %v4937 = vpop.f32.mrb[0].mxu0
        %v4938 = vadd.f32 0.0, %v4937
        %v4939 = vpop.f32.mrb[0].mxu0
        %4940 = vmatprep.mubr.bf16.mxu0 0
        %4941 = vmatmul.mubr.bf16.gmra.mrb[0].mxu0 %v4855
        %v4942 = vpop.f32.mrb[0].mxu0
        %v4943 = vadd.f32 0.0, %v4942
        %v4944 = vpop.f32.mrb[0].mxu0
        %v4945 = vpop.f32.mrb[0].mxu0
        %v4946 = vadd.f32 0.0, %v4945
        %v4947 = vpop.f32.mrb[0].mxu0
        %4948 = vmatprep.mubr.bf16.mxu0 0
        %4949 = vmatmul.mubr.bf16.gmra.mrb[0].mxu0 %v4856
        %v4950 = vpop.f32.mrb[0].mxu0
        %v4951 = vadd.f32 0.0, %v4950
        %v4952 = vpop.f32.mrb[0].mxu0
        %v4953 = vpop.f32.mrb[0].mxu0
        %v4954 = vadd.f32 0.0, %v4953
        %v4955 = vpop.f32.mrb[0].mxu0
        %4956 = vmatprep.mubr.bf16.mxu0 0
        %4957 = vmatmul.mubr.bf16.gmra.mrb[0].mxu0 %v4857
        %v4958 = vpop.f32.mrb[0].mxu0
        %v4959 = vadd.f32 0.0, %v4958
        %v4960 = vpop.f32.mrb[0].mxu0
        %v4961 = vpop.f32.mrb[0].mxu0
        %v4962 = vadd.f32 0.0, %v4961
        %v4963 = vpop.f32.mrb[0].mxu0
        %4964 = vmatprep.mubr.bf16.mxu0 0
        %4965 = vmatmul.mubr.bf16.gmra.mrb[0].mxu0 %v4858
        %v4966 = vpop.f32.mrb[0].mxu0
        %v4967 = vadd.f32 0.0, %v4966
        %v4968 = vpop.f32.mrb[0].mxu0
        %v4969 = vpop.f32.mrb[0].mxu0
        %v4970 = vadd.f32 0.0, %v4969
        %v4971 = vpop.f32.mrb[0].mxu0
        %4972 = vmatprep.mubr.bf16.mxu0 0
        %4973 = vmatmul.mubr.bf16.gmra.mrb[0].mxu0 %v4859
        %v4974 = vpop.f32.mrb[0].mxu0
        %v4975 = vadd.f32 0.0, %v4974
        %v4976 = vpop.f32.mrb[0].mxu0
        %v4977 = vpop.f32.mrb[0].mxu0
        %v4978 = vadd.f32 0.0, %v4977
        %v4979 = vpop.f32.mrb[0].mxu0
        %4980 = vdwg.mxu0
        %4997 = vrot.lane.b32.xlu0 %v2931, 32
        %v4998 = vpop.permute.xlu0 %4997
        %4999 = vrot.lane.b32.xlu0 %v2934, 32
        %v5000 = vpop.permute.xlu0 %4999
        %5001 = vrot.lane.b32.xlu0 %v2939, 32
        %v5002 = vpop.permute.xlu0 %5001
        %5003 = vrot.lane.b32.xlu0 %v2942, 32
        %v5004 = vpop.permute.xlu0 %5003
        %5005 = vrot.lane.b32.xlu0 %v2947, 32
        %v5006 = vpop.permute.xlu0 %5005
        %5007 = vrot.lane.b32.xlu0 %v2950, 32
        %v5008 = vpop.permute.xlu0 %5007
        %5009 = vrot.lane.b32.xlu0 %v2955, 32
        %v5010 = vpop.permute.xlu0 %5009
        %5011 = vrot.lane.b32.xlu0 %v2958, 32
        %v5012 = vpop.permute.xlu0 %5011
        %5013 = vrot.lane.b32.xlu0 %v2963, 32
        %v5014 = vpop.permute.xlu0 %5013
        %5015 = vrot.lane.b32.xlu0 %v2966, 32
        %v5016 = vpop.permute.xlu0 %5015
        %5017 = vrot.lane.b32.xlu0 %v2971, 32
        %v5018 = vpop.permute.xlu0 %5017
        %5019 = vrot.lane.b32.xlu0 %v2974, 32
        %v5020 = vpop.permute.xlu0 %5019
        %5021 = vrot.lane.b32.xlu0 %v2979, 32
        %v5022 = vpop.permute.xlu0 %5021
        %5023 = vrot.lane.b32.xlu0 %v2982, 32
        %v5024 = vpop.permute.xlu0 %5023
        %5025 = vrot.lane.b32.xlu0 %v2987, 32
        %v5026 = vpop.permute.xlu0 %5025
        %5027 = vrot.lane.b32.xlu0 %v2990, 32
        %v5028 = vpop.permute.xlu0 %5027
        %5061 = vrot.lane.b32.xlu0 %v3925, 64
        %v5062 = vpop.permute.xlu0 %5061
        %5063 = vrot.lane.b32.xlu0 %v3928, 64
        %v5064 = vpop.permute.xlu0 %5063
        %5065 = vrot.lane.b32.xlu0 %v3933, 64
        %v5066 = vpop.permute.xlu0 %5065
        %5067 = vrot.lane.b32.xlu0 %v3936, 64
        %v5068 = vpop.permute.xlu0 %5067
        %5069 = vrot.lane.b32.xlu0 %v3941, 64
        %v5070 = vpop.permute.xlu0 %5069
        %5071 = vrot.lane.b32.xlu0 %v3944, 64
        %v5072 = vpop.permute.xlu0 %5071
        %5073 = vrot.lane.b32.xlu0 %v3949, 64
        %v5074 = vpop.permute.xlu0 %5073
        %5075 = vrot.lane.b32.xlu0 %v3952, 64
        %v5076 = vpop.permute.xlu0 %5075
        %5077 = vrot.lane.b32.xlu0 %v3957, 64
        %v5078 = vpop.permute.xlu0 %5077
        %5079 = vrot.lane.b32.xlu0 %v3960, 64
        %v5080 = vpop.permute.xlu0 %5079
        %5081 = vrot.lane.b32.xlu0 %v3965, 64
        %v5082 = vpop.permute.xlu0 %5081
        %5083 = vrot.lane.b32.xlu0 %v3968, 64
        %v5084 = vpop.permute.xlu0 %5083
        %5085 = vrot.lane.b32.xlu0 %v3973, 64
        %v5086 = vpop.permute.xlu0 %5085
        %5087 = vrot.lane.b32.xlu0 %v3976, 64
        %v5088 = vpop.permute.xlu0 %5087
        %5089 = vrot.lane.b32.xlu0 %v3981, 64
        %v5090 = vpop.permute.xlu0 %5089
        %5091 = vrot.lane.b32.xlu0 %v3984, 64
        %v5092 = vpop.permute.xlu0 %5091
        %5125 = vrot.lane.b32.xlu0 %v4919, 96
        %v5126 = vpop.permute.xlu0 %5125
        %5127 = vrot.lane.b32.xlu0 %v4922, 96
        %v5128 = vpop.permute.xlu0 %5127
        %5129 = vrot.lane.b32.xlu0 %v4927, 96
        %v5130 = vpop.permute.xlu0 %5129
        %5131 = vrot.lane.b32.xlu0 %v4930, 96
        %v5132 = vpop.permute.xlu0 %5131
        %5133 = vrot.lane.b32.xlu0 %v4935, 96
        %v5134 = vpop.permute.xlu0 %5133
        %5135 = vrot.lane.b32.xlu0 %v4938, 96
        %v5136 = vpop.permute.xlu0 %5135
        %5137 = vrot.lane.b32.xlu0 %v4943, 96
        %v5138 = vpop.permute.xlu0 %5137
        %5139 = vrot.lane.b32.xlu0 %v4946, 96
        %v5140 = vpop.permute.xlu0 %5139
        %5141 = vrot.lane.b32.xlu0 %v4951, 96
        %v5142 = vpop.permute.xlu0 %5141
        %5143 = vrot.lane.b32.xlu0 %v4954, 96
        %v5144 = vpop.permute.xlu0 %5143
        %5145 = vrot.lane.b32.xlu0 %v4959, 96
        %v5146 = vpop.permute.xlu0 %5145
        %5147 = vrot.lane.b32.xlu0 %v4962, 96
        %v5148 = vpop.permute.xlu0 %5147
        %5149 = vrot.lane.b32.xlu0 %v4967, 96
        %v5150 = vpop.permute.xlu0 %5149
        %5151 = vrot.lane.b32.xlu0 %v4970, 96
        %v5152 = vpop.permute.xlu0 %5151
        %5153 = vrot.lane.b32.xlu0 %v4975, 96
        %v5154 = vpop.permute.xlu0 %5153
        %5155 = vrot.lane.b32.xlu0 %v4978, 96
        %v5156 = vpop.permute.xlu0 %5155
        %v5173 = vsel %vm1572, %v1913, %v4998
        %v5174 = vsel %vm1572, %v1916, %v5000
        %v5175 = vsel %vm1572, %v1921, %v5002
        %v5176 = vsel %vm1572, %v1924, %v5004
        %v5177 = vsel %vm1572, %v1929, %v5006
        %v5178 = vsel %vm1572, %v1932, %v5008
        %v5179 = vsel %vm1572, %v1937, %v5010
        %v5180 = vsel %vm1572, %v1940, %v5012
        %v5181 = vsel %vm1572, %v1945, %v5014
        %v5182 = vsel %vm1572, %v1948, %v5016
        %v5183 = vsel %vm1572, %v1953, %v5018
        %v5184 = vsel %vm1572, %v1956, %v5020
        %v5185 = vsel %vm1572, %v1961, %v5022
        %v5186 = vsel %vm1572, %v1964, %v5024
        %v5187 = vsel %vm1572, %v1969, %v5026
        %v5188 = vsel %vm1572, %v1972, %v5028
        %vm5189 = vcmask 523264
        %v5190 = vsel %vm5189, %v5173, %v5062
        %v5191 = vsel %vm5189, %v5174, %v5064
        %v5192 = vsel %vm5189, %v5175, %v5066
        %v5193 = vsel %vm5189, %v5176, %v5068
        %v5194 = vsel %vm5189, %v5177, %v5070
        %v5195 = vsel %vm5189, %v5178, %v5072
        %v5196 = vsel %vm5189, %v5179, %v5074
        %v5197 = vsel %vm5189, %v5180, %v5076
        %v5198 = vsel %vm5189, %v5181, %v5078
        %v5199 = vsel %vm5189, %v5182, %v5080
        %v5200 = vsel %vm5189, %v5183, %v5082
        %v5201 = vsel %vm5189, %v5184, %v5084
        %v5202 = vsel %vm5189, %v5185, %v5086
        %v5203 = vsel %vm5189, %v5186, %v5088
        %v5204 = vsel %vm5189, %v5187, %v5090
        %v5205 = vsel %vm5189, %v5188, %v5092
        %vm5206 = vcmask 785408
        %v5207 = vsel %vm5206, %v5190, %v5126
        %v5208 = vsel %vm5206, %v5191, %v5128
        %v5209 = vsel %vm5206, %v5192, %v5130
        %v5210 = vsel %vm5206, %v5193, %v5132
        %v5211 = vsel %vm5206, %v5194, %v5134
        %v5212 = vsel %vm5206, %v5195, %v5136
        %v5213 = vsel %vm5206, %v5196, %v5138
        %v5214 = vsel %vm5206, %v5197, %v5140
        %v5215 = vsel %vm5206, %v5198, %v5142
        %v5216 = vsel %vm5206, %v5199, %v5144
        %v5217 = vsel %vm5206, %v5200, %v5146
        %v5218 = vsel %vm5206, %v5201, %v5148
        %v5219 = vsel %vm5206, %v5202, %v5150
        %v5220 = vsel %vm5206, %v5203, %v5152
        %v5221 = vsel %vm5206, %v5204, %v5154
        %v5222 = vsel %vm5206, %v5205, %v5156
        %v5223 = vpack.c.bf16 %v5208, %v5207
        %v5224 = vpack.c.bf16 %v5210, %v5209
        %v5225 = vpack.c.bf16 %v5212, %v5211
        %v5226 = vpack.c.bf16 %v5214, %v5213
        %v5227 = vpack.c.bf16 %v5216, %v5215
        %v5228 = vpack.c.bf16 %v5218, %v5217
        %v5229 = vpack.c.bf16 %v5220, %v5219
        %v5230 = vpack.c.bf16 %v5222, %v5221
        %v5231 = vld [vmem:[%s496] sm:$0xf]
        %v5232 = vld [vmem:[%s496 + $0x4] sm:$0xf]
        %v5233 = vld [vmem:[%s496 + $0x8] sm:$0xf]
        %v5234 = vld [vmem:[%s496 + $0xc] sm:$0xf]
        %v5235 = vld [vmem:[%s496 + $0x10] sm:$0xf]
        %v5236 = vld [vmem:[%s496 + $0x14] sm:$0xf]
        %v5237 = vld [vmem:[%s496 + $0x18] sm:$0xf]
        %v5238 = vld [vmem:[%s496 + $0x1c] sm:$0xf]
        %v5239 = vld [vmem:[%s496 + $0x20] sm:$0xf]
        %v5240 = vld [vmem:[%s496 + $0x24] sm:$0xf]
        %v5241 = vld [vmem:[%s496 + $0x28] sm:$0xf]
        %v5242 = vld [vmem:[%s496 + $0x2c] sm:$0xf]
        %v5243 = vld [vmem:[%s496 + $0x30] sm:$0xf]
        %v5244 = vld [vmem:[%s496 + $0x34] sm:$0xf]
        %v5245 = vld [vmem:[%s496 + $0x38] sm:$0xf]
        %v5246 = vld [vmem:[%s496 + $0x3c] sm:$0xf]
        %v5263 = vunpack.c.l.b16 %v5231
        %v5264 = vunpack.c.l.b16 %v5232
        %v5265 = vunpack.c.l.b16 %v5233
        %v5266 = vunpack.c.l.b16 %v5234
        %v5267 = vunpack.c.l.b16 %v5235
        %v5268 = vunpack.c.l.b16 %v5236
        %v5269 = vunpack.c.l.b16 %v5237
        %v5270 = vunpack.c.l.b16 %v5238
        %v5271 = vunpack.c.l.b16 %v5239
        %v5272 = vunpack.c.l.b16 %v5240
        %v5273 = vunpack.c.l.b16 %v5241
        %v5274 = vunpack.c.l.b16 %v5242
        %v5275 = vunpack.c.l.b16 %v5243
        %v5276 = vunpack.c.l.b16 %v5244
        %v5277 = vunpack.c.l.b16 %v5245
        %v5278 = vunpack.c.l.b16 %v5246
        %v5279 = vpack.c.b16 %v5264, %v5263
        %v5280 = vpack.c.b16 %v5266, %v5265
        %v5281 = vpack.c.b16 %v5268, %v5267
        %v5282 = vpack.c.b16 %v5270, %v5269
        %v5283 = vpack.c.b16 %v5272, %v5271
        %v5284 = vpack.c.b16 %v5274, %v5273
        %v5285 = vpack.c.b16 %v5276, %v5275
        %v5286 = vpack.c.b16 %v5278, %v5277
        %5295 = vmatprep.subr.bf16.mxu0 0
        %5296 = vmatpush1.bf16.msra.mxu0 %v5279
        %5297 = vmatprep.subr.bf16.mxu0 0
        %5298 = vmatpush1.bf16.msra.mxu0 %v5280
        %5299 = vmatprep.subr.bf16.mxu0 0
        %5300 = vmatpush1.bf16.msra.mxu0 %v5281
        %5301 = vmatprep.subr.bf16.mxu0 0
        %5302 = vmatpush1.bf16.msra.mxu0 %v5282
        %5303 = vmatprep.subr.bf16.mxu0 0
        %5304 = vmatpush1.bf16.msra.mxu0 %v5283
        %5305 = vmatprep.subr.bf16.mxu0 0
        %5306 = vmatpush1.bf16.msra.mxu0 %v5284
        %5307 = vmatprep.subr.bf16.mxu0 0
        %5308 = vmatpush1.bf16.msra.mxu0 %v5285
        %5309 = vmatprep.subr.bf16.mxu0 0
        %5310 = vmatpush1.bf16.msra.mxu0 %v5286
        %5311 = vmatprep.subr.bf16.mxu0 0
        %5312 = vmatpush1.bf16.msra.mxu0 0
        %5313 = vmatprep.subr.bf16.mxu0 0
        %5314 = vmatpush1.bf16.msra.mxu0 0
        %5315 = vmatprep.subr.bf16.mxu0 0
        %5316 = vmatpush1.bf16.msra.mxu0 0
        %5317 = vmatprep.subr.bf16.mxu0 0
        %5318 = vmatpush1.bf16.msra.mxu0 0
        %5319 = vmatprep.subr.bf16.mxu0 0
        %5320 = vmatpush1.bf16.msra.mxu0 0
        %5321 = vmatprep.subr.bf16.mxu0 0
        %5322 = vmatpush1.bf16.msra.mxu0 0
        %5323 = vmatprep.subr.bf16.mxu0 0
        %5324 = vmatpush1.bf16.msra.mxu0 0
        %5325 = vmatprep.subr.bf16.mxu0 0
        %5326 = vmatpush1.bf16.msra.mxu0 0
        %5327 = vmatprep.mubr.bf16.mxu0 0
        %5328 = vmatmul.mubr.bf16.gmra.mrb[0].mxu0 %v5223
        %v5329 = vpop.f32.mrb[0].mxu0
        %v5330 = vadd.f32 0.0, %v5329
        %v5331 = vpop.f32.mrb[0].mxu0
        %v5332 = vpop.f32.mrb[0].mxu0
        %v5333 = vadd.f32 0.0, %v5332
        %v5334 = vpop.f32.mrb[0].mxu0
        %5335 = vmatprep.mubr.bf16.mxu0 0
        %5336 = vmatmul.mubr.bf16.gmra.mrb[0].mxu0 %v5224
        %v5337 = vpop.f32.mrb[0].mxu0
        %v5338 = vadd.f32 0.0, %v5337
        %v5339 = vpop.f32.mrb[0].mxu0
        %v5340 = vpop.f32.mrb[0].mxu0
        %v5341 = vadd.f32 0.0, %v5340
        %v5342 = vpop.f32.mrb[0].mxu0
        %5343 = vmatprep.mubr.bf16.mxu0 0
        %5344 = vmatmul.mubr.bf16.gmra.mrb[0].mxu0 %v5225
        %v5345 = vpop.f32.mrb[0].mxu0
        %v5346 = vadd.f32 0.0, %v5345
        %v5347 = vpop.f32.mrb[0].mxu0
        %v5348 = vpop.f32.mrb[0].mxu0
        %v5349 = vadd.f32 0.0, %v5348
        %v5350 = vpop.f32.mrb[0].mxu0
        %5351 = vmatprep.mubr.bf16.mxu0 0
        %5352 = vmatmul.mubr.bf16.gmra.mrb[0].mxu0 %v5226
        %v5353 = vpop.f32.mrb[0].mxu0
        %v5354 = vadd.f32 0.0, %v5353
        %v5355 = vpop.f32.mrb[0].mxu0
        %v5356 = vpop.f32.mrb[0].mxu0
        %v5357 = vadd.f32 0.0, %v5356
        %v5358 = vpop.f32.mrb[0].mxu0
        %5359 = vmatprep.mubr.bf16.mxu0 0
        %5360 = vmatmul.mubr.bf16.gmra.mrb[0].mxu0 %v5227
        %v5361 = vpop.f32.mrb[0].mxu0
        %v5362 = vadd.f32 0.0, %v5361
        %v5363 = vpop.f32.mrb[0].mxu0
        %v5364 = vpop.f32.mrb[0].mxu0
        %v5365 = vadd.f32 0.0, %v5364
        %v5366 = vpop.f32.mrb[0].mxu0
        %5367 = vmatprep.mubr.bf16.mxu0 0
        %5368 = vmatmul.mubr.bf16.gmra.mrb[0].mxu0 %v5228
        %v5369 = vpop.f32.mrb[0].mxu0
        %v5370 = vadd.f32 0.0, %v5369
        %v5371 = vpop.f32.mrb[0].mxu0
        %v5372 = vpop.f32.mrb[0].mxu0
        %v5373 = vadd.f32 0.0, %v5372
        %v5374 = vpop.f32.mrb[0].mxu0
        %5375 = vmatprep.mubr.bf16.mxu0 0
        %5376 = vmatmul.mubr.bf16.gmra.mrb[0].mxu0 %v5229
        %v5377 = vpop.f32.mrb[0].mxu0
        %v5378 = vadd.f32 0.0, %v5377
        %v5379 = vpop.f32.mrb[0].mxu0
        %v5380 = vpop.f32.mrb[0].mxu0
        %v5381 = vadd.f32 0.0, %v5380
        %v5382 = vpop.f32.mrb[0].mxu0
        %5383 = vmatprep.mubr.bf16.mxu0 0
        %5384 = vmatmul.mubr.bf16.gmra.mrb[0].mxu0 %v5230
        %v5385 = vpop.f32.mrb[0].mxu0
        %v5386 = vadd.f32 0.0, %v5385
        %v5387 = vpop.f32.mrb[0].mxu0
        %v5388 = vpop.f32.mrb[0].mxu0
        %v5389 = vadd.f32 0.0, %v5388
        %v5390 = vpop.f32.mrb[0].mxu0
        %5391 = vdwg.mxu0
        %v5392 = vadd.f32 %v545, %v5330
        %v5393 = vadd.f32 %v546, %v5333
        %v5394 = vadd.f32 %v547, %v5338
        %v5395 = vadd.f32 %v548, %v5341
        %v5396 = vadd.f32 %v549, %v5346
        %v5397 = vadd.f32 %v550, %v5349
        %v5398 = vadd.f32 %v551, %v5354
        %v5399 = vadd.f32 %v552, %v5357
        %v5400 = vadd.f32 %v553, %v5362
        %v5401 = vadd.f32 %v554, %v5365
        %v5402 = vadd.f32 %v555, %v5370
        %v5403 = vadd.f32 %v556, %v5373
        %v5404 = vadd.f32 %v557, %v5378
        %v5405 = vadd.f32 %v558, %v5381
        %v5406 = vadd.f32 %v559, %v5386
        %v5407 = vadd.f32 %v560, %v5389
        %v5408 = vld [vmem:[%s486] sm:$0x1]
        %v5409 = vmul.f32 %v5392, %v5392
        %v5410 = vmul.f32 %v5393, %v5393
        %v5411 = vmul.f32 %v5394, %v5394
        %v5412 = vmul.f32 %v5395, %v5395
        %v5413 = vmul.f32 %v5396, %v5396
        %v5414 = vmul.f32 %v5397, %v5397
        %v5415 = vmul.f32 %v5398, %v5398
        %v5416 = vmul.f32 %v5399, %v5399
        %v5417 = vmul.f32 %v5400, %v5400
        %v5418 = vmul.f32 %v5401, %v5401
        %v5419 = vmul.f32 %v5402, %v5402
        %v5420 = vmul.f32 %v5403, %v5403
        %v5421 = vmul.f32 %v5404, %v5404
        %v5422 = vmul.f32 %v5405, %v5405
        %v5423 = vmul.f32 %v5406, %v5406
        %v5424 = vmul.f32 %v5407, %v5407
        %5425 = vadd.xlane.f32.xlu0 %v5409
        %v5426 = vpop.xlane.xlu0 %5425
        %5427 = vadd.xlane.f32.xlu0 %v5410
        %v5428 = vpop.xlane.xlu0 %5427
        %5429 = vadd.xlane.f32.xlu0 %v5411
        %v5430 = vpop.xlane.xlu0 %5429
        %5431 = vadd.xlane.f32.xlu0 %v5412
        %v5432 = vpop.xlane.xlu0 %5431
        %5433 = vadd.xlane.f32.xlu0 %v5413
        %v5434 = vpop.xlane.xlu0 %5433
        %5435 = vadd.xlane.f32.xlu0 %v5414
        %v5436 = vpop.xlane.xlu0 %5435
        %5437 = vadd.xlane.f32.xlu0 %v5415
        %v5438 = vpop.xlane.xlu0 %5437
        %5439 = vadd.xlane.f32.xlu0 %v5416
        %v5440 = vpop.xlane.xlu0 %5439
        %5441 = vadd.xlane.f32.xlu0 %v5417
        %v5442 = vpop.xlane.xlu0 %5441
        %5443 = vadd.xlane.f32.xlu0 %v5418
        %v5444 = vpop.xlane.xlu0 %5443
        %5445 = vadd.xlane.f32.xlu0 %v5419
        %v5446 = vpop.xlane.xlu0 %5445
        %5447 = vadd.xlane.f32.xlu0 %v5420
        %v5448 = vpop.xlane.xlu0 %5447
        %5449 = vadd.xlane.f32.xlu0 %v5421
        %v5450 = vpop.xlane.xlu0 %5449
        %5451 = vadd.xlane.f32.xlu0 %v5422
        %v5452 = vpop.xlane.xlu0 %5451
        %5453 = vadd.xlane.f32.xlu0 %v5423
        %v5454 = vpop.xlane.xlu0 %5453
        %5455 = vadd.xlane.f32.xlu0 %v5424
        %v5456 = vpop.xlane.xlu0 %5455
        %v5457 = vmul.f32 %v5426, %v610
        %v5458 = vmul.f32 %v5428, %v610
        %v5459 = vmul.f32 %v5430, %v610
        %v5460 = vmul.f32 %v5432, %v610
        %v5461 = vmul.f32 %v5434, %v610
        %v5462 = vmul.f32 %v5436, %v610
        %v5463 = vmul.f32 %v5438, %v610
        %v5464 = vmul.f32 %v5440, %v610
        %v5465 = vmul.f32 %v5442, %v610
        %v5466 = vmul.f32 %v5444, %v610
        %v5467 = vmul.f32 %v5446, %v610
        %v5468 = vmul.f32 %v5448, %v610
        %v5469 = vmul.f32 %v5450, %v610
        %v5470 = vmul.f32 %v5452, %v610
        %v5471 = vmul.f32 %v5454, %v610
        %v5472 = vmul.f32 %v5456, %v610
        %v5473 = vadd.f32 %v5457, 1e-06
        %v5474 = vadd.f32 %v5458, 1e-06
        %v5475 = vadd.f32 %v5459, 1e-06
        %v5476 = vadd.f32 %v5460, 1e-06
        %v5477 = vadd.f32 %v5461, 1e-06
        %v5478 = vadd.f32 %v5462, 1e-06
        %v5479 = vadd.f32 %v5463, 1e-06
        %v5480 = vadd.f32 %v5464, 1e-06
        %v5481 = vadd.f32 %v5465, 1e-06
        %v5482 = vadd.f32 %v5466, 1e-06
        %v5483 = vadd.f32 %v5467, 1e-06
        %v5484 = vadd.f32 %v5468, 1e-06
        %v5485 = vadd.f32 %v5469, 1e-06
        %v5486 = vadd.f32 %v5470, 1e-06
        %v5487 = vadd.f32 %v5471, 1e-06
        %v5488 = vadd.f32 %v5472, 1e-06
        %v5489 = vrsqrt.pop %v5473
        %v5490 = vrsqrt.pop %v5474
        %v5491 = vrsqrt.pop %v5475
        %v5492 = vrsqrt.pop %v5476
        %v5493 = vrsqrt.pop %v5477
        %v5494 = vrsqrt.pop %v5478
        %v5495 = vrsqrt.pop %v5479
        %v5496 = vrsqrt.pop %v5480
        %v5497 = vrsqrt.pop %v5481
        %v5498 = vrsqrt.pop %v5482
        %v5499 = vrsqrt.pop %v5483
        %v5500 = vrsqrt.pop %v5484
        %v5501 = vrsqrt.pop %v5485
        %v5502 = vrsqrt.pop %v5486
        %v5503 = vrsqrt.pop %v5487
        %v5504 = vrsqrt.pop %v5488
        %v5505 = vmul.f32 %v5392, %v5489
        %v5506 = vmul.f32 %v5393, %v5490
        %v5507 = vmul.f32 %v5394, %v5491
        %v5508 = vmul.f32 %v5395, %v5492
        %v5509 = vmul.f32 %v5396, %v5493
        %v5510 = vmul.f32 %v5397, %v5494
        %v5511 = vmul.f32 %v5398, %v5495
        %v5512 = vmul.f32 %v5399, %v5496
        %v5513 = vmul.f32 %v5400, %v5497
        %v5514 = vmul.f32 %v5401, %v5498
        %v5515 = vmul.f32 %v5402, %v5499
        %v5516 = vmul.f32 %v5403, %v5500
        %v5517 = vmul.f32 %v5404, %v5501
        %v5518 = vmul.f32 %v5405, %v5502
        %v5519 = vmul.f32 %v5406, %v5503
        %v5520 = vmul.f32 %v5407, %v5504
        %v5522 = vlaneseq
        %v5523 = vshrl.u32 %v5522, 7
        %v5524 = vsub.s32 0, %v5523
        %v5525 = vrot.slane %v5408, %v5524
        %v5527 = vmul.f32 %v5505, %v5525
        %v5528 = vmul.f32 %v5506, %v5525
        %v5529 = vmul.f32 %v5507, %v5525
        %v5530 = vmul.f32 %v5508, %v5525
        %v5531 = vmul.f32 %v5509, %v5525
        %v5532 = vmul.f32 %v5510, %v5525
        %v5533 = vmul.f32 %v5511, %v5525
        %v5534 = vmul.f32 %v5512, %v5525
        %v5535 = vmul.f32 %v5513, %v5525
        %v5536 = vmul.f32 %v5514, %v5525
        %v5537 = vmul.f32 %v5515, %v5525
        %v5538 = vmul.f32 %v5516, %v5525
        %v5539 = vmul.f32 %v5517, %v5525
        %v5540 = vmul.f32 %v5518, %v5525
        %v5541 = vmul.f32 %v5519, %v5525
        %v5542 = vmul.f32 %v5520, %v5525
        %v5543 = vpack.c.bf16 %v5528, %v5527
        %v5544 = vpack.c.bf16 %v5530, %v5529
        %v5545 = vpack.c.bf16 %v5532, %v5531
        %v5546 = vpack.c.bf16 %v5534, %v5533
        %v5547 = vpack.c.bf16 %v5536, %v5535
        %v5548 = vpack.c.bf16 %v5538, %v5537
        %v5549 = vpack.c.bf16 %v5540, %v5539
        %v5550 = vpack.c.bf16 %v5542, %v5541
        %v5551 = vld [vmem:[%s501] sm:$0xff]
        %v5552 = vld [vmem:[%s501 + $0x8] sm:$0xff]
        %v5553 = vld [vmem:[%s501 + $0x10] sm:$0xff]
        %v5554 = vld [vmem:[%s501 + $0x18] sm:$0xff]
        %v5555 = vld [vmem:[%s501 + $0x20] sm:$0xff]
        %v5556 = vld [vmem:[%s501 + $0x28] sm:$0xff]
        %v5557 = vld [vmem:[%s501 + $0x30] sm:$0xff]
        %v5558 = vld [vmem:[%s501 + $0x38] sm:$0xff]
        %v5559 = vld [vmem:[%s501 + $0x40] sm:$0xff]
        %v5560 = vld [vmem:[%s501 + $0x48] sm:$0xff]
        %v5561 = vld [vmem:[%s501 + $0x50] sm:$0xff]
        %v5562 = vld [vmem:[%s501 + $0x58] sm:$0xff]
        %v5563 = vld [vmem:[%s501 + $0x60] sm:$0xff]
        %v5564 = vld [vmem:[%s501 + $0x68] sm:$0xff]
        %v5565 = vld [vmem:[%s501 + $0x70] sm:$0xff]
        %v5566 = vld [vmem:[%s501 + $0x78] sm:$0xff]
        %v5567 = vld [vmem:[%s501 + $0x80] sm:$0xff]
        %v5568 = vld [vmem:[%s501 + $0x88] sm:$0xff]
        %v5569 = vld [vmem:[%s501 + $0x90] sm:$0xff]
        %v5570 = vld [vmem:[%s501 + $0x98] sm:$0xff]
        %v5571 = vld [vmem:[%s501 + $0xa0] sm:$0xff]
        %v5572 = vld [vmem:[%s501 + $0xa8] sm:$0xff]
        %v5573 = vld [vmem:[%s501 + $0xb0] sm:$0xff]
        %v5574 = vld [vmem:[%s501 + $0xb8] sm:$0xff]
        %v5575 = vld [vmem:[%s501 + $0xc0] sm:$0xff]
        %v5576 = vld [vmem:[%s501 + $0xc8] sm:$0xff]
        %v5577 = vld [vmem:[%s501 + $0xd0] sm:$0xff]
        %v5578 = vld [vmem:[%s501 + $0xd8] sm:$0xff]
        %v5579 = vld [vmem:[%s501 + $0xe0] sm:$0xff]
        %v5580 = vld [vmem:[%s501 + $0xe8] sm:$0xff]
        %v5581 = vld [vmem:[%s501 + $0xf0] sm:$0xff]
        %v5582 = vld [vmem:[%s501 + $0xf8] sm:$0xff]
        %v5615 = vunpack.c.l.b16 %v5551
        %v5616 = vunpack.c.h.b16 %v5551
        %v5617 = vunpack.c.l.b16 %v5552
        %v5618 = vunpack.c.h.b16 %v5552
        %v5619 = vunpack.c.l.b16 %v5553
        %v5620 = vunpack.c.h.b16 %v5553
        %v5621 = vunpack.c.l.b16 %v5554
        %v5622 = vunpack.c.h.b16 %v5554
        %v5623 = vunpack.c.l.b16 %v5555
        %v5624 = vunpack.c.h.b16 %v5555
        %v5625 = vunpack.c.l.b16 %v5556
        %v5626 = vunpack.c.h.b16 %v5556
        %v5627 = vunpack.c.l.b16 %v5557
        %v5628 = vunpack.c.h.b16 %v5557
        %v5629 = vunpack.c.l.b16 %v5558
        %v5630 = vunpack.c.h.b16 %v5558
        %v5631 = vunpack.c.l.b16 %v5559
        %v5632 = vunpack.c.h.b16 %v5559
        %v5633 = vunpack.c.l.b16 %v5560
        %v5634 = vunpack.c.h.b16 %v5560
        %v5635 = vunpack.c.l.b16 %v5561
        %v5636 = vunpack.c.h.b16 %v5561
        %v5637 = vunpack.c.l.b16 %v5562
        %v5638 = vunpack.c.h.b16 %v5562
        %v5639 = vunpack.c.l.b16 %v5563
        %v5640 = vunpack.c.h.b16 %v5563
        %v5641 = vunpack.c.l.b16 %v5564
        %v5642 = vunpack.c.h.b16 %v5564
        %v5643 = vunpack.c.l.b16 %v5565
        %v5644 = vunpack.c.h.b16 %v5565
        %v5645 = vunpack.c.l.b16 %v5566
        %v5646 = vunpack.c.h.b16 %v5566
        %v5647 = vunpack.c.l.b16 %v5567
        %v5648 = vunpack.c.h.b16 %v5567
        %v5649 = vunpack.c.l.b16 %v5568
        %v5650 = vunpack.c.h.b16 %v5568
        %v5651 = vunpack.c.l.b16 %v5569
        %v5652 = vunpack.c.h.b16 %v5569
        %v5653 = vunpack.c.l.b16 %v5570
        %v5654 = vunpack.c.h.b16 %v5570
        %v5655 = vunpack.c.l.b16 %v5571
        %v5656 = vunpack.c.h.b16 %v5571
        %v5657 = vunpack.c.l.b16 %v5572
        %v5658 = vunpack.c.h.b16 %v5572
        %v5659 = vunpack.c.l.b16 %v5573
        %v5660 = vunpack.c.h.b16 %v5573
        %v5661 = vunpack.c.l.b16 %v5574
        %v5662 = vunpack.c.h.b16 %v5574
        %v5663 = vunpack.c.l.b16 %v5575
        %v5664 = vunpack.c.h.b16 %v5575
        %v5665 = vunpack.c.l.b16 %v5576
        %v5666 = vunpack.c.h.b16 %v5576
        %v5667 = vunpack.c.l.b16 %v5577
        %v5668 = vunpack.c.h.b16 %v5577
        %v5669 = vunpack.c.l.b16 %v5578
        %v5670 = vunpack.c.h.b16 %v5578
        %v5671 = vunpack.c.l.b16 %v5579
        %v5672 = vunpack.c.h.b16 %v5579
        %v5673 = vunpack.c.l.b16 %v5580
        %v5674 = vunpack.c.h.b16 %v5580
        %v5675 = vunpack.c.l.b16 %v5581
        %v5676 = vunpack.c.h.b16 %v5581
        %v5677 = vunpack.c.l.b16 %v5582
        %v5678 = vunpack.c.h.b16 %v5582
        %v5679 = vpack.c.b16 %v5619, %v5615
        %v5680 = vpack.c.b16 %v5620, %v5616
        %v5681 = vpack.c.b16 %v5621, %v5617
        %v5682 = vpack.c.b16 %v5622, %v5618
        %v5683 = vpack.c.b16 %v5627, %v5623
        %v5684 = vpack.c.b16 %v5628, %v5624
        %v5685 = vpack.c.b16 %v5629, %v5625
        %v5686 = vpack.c.b16 %v5630, %v5626
        %v5687 = vpack.c.b16 %v5635, %v5631
        %v5688 = vpack.c.b16 %v5636, %v5632
        %v5689 = vpack.c.b16 %v5637, %v5633
        %v5690 = vpack.c.b16 %v5638, %v5634
        %v5691 = vpack.c.b16 %v5643, %v5639
        %v5692 = vpack.c.b16 %v5644, %v5640
        %v5693 = vpack.c.b16 %v5645, %v5641
        %v5694 = vpack.c.b16 %v5646, %v5642
        %v5695 = vpack.c.b16 %v5651, %v5647
        %v5696 = vpack.c.b16 %v5652, %v5648
        %v5697 = vpack.c.b16 %v5653, %v5649
        %v5698 = vpack.c.b16 %v5654, %v5650
        %v5699 = vpack.c.b16 %v5659, %v5655
        %v5700 = vpack.c.b16 %v5660, %v5656
        %v5701 = vpack.c.b16 %v5661, %v5657
        %v5702 = vpack.c.b16 %v5662, %v5658
        %v5703 = vpack.c.b16 %v5667, %v5663
        %v5704 = vpack.c.b16 %v5668, %v5664
        %v5705 = vpack.c.b16 %v5669, %v5665
        %v5706 = vpack.c.b16 %v5670, %v5666
        %v5707 = vpack.c.b16 %v5675, %v5671
        %v5708 = vpack.c.b16 %v5676, %v5672
        %v5709 = vpack.c.b16 %v5677, %v5673
        %v5710 = vpack.c.b16 %v5678, %v5674
        %5743 = vmatprep.subr.bf16.mxu0 %v5680
        %5744 = vmatpush1.bf16.msra.mxu0 %v5679
        %5745 = vmatprep.subr.bf16.mxu0 %v5684
        %5746 = vmatpush1.bf16.msra.mxu0 %v5683
        %5747 = vmatprep.subr.bf16.mxu0 %v5688
        %5748 = vmatpush1.bf16.msra.mxu0 %v5687
        %5749 = vmatprep.subr.bf16.mxu0 %v5692
        %5750 = vmatpush1.bf16.msra.mxu0 %v5691
        %5751 = vmatprep.subr.bf16.mxu0 %v5696
        %5752 = vmatpush1.bf16.msra.mxu0 %v5695
        %5753 = vmatprep.subr.bf16.mxu0 %v5700
        %5754 = vmatpush1.bf16.msra.mxu0 %v5699
        %5755 = vmatprep.subr.bf16.mxu0 %v5704
        %5756 = vmatpush1.bf16.msra.mxu0 %v5703
        %5757 = vmatprep.subr.bf16.mxu0 %v5708
        %5758 = vmatpush1.bf16.msra.mxu0 %v5707
        %5759 = vmatprep.subr.bf16.mxu0 0
        %5760 = vmatpush1.bf16.msra.mxu0 0
        %5761 = vmatprep.subr.bf16.mxu0 0
        %5762 = vmatpush1.bf16.msra.mxu0 0
        %5763 = vmatprep.subr.bf16.mxu0 0
        %5764 = vmatpush1.bf16.msra.mxu0 0
        %5765 = vmatprep.subr.bf16.mxu0 0
        %5766 = vmatpush1.bf16.msra.mxu0 0
        %5767 = vmatprep.subr.bf16.mxu0 0
        %5768 = vmatpush1.bf16.msra.mxu0 0
        %5769 = vmatprep.subr.bf16.mxu0 0
        %5770 = vmatpush1.bf16.msra.mxu0 0
        %5771 = vmatprep.subr.bf16.mxu0 0
        %5772 = vmatpush1.bf16.msra.mxu0 0
        %5773 = vmatprep.subr.bf16.mxu0 0
        %5774 = vmatpush1.bf16.msra.mxu0 0
        %5775 = vmatprep.mubr.bf16.mxu0 0
        %5776 = vmatmul.mubr.bf16.gmra.mrb[0].mxu0 %v5543
        %v5777 = vpop.f32.mrb[0].mxu0
        %v5778 = vadd.f32 0.0, %v5777
        %v5779 = vpop.f32.mrb[0].mxu0
        %v5780 = vadd.f32 0.0, %v5779
        %v5781 = vpop.f32.mrb[0].mxu0
        %v5782 = vadd.f32 0.0, %v5781
        %v5783 = vpop.f32.mrb[0].mxu0
        %v5784 = vadd.f32 0.0, %v5783
        %5785 = vmatprep.mubr.bf16.mxu0 0
        %5786 = vmatmul.mubr.bf16.gmra.mrb[0].mxu0 %v5544
        %v5787 = vpop.f32.mrb[0].mxu0
        %v5788 = vadd.f32 0.0, %v5787
        %v5789 = vpop.f32.mrb[0].mxu0
        %v5790 = vadd.f32 0.0, %v5789
        %v5791 = vpop.f32.mrb[0].mxu0
        %v5792 = vadd.f32 0.0, %v5791
        %v5793 = vpop.f32.mrb[0].mxu0
        %v5794 = vadd.f32 0.0, %v5793
        %5795 = vmatprep.mubr.bf16.mxu0 0
        %5796 = vmatmul.mubr.bf16.gmra.mrb[0].mxu0 %v5545
        %v5797 = vpop.f32.mrb[0].mxu0
        %v5798 = vadd.f32 0.0, %v5797
        %v5799 = vpop.f32.mrb[0].mxu0
        %v5800 = vadd.f32 0.0, %v5799
        %v5801 = vpop.f32.mrb[0].mxu0
        %v5802 = vadd.f32 0.0, %v5801
        %v5803 = vpop.f32.mrb[0].mxu0
        %v5804 = vadd.f32 0.0, %v5803
        %5805 = vmatprep.mubr.bf16.mxu0 0
        %5806 = vmatmul.mubr.bf16.gmra.mrb[0].mxu0 %v5546
        %v5807 = vpop.f32.mrb[0].mxu0
        %v5808 = vadd.f32 0.0, %v5807
        %v5809 = vpop.f32.mrb[0].mxu0
        %v5810 = vadd.f32 0.0, %v5809
        %v5811 = vpop.f32.mrb[0].mxu0
        %v5812 = vadd.f32 0.0, %v5811
        %v5813 = vpop.f32.mrb[0].mxu0
        %v5814 = vadd.f32 0.0, %v5813
        %5815 = vmatprep.mubr.bf16.mxu0 0
        %5816 = vmatmul.mubr.bf16.gmra.mrb[0].mxu0 %v5547
        %v5817 = vpop.f32.mrb[0].mxu0
        %v5818 = vadd.f32 0.0, %v5817
        %v5819 = vpop.f32.mrb[0].mxu0
        %v5820 = vadd.f32 0.0, %v5819
        %v5821 = vpop.f32.mrb[0].mxu0
        %v5822 = vadd.f32 0.0, %v5821
        %v5823 = vpop.f32.mrb[0].mxu0
        %v5824 = vadd.f32 0.0, %v5823
        %5825 = vmatprep.mubr.bf16.mxu0 0
        %5826 = vmatmul.mubr.bf16.gmra.mrb[0].mxu0 %v5548
        %v5827 = vpop.f32.mrb[0].mxu0
        %v5828 = vadd.f32 0.0, %v5827
        %v5829 = vpop.f32.mrb[0].mxu0
        %v5830 = vadd.f32 0.0, %v5829
        %v5831 = vpop.f32.mrb[0].mxu0
        %v5832 = vadd.f32 0.0, %v5831
        %v5833 = vpop.f32.mrb[0].mxu0
        %v5834 = vadd.f32 0.0, %v5833
        %5835 = vmatprep.mubr.bf16.mxu0 0
        %5836 = vmatmul.mubr.bf16.gmra.mrb[0].mxu0 %v5549
        %v5837 = vpop.f32.mrb[0].mxu0
        %v5838 = vadd.f32 0.0, %v5837
        %v5839 = vpop.f32.mrb[0].mxu0
        %v5840 = vadd.f32 0.0, %v5839
        %v5841 = vpop.f32.mrb[0].mxu0
        %v5842 = vadd.f32 0.0, %v5841
        %v5843 = vpop.f32.mrb[0].mxu0
        %v5844 = vadd.f32 0.0, %v5843
        %5845 = vmatprep.mubr.bf16.mxu0 0
        %5846 = vmatmul.mubr.bf16.gmra.mrb[0].mxu0 %v5550
        %v5847 = vpop.f32.mrb[0].mxu0
        %v5848 = vadd.f32 0.0, %v5847
        %v5849 = vpop.f32.mrb[0].mxu0
        %v5850 = vadd.f32 0.0, %v5849
        %v5851 = vpop.f32.mrb[0].mxu0
        %v5852 = vadd.f32 0.0, %v5851
        %v5853 = vpop.f32.mrb[0].mxu0
        %v5854 = vadd.f32 0.0, %v5853
        %5855 = vdwg.mxu0
        %5856 = vmatprep.subr.bf16.mxu0 %v5682
        %5857 = vmatpush1.bf16.msra.mxu0 %v5681
        %5858 = vmatprep.subr.bf16.mxu0 %v5686
        %5859 = vmatpush1.bf16.msra.mxu0 %v5685
        %5860 = vmatprep.subr.bf16.mxu0 %v5690
        %5861 = vmatpush1.bf16.msra.mxu0 %v5689
        %5862 = vmatprep.subr.bf16.mxu0 %v5694
        %5863 = vmatpush1.bf16.msra.mxu0 %v5693
        %5864 = vmatprep.subr.bf16.mxu0 %v5698
        %5865 = vmatpush1.bf16.msra.mxu0 %v5697
        %5866 = vmatprep.subr.bf16.mxu0 %v5702
        %5867 = vmatpush1.bf16.msra.mxu0 %v5701
        %5868 = vmatprep.subr.bf16.mxu0 %v5706
        %5869 = vmatpush1.bf16.msra.mxu0 %v5705
        %5870 = vmatprep.subr.bf16.mxu0 %v5710
        %5871 = vmatpush1.bf16.msra.mxu0 %v5709
        %5872 = vmatprep.subr.bf16.mxu0 0
        %5873 = vmatpush1.bf16.msra.mxu0 0
        %5874 = vmatprep.subr.bf16.mxu0 0
        %5875 = vmatpush1.bf16.msra.mxu0 0
        %5876 = vmatprep.subr.bf16.mxu0 0
        %5877 = vmatpush1.bf16.msra.mxu0 0
        %5878 = vmatprep.subr.bf16.mxu0 0
        %5879 = vmatpush1.bf16.msra.mxu0 0
        %5880 = vmatprep.subr.bf16.mxu0 0
        %5881 = vmatpush1.bf16.msra.mxu0 0
        %5882 = vmatprep.subr.bf16.mxu0 0
        %5883 = vmatpush1.bf16.msra.mxu0 0
        %5884 = vmatprep.subr.bf16.mxu0 0
        %5885 = vmatpush1.bf16.msra.mxu0 0
        %5886 = vmatprep.subr.bf16.mxu0 0
        %5887 = vmatpush1.bf16.msra.mxu0 0
        %5888 = vmatprep.mubr.bf16.mxu0 0
        %5889 = vmatmul.mubr.bf16.gmra.mrb[0].mxu0 %v5543
        %v5890 = vpop.f32.mrb[0].mxu0
        %v5891 = vadd.f32 0.0, %v5890
        %v5892 = vpop.f32.mrb[0].mxu0
        %v5893 = vadd.f32 0.0, %v5892
        %v5894 = vpop.f32.mrb[0].mxu0
        %v5895 = vadd.f32 0.0, %v5894
        %v5896 = vpop.f32.mrb[0].mxu0
        %v5897 = vadd.f32 0.0, %v5896
        %5898 = vmatprep.mubr.bf16.mxu0 0
        %5899 = vmatmul.mubr.bf16.gmra.mrb[0].mxu0 %v5544
        %v5900 = vpop.f32.mrb[0].mxu0
        %v5901 = vadd.f32 0.0, %v5900
        %v5902 = vpop.f32.mrb[0].mxu0
        %v5903 = vadd.f32 0.0, %v5902
        %v5904 = vpop.f32.mrb[0].mxu0
        %v5905 = vadd.f32 0.0, %v5904
        %v5906 = vpop.f32.mrb[0].mxu0
        %v5907 = vadd.f32 0.0, %v5906
        %5908 = vmatprep.mubr.bf16.mxu0 0
        %5909 = vmatmul.mubr.bf16.gmra.mrb[0].mxu0 %v5545
        %v5910 = vpop.f32.mrb[0].mxu0
        %v5911 = vadd.f32 0.0, %v5910
        %v5912 = vpop.f32.mrb[0].mxu0
        %v5913 = vadd.f32 0.0, %v5912
        %v5914 = vpop.f32.mrb[0].mxu0
        %v5915 = vadd.f32 0.0, %v5914
        %v5916 = vpop.f32.mrb[0].mxu0
        %v5917 = vadd.f32 0.0, %v5916
        %5918 = vmatprep.mubr.bf16.mxu0 0
        %5919 = vmatmul.mubr.bf16.gmra.mrb[0].mxu0 %v5546
        %v5920 = vpop.f32.mrb[0].mxu0
        %v5921 = vadd.f32 0.0, %v5920
        %v5922 = vpop.f32.mrb[0].mxu0
        %v5923 = vadd.f32 0.0, %v5922
        %v5924 = vpop.f32.mrb[0].mxu0
        %v5925 = vadd.f32 0.0, %v5924
        %v5926 = vpop.f32.mrb[0].mxu0
        %v5927 = vadd.f32 0.0, %v5926
        %5928 = vmatprep.mubr.bf16.mxu0 0
        %5929 = vmatmul.mubr.bf16.gmra.mrb[0].mxu0 %v5547
        %v5930 = vpop.f32.mrb[0].mxu0
        %v5931 = vadd.f32 0.0, %v5930
        %v5932 = vpop.f32.mrb[0].mxu0
        %v5933 = vadd.f32 0.0, %v5932
        %v5934 = vpop.f32.mrb[0].mxu0
        %v5935 = vadd.f32 0.0, %v5934
        %v5936 = vpop.f32.mrb[0].mxu0
        %v5937 = vadd.f32 0.0, %v5936
        %5938 = vmatprep.mubr.bf16.mxu0 0
        %5939 = vmatmul.mubr.bf16.gmra.mrb[0].mxu0 %v5548
        %v5940 = vpop.f32.mrb[0].mxu0
        %v5941 = vadd.f32 0.0, %v5940
        %v5942 = vpop.f32.mrb[0].mxu0
        %v5943 = vadd.f32 0.0, %v5942
        %v5944 = vpop.f32.mrb[0].mxu0
        %v5945 = vadd.f32 0.0, %v5944
        %v5946 = vpop.f32.mrb[0].mxu0
        %v5947 = vadd.f32 0.0, %v5946
        %5948 = vmatprep.mubr.bf16.mxu0 0
        %5949 = vmatmul.mubr.bf16.gmra.mrb[0].mxu0 %v5549
        %v5950 = vpop.f32.mrb[0].mxu0
        %v5951 = vadd.f32 0.0, %v5950
        %v5952 = vpop.f32.mrb[0].mxu0
        %v5953 = vadd.f32 0.0, %v5952
        %v5954 = vpop.f32.mrb[0].mxu0
        %v5955 = vadd.f32 0.0, %v5954
        %v5956 = vpop.f32.mrb[0].mxu0
        %v5957 = vadd.f32 0.0, %v5956
        %5958 = vmatprep.mubr.bf16.mxu0 0
        %5959 = vmatmul.mubr.bf16.gmra.mrb[0].mxu0 %v5550
        %v5960 = vpop.f32.mrb[0].mxu0
        %v5961 = vadd.f32 0.0, %v5960
        %v5962 = vpop.f32.mrb[0].mxu0
        %v5963 = vadd.f32 0.0, %v5962
        %v5964 = vpop.f32.mrb[0].mxu0
        %v5965 = vadd.f32 0.0, %v5964
        %v5966 = vpop.f32.mrb[0].mxu0
        %v5967 = vadd.f32 0.0, %v5966
        %5968 = vdwg.mxu0
        %v5969 = vxor.u32 %v5778, 2147483648
        %v5970 = vxor.u32 %v5780, 2147483648
        %v5971 = vxor.u32 %v5782, 2147483648
        %v5972 = vxor.u32 %v5784, 2147483648
        %v5973 = vxor.u32 %v5788, 2147483648
        %v5974 = vxor.u32 %v5790, 2147483648
        %v5975 = vxor.u32 %v5792, 2147483648
        %v5976 = vxor.u32 %v5794, 2147483648
        %v5977 = vxor.u32 %v5798, 2147483648
        %v5978 = vxor.u32 %v5800, 2147483648
        %v5979 = vxor.u32 %v5802, 2147483648
        %v5980 = vxor.u32 %v5804, 2147483648
        %v5981 = vxor.u32 %v5808, 2147483648
        %v5982 = vxor.u32 %v5810, 2147483648
        %v5983 = vxor.u32 %v5812, 2147483648
        %v5984 = vxor.u32 %v5814, 2147483648
        %v5985 = vxor.u32 %v5818, 2147483648
        %v5986 = vxor.u32 %v5820, 2147483648
        %v5987 = vxor.u32 %v5822, 2147483648
        %v5988 = vxor.u32 %v5824, 2147483648
        %v5989 = vxor.u32 %v5828, 2147483648
        %v5990 = vxor.u32 %v5830, 2147483648
        %v5991 = vxor.u32 %v5832, 2147483648
        %v5992 = vxor.u32 %v5834, 2147483648
        %v5993 = vxor.u32 %v5838, 2147483648
        %v5994 = vxor.u32 %v5840, 2147483648
        %v5995 = vxor.u32 %v5842, 2147483648
        %v5996 = vxor.u32 %v5844, 2147483648
        %v5997 = vxor.u32 %v5848, 2147483648
        %v5998 = vxor.u32 %v5850, 2147483648
        %v5999 = vxor.u32 %v5852, 2147483648
        %v6000 = vxor.u32 %v5854, 2147483648
        %v6001 = vmul.f32 %v5969, 1.442695
        %v6002 = vpow.pop %v6001
        %v6003 = vmul.f32 %v5970, 1.442695
        %v6004 = vpow.pop %v6003
        %v6005 = vmul.f32 %v5971, 1.442695
        %v6006 = vpow.pop %v6005
        %v6007 = vmul.f32 %v5972, 1.442695
        %v6008 = vpow.pop %v6007
        %v6009 = vmul.f32 %v5973, 1.442695
        %v6010 = vpow.pop %v6009
        %v6011 = vmul.f32 %v5974, 1.442695
        %v6012 = vpow.pop %v6011
        %v6013 = vmul.f32 %v5975, 1.442695
        %v6014 = vpow.pop %v6013
        %v6015 = vmul.f32 %v5976, 1.442695
        %v6016 = vpow.pop %v6015
        %v6017 = vmul.f32 %v5977, 1.442695
        %v6018 = vpow.pop %v6017
        %v6019 = vmul.f32 %v5978, 1.442695
        %v6020 = vpow.pop %v6019
        %v6021 = vmul.f32 %v5979, 1.442695
        %v6022 = vpow.pop %v6021
        %v6023 = vmul.f32 %v5980, 1.442695
        %v6024 = vpow.pop %v6023
        %v6025 = vmul.f32 %v5981, 1.442695
        %v6026 = vpow.pop %v6025
        %v6027 = vmul.f32 %v5982, 1.442695
        %v6028 = vpow.pop %v6027
        %v6029 = vmul.f32 %v5983, 1.442695
        %v6030 = vpow.pop %v6029
        %v6031 = vmul.f32 %v5984, 1.442695
        %v6032 = vpow.pop %v6031
        %v6033 = vmul.f32 %v5985, 1.442695
        %v6034 = vpow.pop %v6033
        %v6035 = vmul.f32 %v5986, 1.442695
        %v6036 = vpow.pop %v6035
        %v6037 = vmul.f32 %v5987, 1.442695
        %v6038 = vpow.pop %v6037
        %v6039 = vmul.f32 %v5988, 1.442695
        %v6040 = vpow.pop %v6039
        %v6041 = vmul.f32 %v5989, 1.442695
        %v6042 = vpow.pop %v6041
        %v6043 = vmul.f32 %v5990, 1.442695
        %v6044 = vpow.pop %v6043
        %v6045 = vmul.f32 %v5991, 1.442695
        %v6046 = vpow.pop %v6045
        %v6047 = vmul.f32 %v5992, 1.442695
        %v6048 = vpow.pop %v6047
        %v6049 = vmul.f32 %v5993, 1.442695
        %v6050 = vpow.pop %v6049
        %v6051 = vmul.f32 %v5994, 1.442695
        %v6052 = vpow.pop %v6051
        %v6053 = vmul.f32 %v5995, 1.442695
        %v6054 = vpow.pop %v6053
        %v6055 = vmul.f32 %v5996, 1.442695
        %v6056 = vpow.pop %v6055
        %v6057 = vmul.f32 %v5997, 1.442695
        %v6058 = vpow.pop %v6057
        %v6059 = vmul.f32 %v5998, 1.442695
        %v6060 = vpow.pop %v6059
        %v6061 = vmul.f32 %v5999, 1.442695
        %v6062 = vpow.pop %v6061
        %v6063 = vmul.f32 %v6000, 1.442695
        %v6064 = vpow.pop %v6063
        %v6065 = vadd.f32 %v6002, 1.0
        %v6066 = vadd.f32 %v6004, 1.0
        %v6067 = vadd.f32 %v6006, 1.0
        %v6068 = vadd.f32 %v6008, 1.0
        %v6069 = vadd.f32 %v6010, 1.0
        %v6070 = vadd.f32 %v6012, 1.0
        %v6071 = vadd.f32 %v6014, 1.0
        %v6072 = vadd.f32 %v6016, 1.0
        %v6073 = vadd.f32 %v6018, 1.0
        %v6074 = vadd.f32 %v6020, 1.0
        %v6075 = vadd.f32 %v6022, 1.0
        %v6076 = vadd.f32 %v6024, 1.0
        %v6077 = vadd.f32 %v6026, 1.0
        %v6078 = vadd.f32 %v6028, 1.0
        %v6079 = vadd.f32 %v6030, 1.0
        %v6080 = vadd.f32 %v6032, 1.0
        %v6081 = vadd.f32 %v6034, 1.0
        %v6082 = vadd.f32 %v6036, 1.0
        %v6083 = vadd.f32 %v6038, 1.0
        %v6084 = vadd.f32 %v6040, 1.0
        %v6085 = vadd.f32 %v6042, 1.0
        %v6086 = vadd.f32 %v6044, 1.0
        %v6087 = vadd.f32 %v6046, 1.0
        %v6088 = vadd.f32 %v6048, 1.0
        %v6089 = vadd.f32 %v6050, 1.0
        %v6090 = vadd.f32 %v6052, 1.0
        %v6091 = vadd.f32 %v6054, 1.0
        %v6092 = vadd.f32 %v6056, 1.0
        %v6093 = vadd.f32 %v6058, 1.0
        %v6094 = vadd.f32 %v6060, 1.0
        %v6095 = vadd.f32 %v6062, 1.0
        %v6096 = vadd.f32 %v6064, 1.0
        %v6097 = vrcp.pop %v6065
        %v6098 = vmul.f32 1.0, %v6097
        %v6099 = vrcp.pop %v6066
        %v6100 = vmul.f32 1.0, %v6099
        %v6101 = vrcp.pop %v6067
        %v6102 = vmul.f32 1.0, %v6101
        %v6103 = vrcp.pop %v6068
        %v6104 = vmul.f32 1.0, %v6103
        %v6105 = vrcp.pop %v6069
        %v6106 = vmul.f32 1.0, %v6105
        %v6107 = vrcp.pop %v6070
        %v6108 = vmul.f32 1.0, %v6107
        %v6109 = vrcp.pop %v6071
        %v6110 = vmul.f32 1.0, %v6109
        %v6111 = vrcp.pop %v6072
        %v6112 = vmul.f32 1.0, %v6111
        %v6113 = vrcp.pop %v6073
        %v6114 = vmul.f32 1.0, %v6113
        %v6115 = vrcp.pop %v6074
        %v6116 = vmul.f32 1.0, %v6115
        %v6117 = vrcp.pop %v6075
        %v6118 = vmul.f32 1.0, %v6117
        %v6119 = vrcp.pop %v6076
        %v6120 = vmul.f32 1.0, %v6119
        %v6121 = vrcp.pop %v6077
        %v6122 = vmul.f32 1.0, %v6121
        %v6123 = vrcp.pop %v6078
        %v6124 = vmul.f32 1.0, %v6123
        %v6125 = vrcp.pop %v6079
        %v6126 = vmul.f32 1.0, %v6125
        %v6127 = vrcp.pop %v6080
        %v6128 = vmul.f32 1.0, %v6127
        %v6129 = vrcp.pop %v6081
        %v6130 = vmul.f32 1.0, %v6129
        %v6131 = vrcp.pop %v6082
        %v6132 = vmul.f32 1.0, %v6131
        %v6133 = vrcp.pop %v6083
        %v6134 = vmul.f32 1.0, %v6133
        %v6135 = vrcp.pop %v6084
        %v6136 = vmul.f32 1.0, %v6135
        %v6137 = vrcp.pop %v6085
        %v6138 = vmul.f32 1.0, %v6137
        %v6139 = vrcp.pop %v6086
        %v6140 = vmul.f32 1.0, %v6139
        %v6141 = vrcp.pop %v6087
        %v6142 = vmul.f32 1.0, %v6141
        %v6143 = vrcp.pop %v6088
        %v6144 = vmul.f32 1.0, %v6143
        %v6145 = vrcp.pop %v6089
        %v6146 = vmul.f32 1.0, %v6145
        %v6147 = vrcp.pop %v6090
        %v6148 = vmul.f32 1.0, %v6147
        %v6149 = vrcp.pop %v6091
        %v6150 = vmul.f32 1.0, %v6149
        %v6151 = vrcp.pop %v6092
        %v6152 = vmul.f32 1.0, %v6151
        %v6153 = vrcp.pop %v6093
        %v6154 = vmul.f32 1.0, %v6153
        %v6155 = vrcp.pop %v6094
        %v6156 = vmul.f32 1.0, %v6155
        %v6157 = vrcp.pop %v6095
        %v6158 = vmul.f32 1.0, %v6157
        %v6159 = vrcp.pop %v6096
        %v6160 = vmul.f32 1.0, %v6159
        %v6161 = vmul.f32 %v5778, %v6098
        %v6162 = vmul.f32 %v5780, %v6100
        %v6163 = vmul.f32 %v5782, %v6102
        %v6164 = vmul.f32 %v5784, %v6104
        %v6165 = vmul.f32 %v5788, %v6106
        %v6166 = vmul.f32 %v5790, %v6108
        %v6167 = vmul.f32 %v5792, %v6110
        %v6168 = vmul.f32 %v5794, %v6112
        %v6169 = vmul.f32 %v5798, %v6114
        %v6170 = vmul.f32 %v5800, %v6116
        %v6171 = vmul.f32 %v5802, %v6118
        %v6172 = vmul.f32 %v5804, %v6120
        %v6173 = vmul.f32 %v5808, %v6122
        %v6174 = vmul.f32 %v5810, %v6124
        %v6175 = vmul.f32 %v5812, %v6126
        %v6176 = vmul.f32 %v5814, %v6128
        %v6177 = vmul.f32 %v5818, %v6130
        %v6178 = vmul.f32 %v5820, %v6132
        %v6179 = vmul.f32 %v5822, %v6134
        %v6180 = vmul.f32 %v5824, %v6136
        %v6181 = vmul.f32 %v5828, %v6138
        %v6182 = vmul.f32 %v5830, %v6140
        %v6183 = vmul.f32 %v5832, %v6142
        %v6184 = vmul.f32 %v5834, %v6144
        %v6185 = vmul.f32 %v5838, %v6146
        %v6186 = vmul.f32 %v5840, %v6148
        %v6187 = vmul.f32 %v5842, %v6150
        %v6188 = vmul.f32 %v5844, %v6152
        %v6189 = vmul.f32 %v5848, %v6154
        %v6190 = vmul.f32 %v5850, %v6156
        %v6191 = vmul.f32 %v5852, %v6158
        %v6192 = vmul.f32 %v5854, %v6160
        %v6193 = vmul.f32 %v6161, %v5891
        %v6194 = vmul.f32 %v6162, %v5893
        %v6195 = vmul.f32 %v6163, %v5895
        %v6196 = vmul.f32 %v6164, %v5897
        %v6197 = vmul.f32 %v6165, %v5901
        %v6198 = vmul.f32 %v6166, %v5903
        %v6199 = vmul.f32 %v6167, %v5905
        %v6200 = vmul.f32 %v6168, %v5907
        %v6201 = vmul.f32 %v6169, %v5911
        %v6202 = vmul.f32 %v6170, %v5913
        %v6203 = vmul.f32 %v6171, %v5915
        %v6204 = vmul.f32 %v6172, %v5917
        %v6205 = vmul.f32 %v6173, %v5921
        %v6206 = vmul.f32 %v6174, %v5923
        %v6207 = vmul.f32 %v6175, %v5925
        %v6208 = vmul.f32 %v6176, %v5927
        %v6209 = vmul.f32 %v6177, %v5931
        %v6210 = vmul.f32 %v6178, %v5933
        %v6211 = vmul.f32 %v6179, %v5935
        %v6212 = vmul.f32 %v6180, %v5937
        %v6213 = vmul.f32 %v6181, %v5941
        %v6214 = vmul.f32 %v6182, %v5943
        %v6215 = vmul.f32 %v6183, %v5945
        %v6216 = vmul.f32 %v6184, %v5947
        %v6217 = vmul.f32 %v6185, %v5951
        %v6218 = vmul.f32 %v6186, %v5953
        %v6219 = vmul.f32 %v6187, %v5955
        %v6220 = vmul.f32 %v6188, %v5957
        %v6221 = vmul.f32 %v6189, %v5961
        %v6222 = vmul.f32 %v6190, %v5963
        %v6223 = vmul.f32 %v6191, %v5965
        %v6224 = vmul.f32 %v6192, %v5967
        %v6225 = vpack.c.bf16 %v6195, %v6193
        %v6226 = vpack.c.bf16 %v6196, %v6194
        %v6227 = vpack.c.bf16 %v6199, %v6197
        %v6228 = vpack.c.bf16 %v6200, %v6198
        %v6229 = vpack.c.bf16 %v6203, %v6201
        %v6230 = vpack.c.bf16 %v6204, %v6202
        %v6231 = vpack.c.bf16 %v6207, %v6205
        %v6232 = vpack.c.bf16 %v6208, %v6206
        %v6233 = vpack.c.bf16 %v6211, %v6209
        %v6234 = vpack.c.bf16 %v6212, %v6210
        %v6235 = vpack.c.bf16 %v6215, %v6213
        %v6236 = vpack.c.bf16 %v6216, %v6214
        %v6237 = vpack.c.bf16 %v6219, %v6217
        %v6238 = vpack.c.bf16 %v6220, %v6218
        %v6239 = vpack.c.bf16 %v6223, %v6221
        %v6240 = vpack.c.bf16 %v6224, %v6222
        %v6241 = vld [vmem:[%s506] sm:$0xf]
        %v6242 = vld [vmem:[%s506 + $0x4] sm:$0xf]
        %v6243 = vld [vmem:[%s506 + $0x8] sm:$0xf]
        %v6244 = vld [vmem:[%s506 + $0xc] sm:$0xf]
        %v6245 = vld [vmem:[%s506 + $0x10] sm:$0xf]
        %v6246 = vld [vmem:[%s506 + $0x14] sm:$0xf]
        %v6247 = vld [vmem:[%s506 + $0x18] sm:$0xf]
        %v6248 = vld [vmem:[%s506 + $0x1c] sm:$0xf]
        %v6249 = vld [vmem:[%s506 + $0x20] sm:$0xf]
        %v6250 = vld [vmem:[%s506 + $0x24] sm:$0xf]
        %v6251 = vld [vmem:[%s506 + $0x28] sm:$0xf]
        %v6252 = vld [vmem:[%s506 + $0x2c] sm:$0xf]
        %v6253 = vld [vmem:[%s506 + $0x30] sm:$0xf]
        %v6254 = vld [vmem:[%s506 + $0x34] sm:$0xf]
        %v6255 = vld [vmem:[%s506 + $0x38] sm:$0xf]
        %v6256 = vld [vmem:[%s506 + $0x3c] sm:$0xf]
        %v6257 = vld [vmem:[%s506 + $0x40] sm:$0xf]
        %v6258 = vld [vmem:[%s506 + $0x44] sm:$0xf]
        %v6259 = vld [vmem:[%s506 + $0x48] sm:$0xf]
        %v6260 = vld [vmem:[%s506 + $0x4c] sm:$0xf]
        %v6261 = vld [vmem:[%s506 + $0x50] sm:$0xf]
        %v6262 = vld [vmem:[%s506 + $0x54] sm:$0xf]
        %v6263 = vld [vmem:[%s506 + $0x58] sm:$0xf]
        %v6264 = vld [vmem:[%s506 + $0x5c] sm:$0xf]
        %v6265 = vld [vmem:[%s506 + $0x60] sm:$0xf]
        %v6266 = vld [vmem:[%s506 + $0x64] sm:$0xf]
        %v6267 = vld [vmem:[%s506 + $0x68] sm:$0xf]
        %v6268 = vld [vmem:[%s506 + $0x6c] sm:$0xf]
        %v6269 = vld [vmem:[%s506 + $0x70] sm:$0xf]
        %v6270 = vld [vmem:[%s506 + $0x74] sm:$0xf]
        %v6271 = vld [vmem:[%s506 + $0x78] sm:$0xf]
        %v6272 = vld [vmem:[%s506 + $0x7c] sm:$0xf]
        %v6305 = vunpack.c.l.b16 %v6241
        %v6306 = vunpack.c.l.b16 %v6242
        %v6307 = vunpack.c.l.b16 %v6243
        %v6308 = vunpack.c.l.b16 %v6244
        %v6309 = vunpack.c.l.b16 %v6245
        %v6310 = vunpack.c.l.b16 %v6246
        %v6311 = vunpack.c.l.b16 %v6247
        %v6312 = vunpack.c.l.b16 %v6248
        %v6313 = vunpack.c.l.b16 %v6249
        %v6314 = vunpack.c.l.b16 %v6250
        %v6315 = vunpack.c.l.b16 %v6251
        %v6316 = vunpack.c.l.b16 %v6252
        %v6317 = vunpack.c.l.b16 %v6253
        %v6318 = vunpack.c.l.b16 %v6254
        %v6319 = vunpack.c.l.b16 %v6255
        %v6320 = vunpack.c.l.b16 %v6256
        %v6321 = vunpack.c.l.b16 %v6257
        %v6322 = vunpack.c.l.b16 %v6258
        %v6323 = vunpack.c.l.b16 %v6259
        %v6324 = vunpack.c.l.b16 %v6260
        %v6325 = vunpack.c.l.b16 %v6261
        %v6326 = vunpack.c.l.b16 %v6262
        %v6327 = vunpack.c.l.b16 %v6263
        %v6328 = vunpack.c.l.b16 %v6264
        %v6329 = vunpack.c.l.b16 %v6265
        %v6330 = vunpack.c.l.b16 %v6266
        %v6331 = vunpack.c.l.b16 %v6267
        %v6332 = vunpack.c.l.b16 %v6268
        %v6333 = vunpack.c.l.b16 %v6269
        %v6334 = vunpack.c.l.b16 %v6270
        %v6335 = vunpack.c.l.b16 %v6271
        %v6336 = vunpack.c.l.b16 %v6272
        %v6337 = vpack.c.b16 %v6306, %v6305
        %v6338 = vpack.c.b16 %v6308, %v6307
        %v6339 = vpack.c.b16 %v6310, %v6309
        %v6340 = vpack.c.b16 %v6312, %v6311
        %v6341 = vpack.c.b16 %v6314, %v6313
        %v6342 = vpack.c.b16 %v6316, %v6315
        %v6343 = vpack.c.b16 %v6318, %v6317
        %v6344 = vpack.c.b16 %v6320, %v6319
        %v6345 = vpack.c.b16 %v6322, %v6321
        %v6346 = vpack.c.b16 %v6324, %v6323
        %v6347 = vpack.c.b16 %v6326, %v6325
        %v6348 = vpack.c.b16 %v6328, %v6327
        %v6349 = vpack.c.b16 %v6330, %v6329
        %v6350 = vpack.c.b16 %v6332, %v6331
        %v6351 = vpack.c.b16 %v6334, %v6333
        %v6352 = vpack.c.b16 %v6336, %v6335
        %6369 = vmatprep.subr.bf16.mxu0 0
        %6370 = vmatpush1.bf16.msra.mxu0 %v6337
        %6371 = vmatprep.subr.bf16.mxu0 0
        %6372 = vmatpush1.bf16.msra.mxu0 %v6338
        %6373 = vmatprep.subr.bf16.mxu0 0
        %6374 = vmatpush1.bf16.msra.mxu0 %v6339
        %6375 = vmatprep.subr.bf16.mxu0 0
        %6376 = vmatpush1.bf16.msra.mxu0 %v6340
        %6377 = vmatprep.subr.bf16.mxu0 0
        %6378 = vmatpush1.bf16.msra.mxu0 %v6341
        %6379 = vmatprep.subr.bf16.mxu0 0
        %6380 = vmatpush1.bf16.msra.mxu0 %v6342
        %6381 = vmatprep.subr.bf16.mxu0 0
        %6382 = vmatpush1.bf16.msra.mxu0 %v6343
        %6383 = vmatprep.subr.bf16.mxu0 0
        %6384 = vmatpush1.bf16.msra.mxu0 %v6344
        %6385 = vmatprep.subr.bf16.mxu0 0
        %6386 = vmatpush1.bf16.msra.mxu0 %v6345
        %6387 = vmatprep.subr.bf16.mxu0 0
        %6388 = vmatpush1.bf16.msra.mxu0 %v6346
        %6389 = vmatprep.subr.bf16.mxu0 0
        %6390 = vmatpush1.bf16.msra.mxu0 %v6347
        %6391 = vmatprep.subr.bf16.mxu0 0
        %6392 = vmatpush1.bf16.msra.mxu0 %v6348
        %6393 = vmatprep.subr.bf16.mxu0 0
        %6394 = vmatpush1.bf16.msra.mxu0 %v6349
        %6395 = vmatprep.subr.bf16.mxu0 0
        %6396 = vmatpush1.bf16.msra.mxu0 %v6350
        %6397 = vmatprep.subr.bf16.mxu0 0
        %6398 = vmatpush1.bf16.msra.mxu0 %v6351
        %6399 = vmatprep.subr.bf16.mxu0 0
        %6400 = vmatpush1.bf16.msra.mxu0 %v6352
        %6401 = vmatprep.mubr.bf16.mxu0 %v6226
        %6402 = vmatmul.mubr.bf16.gmra.mrb[0].mxu0 %v6225
        %v6403 = vpop.f32.mrb[0].mxu0
        %v6404 = vadd.f32 0.0, %v6403
        %v6405 = vpop.f32.mrb[0].mxu0
        %v6406 = vpop.f32.mrb[0].mxu0
        %v6407 = vadd.f32 0.0, %v6406
        %v6408 = vpop.f32.mrb[0].mxu0
        %6409 = vmatprep.mubr.bf16.mxu0 %v6228
        %6410 = vmatmul.mubr.bf16.gmra.mrb[0].mxu0 %v6227
        %v6411 = vpop.f32.mrb[0].mxu0
        %v6412 = vadd.f32 0.0, %v6411
        %v6413 = vpop.f32.mrb[0].mxu0
        %v6414 = vpop.f32.mrb[0].mxu0
        %v6415 = vadd.f32 0.0, %v6414
        %v6416 = vpop.f32.mrb[0].mxu0
        %6417 = vmatprep.mubr.bf16.mxu0 %v6230
        %6418 = vmatmul.mubr.bf16.gmra.mrb[0].mxu0 %v6229
        %v6419 = vpop.f32.mrb[0].mxu0
        %v6420 = vadd.f32 0.0, %v6419
        %v6421 = vpop.f32.mrb[0].mxu0
        %v6422 = vpop.f32.mrb[0].mxu0
        %v6423 = vadd.f32 0.0, %v6422
        %v6424 = vpop.f32.mrb[0].mxu0
        %6425 = vmatprep.mubr.bf16.mxu0 %v6232
        %6426 = vmatmul.mubr.bf16.gmra.mrb[0].mxu0 %v6231
        %v6427 = vpop.f32.mrb[0].mxu0
        %v6428 = vadd.f32 0.0, %v6427
        %v6429 = vpop.f32.mrb[0].mxu0
        %v6430 = vpop.f32.mrb[0].mxu0
        %v6431 = vadd.f32 0.0, %v6430
        %v6432 = vpop.f32.mrb[0].mxu0
        %6433 = vmatprep.mubr.bf16.mxu0 %v6234
        %6434 = vmatmul.mubr.bf16.gmra.mrb[0].mxu0 %v6233
        %v6435 = vpop.f32.mrb[0].mxu0
        %v6436 = vadd.f32 0.0, %v6435
        %v6437 = vpop.f32.mrb[0].mxu0
        %v6438 = vpop.f32.mrb[0].mxu0
        %v6439 = vadd.f32 0.0, %v6438
        %v6440 = vpop.f32.mrb[0].mxu0
        %6441 = vmatprep.mubr.bf16.mxu0 %v6236
        %6442 = vmatmul.mubr.bf16.gmra.mrb[0].mxu0 %v6235
        %v6443 = vpop.f32.mrb[0].mxu0
        %v6444 = vadd.f32 0.0, %v6443
        %v6445 = vpop.f32.mrb[0].mxu0
        %v6446 = vpop.f32.mrb[0].mxu0
        %v6447 = vadd.f32 0.0, %v6446
        %v6448 = vpop.f32.mrb[0].mxu0
        %6449 = vmatprep.mubr.bf16.mxu0 %v6238
        %6450 = vmatmul.mubr.bf16.gmra.mrb[0].mxu0 %v6237
        %v6451 = vpop.f32.mrb[0].mxu0
        %v6452 = vadd.f32 0.0, %v6451
        %v6453 = vpop.f32.mrb[0].mxu0
        %v6454 = vpop.f32.mrb[0].mxu0
        %v6455 = vadd.f32 0.0, %v6454
        %v6456 = vpop.f32.mrb[0].mxu0
        %6457 = vmatprep.mubr.bf16.mxu0 %v6240
        %6458 = vmatmul.mubr.bf16.gmra.mrb[0].mxu0 %v6239
        %v6459 = vpop.f32.mrb[0].mxu0
        %v6460 = vadd.f32 0.0, %v6459
        %v6461 = vpop.f32.mrb[0].mxu0
        %v6462 = vpop.f32.mrb[0].mxu0
        %v6463 = vadd.f32 0.0, %v6462
        %v6464 = vpop.f32.mrb[0].mxu0
        %6465 = vdwg.mxu0
        %v6466 = vadd.f32 %v5392, %v6404
        %v6467 = vadd.f32 %v5393, %v6407
        %v6468 = vadd.f32 %v5394, %v6412
        %v6469 = vadd.f32 %v5395, %v6415
        %v6470 = vadd.f32 %v5396, %v6420
        %v6471 = vadd.f32 %v5397, %v6423
        %v6472 = vadd.f32 %v5398, %v6428
        %v6473 = vadd.f32 %v5399, %v6431
        %v6474 = vadd.f32 %v5400, %v6436
        %v6475 = vadd.f32 %v5401, %v6439
        %v6476 = vadd.f32 %v5402, %v6444
        %v6477 = vadd.f32 %v5403, %v6447
        %v6478 = vadd.f32 %v5404, %v6452
        %v6479 = vadd.f32 %v5405, %v6455
        %v6480 = vadd.f32 %v5406, %v6460
        %v6481 = vadd.f32 %v5407, %v6463
        %6482 = vst [vmem:[#allocation2] sm:$0xff] %v6466
        %6483 = vst [vmem:[#allocation2 + $0x8] sm:$0xff] %v6467
        %6484 = vst [vmem:[#allocation2 + $0x10] sm:$0xff] %v6468
        %6485 = vst [vmem:[#allocation2 + $0x18] sm:$0xff] %v6469
        %6486 = vst [vmem:[#allocation2 + $0x20] sm:$0xff] %v6470
        %6487 = vst [vmem:[#allocation2 + $0x28] sm:$0xff] %v6471
        %6488 = vst [vmem:[#allocation2 + $0x30] sm:$0xff] %v6472
        %6489 = vst [vmem:[#allocation2 + $0x38] sm:$0xff] %v6473
        %6490 = vst [vmem:[#allocation2 + $0x40] sm:$0xff] %v6474
        %6491 = vst [vmem:[#allocation2 + $0x48] sm:$0xff] %v6475
        %6492 = vst [vmem:[#allocation2 + $0x50] sm:$0xff] %v6476
        %6493 = vst [vmem:[#allocation2 + $0x58] sm:$0xff] %v6477
        %6494 = vst [vmem:[#allocation2 + $0x60] sm:$0xff] %v6478
        %6495 = vst [vmem:[#allocation2 + $0x68] sm:$0xff] %v6479
        %6496 = vst [vmem:[#allocation2 + $0x70] sm:$0xff] %v6480
        %6497 = vst [vmem:[#allocation2 + $0x78] sm:$0xff] %v6481
        %p6498 = scmp.eq.s32.totalorder %s30, 1
        // Predicated region
        $region69: #{transformer_forward.1} parent=63 // pred_check
          %p6499 = pneg %p6498
        $region70: #{transformer_forward.1} parent=63 // pred_check_branch
          %6501 = sbr.rel (%p6499) target = $region72
        $region71: #{transformer_forward.1} parent=63 // pred_region
          %v6502 = vld [vmem:[%s10] sm:$0x1]
          %v6503 = vmul.f32 %v6466, %v6466
          %v6504 = vmul.f32 %v6467, %v6467
          %v6505 = vmul.f32 %v6468, %v6468
          %v6506 = vmul.f32 %v6469, %v6469
          %v6507 = vmul.f32 %v6470, %v6470
          %v6508 = vmul.f32 %v6471, %v6471
          %v6509 = vmul.f32 %v6472, %v6472
          %v6510 = vmul.f32 %v6473, %v6473
          %v6511 = vmul.f32 %v6474, %v6474
          %v6512 = vmul.f32 %v6475, %v6475
          %v6513 = vmul.f32 %v6476, %v6476
          %v6514 = vmul.f32 %v6477, %v6477
          %v6515 = vmul.f32 %v6478, %v6478
          %v6516 = vmul.f32 %v6479, %v6479
          %v6517 = vmul.f32 %v6480, %v6480
          %v6518 = vmul.f32 %v6481, %v6481
          %6519 = vadd.xlane.f32.xlu0 %v6503
          %v6520 = vpop.xlane.xlu0 %6519
          %6521 = vadd.xlane.f32.xlu0 %v6504
          %v6522 = vpop.xlane.xlu0 %6521
          %6523 = vadd.xlane.f32.xlu0 %v6505
          %v6524 = vpop.xlane.xlu0 %6523
          %6525 = vadd.xlane.f32.xlu0 %v6506
          %v6526 = vpop.xlane.xlu0 %6525
          %6527 = vadd.xlane.f32.xlu0 %v6507
          %v6528 = vpop.xlane.xlu0 %6527
          %6529 = vadd.xlane.f32.xlu0 %v6508
          %v6530 = vpop.xlane.xlu0 %6529
          %6531 = vadd.xlane.f32.xlu0 %v6509
          %v6532 = vpop.xlane.xlu0 %6531
          %6533 = vadd.xlane.f32.xlu0 %v6510
          %v6534 = vpop.xlane.xlu0 %6533
          %6535 = vadd.xlane.f32.xlu0 %v6511
          %v6536 = vpop.xlane.xlu0 %6535
          %6537 = vadd.xlane.f32.xlu0 %v6512
          %v6538 = vpop.xlane.xlu0 %6537
          %6539 = vadd.xlane.f32.xlu0 %v6513
          %v6540 = vpop.xlane.xlu0 %6539
          %6541 = vadd.xlane.f32.xlu0 %v6514
          %v6542 = vpop.xlane.xlu0 %6541
          %6543 = vadd.xlane.f32.xlu0 %v6515
          %v6544 = vpop.xlane.xlu0 %6543
          %6545 = vadd.xlane.f32.xlu0 %v6516
          %v6546 = vpop.xlane.xlu0 %6545
          %6547 = vadd.xlane.f32.xlu0 %v6517
          %v6548 = vpop.xlane.xlu0 %6547
          %6549 = vadd.xlane.f32.xlu0 %v6518
          %v6550 = vpop.xlane.xlu0 %6549
          %v6551 = vmul.f32 %v6520, %v610
          %v6552 = vmul.f32 %v6522, %v610
          %v6553 = vmul.f32 %v6524, %v610
          %v6554 = vmul.f32 %v6526, %v610
          %v6555 = vmul.f32 %v6528, %v610
          %v6556 = vmul.f32 %v6530, %v610
          %v6557 = vmul.f32 %v6532, %v610
          %v6558 = vmul.f32 %v6534, %v610
          %v6559 = vmul.f32 %v6536, %v610
          %v6560 = vmul.f32 %v6538, %v610
          %v6561 = vmul.f32 %v6540, %v610
          %v6562 = vmul.f32 %v6542, %v610
          %v6563 = vmul.f32 %v6544, %v610
          %v6564 = vmul.f32 %v6546, %v610
          %v6565 = vmul.f32 %v6548, %v610
          %v6566 = vmul.f32 %v6550, %v610
          %v6567 = vadd.f32 %v6551, 1e-06
          %v6568 = vadd.f32 %v6552, 1e-06
          %v6569 = vadd.f32 %v6553, 1e-06
          %v6570 = vadd.f32 %v6554, 1e-06
          %v6571 = vadd.f32 %v6555, 1e-06
          %v6572 = vadd.f32 %v6556, 1e-06
          %v6573 = vadd.f32 %v6557, 1e-06
          %v6574 = vadd.f32 %v6558, 1e-06
          %v6575 = vadd.f32 %v6559, 1e-06
          %v6576 = vadd.f32 %v6560, 1e-06
          %v6577 = vadd.f32 %v6561, 1e-06
          %v6578 = vadd.f32 %v6562, 1e-06
          %v6579 = vadd.f32 %v6563, 1e-06
          %v6580 = vadd.f32 %v6564, 1e-06
          %v6581 = vadd.f32 %v6565, 1e-06
          %v6582 = vadd.f32 %v6566, 1e-06
          %v6583 = vrsqrt.pop %v6567
          %v6584 = vrsqrt.pop %v6568
          %v6585 = vrsqrt.pop %v6569
          %v6586 = vrsqrt.pop %v6570
          %v6587 = vrsqrt.pop %v6571
          %v6588 = vrsqrt.pop %v6572
          %v6589 = vrsqrt.pop %v6573
          %v6590 = vrsqrt.pop %v6574
          %v6591 = vrsqrt.pop %v6575
          %v6592 = vrsqrt.pop %v6576
          %v6593 = vrsqrt.pop %v6577
          %v6594 = vrsqrt.pop %v6578
          %v6595 = vrsqrt.pop %v6579
          %v6596 = vrsqrt.pop %v6580
          %v6597 = vrsqrt.pop %v6581
          %v6598 = vrsqrt.pop %v6582
          %v6599 = vmul.f32 %v6466, %v6583
          %v6600 = vmul.f32 %v6467, %v6584
          %v6601 = vmul.f32 %v6468, %v6585
          %v6602 = vmul.f32 %v6469, %v6586
          %v6603 = vmul.f32 %v6470, %v6587
          %v6604 = vmul.f32 %v6471, %v6588
          %v6605 = vmul.f32 %v6472, %v6589
          %v6606 = vmul.f32 %v6473, %v6590
          %v6607 = vmul.f32 %v6474, %v6591
          %v6608 = vmul.f32 %v6475, %v6592
          %v6609 = vmul.f32 %v6476, %v6593
          %v6610 = vmul.f32 %v6477, %v6594
          %v6611 = vmul.f32 %v6478, %v6595
          %v6612 = vmul.f32 %v6479, %v6596
          %v6613 = vmul.f32 %v6480, %v6597
          %v6614 = vmul.f32 %v6481, %v6598
          %v6616 = vlaneseq
          %v6617 = vshrl.u32 %v6616, 7
          %v6618 = vsub.s32 0, %v6617
          %v6619 = vrot.slane %v6502, %v6618
          %v6621 = vmul.f32 %v6599, %v6619
          %v6622 = vmul.f32 %v6600, %v6619
          %v6623 = vmul.f32 %v6601, %v6619
          %v6624 = vmul.f32 %v6602, %v6619
          %v6625 = vmul.f32 %v6603, %v6619
          %v6626 = vmul.f32 %v6604, %v6619
          %v6627 = vmul.f32 %v6605, %v6619
          %v6628 = vmul.f32 %v6606, %v6619
          %v6629 = vmul.f32 %v6607, %v6619
          %v6630 = vmul.f32 %v6608, %v6619
          %v6631 = vmul.f32 %v6609, %v6619
          %v6632 = vmul.f32 %v6610, %v6619
          %v6633 = vmul.f32 %v6611, %v6619
          %v6634 = vmul.f32 %v6612, %v6619
          %v6635 = vmul.f32 %v6613, %v6619
          %v6636 = vmul.f32 %v6614, %v6619
          %6637 = vst [vmem:[%s474] sm:$0xff] %v6621
          %6638 = vst [vmem:[%s474 + $0x8] sm:$0xff] %v6622
          %6639 = vst [vmem:[%s474 + $0x10] sm:$0xff] %v6623
          %6640 = vst [vmem:[%s474 + $0x18] sm:$0xff] %v6624
          %6641 = vst [vmem:[%s474 + $0x20] sm:$0xff] %v6625
          %6642 = vst [vmem:[%s474 + $0x28] sm:$0xff] %v6626
          %6643 = vst [vmem:[%s474 + $0x30] sm:$0xff] %v6627
          %6644 = vst [vmem:[%s474 + $0x38] sm:$0xff] %v6628
          %6645 = vst [vmem:[%s474 + $0x40] sm:$0xff] %v6629
          %6646 = vst [vmem:[%s474 + $0x48] sm:$0xff] %v6630
          %6647 = vst [vmem:[%s474 + $0x50] sm:$0xff] %v6631
          %6648 = vst [vmem:[%s474 + $0x58] sm:$0xff] %v6632
          %6649 = vst [vmem:[%s474 + $0x60] sm:$0xff] %v6633
          %6650 = vst [vmem:[%s474 + $0x68] sm:$0xff] %v6634
          %6651 = vst [vmem:[%s474 + $0x70] sm:$0xff] %v6635
          %6652 = vst [vmem:[%s474 + $0x78] sm:$0xff] %v6636
        $region72: #{transformer_forward.1} parent=63 // pred_fallthru
          _
        %s6653 = sand.u32 %s311, 1
        %s6654 = scalar_lea.sflag [#allocation4], %s6653
        %s6655 = sand.u32 %s311, 1
        %s6656 = smul.addr %s6655, 128
        %s6657 = scalar_lea.vmem [#allocation3], %s6656
        // Predicated region
        $region73: #{transformer_forward.1} parent=63 // pred_check
          %p6658 = pneg %p321
        $region74: #{transformer_forward.1} parent=63 // pred_check_branch
          %6660 = sbr.rel (%p6658) target = $region76
        $region75: #{transformer_forward.1} parent=63 // pred_region
          %s6661 = smul.u32 16, %s29
          %s6663 = ssub.s32 2048, 2048
          %6664 = vsyncadd %s6654, %s6663
          %s6665 = smul.addr %s6661, 128
          %s6666 = scalar_lea.hbm %s11, %s6665
          %s6667 = sshll.u32 %s6657, 4
          %s6668 = int_to_ptr.vmem [resolvable:$true] %s6667
          %6673 = dma.vmem_to_hbm [thread:$0]  %s6668, 2048, %s6666, %s6654, 128, 128, 8
        $region76: #{transformer_forward.1} parent=63 // pred_fallthru
          _
      $region64: #{transformer_forward.1} parent=5 // pred_fallthru
        _
      %p6674 = scmp.le.s32.totalorder 2, %s20
      // Predicated region
      $region77: #{transformer_forward.1} parent=5 // pred_check
        %p6675 = pneg %p6674
      $region78: #{transformer_forward.1} parent=5 // pred_check_branch
        %6677 = sbr.rel (%p6675) target = $region80
      $region79: #{transformer_forward.1} parent=5 // pred_region
        %s6678 = ssub.s32 %s20, 2
        // Predicated region
        $region81: #{transformer_forward.1} parent=79 // pred_check
          %p6679 = pneg %p327
        $region82: #{transformer_forward.1} parent=79 // pred_check_branch
          %6681 = sbr.rel (%p6679) target = $region84
        $region83: #{transformer_forward.1} parent=79 // pred_region
          %s6682 = sand.u32 %s312, 1
          %s6683 = scalar_lea.sflag [#allocation4], %s6682
          %s6684 = sand.u32 %s312, 1
          %s6685 = smul.addr %s6684, 128
          %s6686 = scalar_lea.vmem [#allocation3], %s6685
          %6687 = dma.done %s6683, 2048
        $region84: #{transformer_forward.1} parent=79 // pred_fallthru
          _
      $region80: #{transformer_forward.1} parent=5 // pred_fallthru
        _
    $region6: #{transformer_forward.1} parent=1 // loop_footer
      %s24 = sadd.s32 1, %s20
    $region7: #{transformer_forward.1} parent=1 // loop_footer_branch
      %19 = sbr.rel target = $region3
    $region8: #{transformer_forward.1} parent=1 // loop_exit
      _
    %6688 = vsyncpa [#allocation4], 1
    %s6689 = scalar_lea.sflag [#allocation4], 1
    %6690 = vsyncpa %s6689, 1

</llo_original>
